<compile_context>
chip_gen: v6e
topology: v6e:2x2x1
jax: 0.10.0
libtpu: 0.0.40
codegen_flags: <defaults>
</compile_context>

<pallas_src>
import functools

import jax
import jax.numpy as jnp
from jax import lax
from jax.experimental import pallas as pl
from jax.experimental.pallas import tpu as pltpu

BN_EPS = 1e-5


def _round_up(x, m):
    return ((x + m - 1) // m) * m


# --------------------------------------------------------------------------- #
# Pallas kernels
# --------------------------------------------------------------------------- #
def _conv_bn_stats_kernel(body_ref, halo_ref, w_ref, b_ref, *rest,
                          th, wp, w_real, h_real, fuse_input_bn):
    """Fused 3x3 conv (+ optional input BN+ReLU) + bias + BN partial statistics.

    body_ref: (1, TH*Wp, Cin_p)   rows [r*TH*Wp, (r+1)*TH*Wp) of the flattened padded input
    halo_ref: (1, 4*Wp, Cin_p)    the next 4 padded rows (H halo)
    w_ref:    (9*Cin_p, Cout_p)   bf16, taps folded into K
    b_ref:    (1, Cout_p)         f32 bias
    [scale_ref, shift_ref]: (1, Cin_p)  previous layer's BN affine (only if fuse_input_bn)
    y_ref:    (1, TH*Wp, Cout_p)  conv output tile (junk W-pad columns zeroed)
    stats_ref:(1, 1, 8, Cout_p)   row0 = per-channel sum, row1 = per-channel sum of squares
    """
    if fuse_input_bn:
        scale_ref, shift_ref, y_ref, stats_ref = rest
    else:
        y_ref, stats_ref = rest

    m_rows = th * wp
    cin_p = body_ref.shape[-1]

    # Slab of (1 + TH*Wp + 4*Wp) flattened padded rows; element e corresponds to the global
    # flattened row index r*TH*Wp + e - 1 (the single prepended zero handles the -1 offset
    # of the (dy=0, dx=0) tap).
    slab = jnp.concatenate(
        [jnp.zeros((1, cin_p), body_ref.dtype), body_ref[0], halo_ref[0]], axis=0)

    if fuse_input_bn:
        # Apply the previous layer's BatchNorm + ReLU on the fly, keeping the spatial
        # zero-padding positions exactly zero (relu(0*s + h) != 0 in general).
        r = pl.program_id(1)
        n_slab = slab.shape[0]
        e = lax.broadcasted_iota(jnp.int32, (n_slab, 1), 0)
        g = r * m_rows + e - 1                      # global flattened padded-row index
        col = g % wp
        is_pad = ((col == 0) | (col == w_real + 1)
                  | (g < wp) | (g >= (h_real + 1) * wp))
        act = jnp.maximum(slab.astype(jnp.float32) * scale_ref[...] + shift_ref[...], 0.0)
        slab = jnp.where(is_pad, 0.0, act).astype(w_ref.dtype)
    else:
        slab = slab.astype(w_ref.dtype)

    # 9 taps = 9 row-offset windows of the slab, concatenated along K (lanes).
    offs = [dy * wp + dx for dy in range(3) for dx in range(3)]
    patch = jnp.concatenate([slab[o:o + m_rows, :] for o in offs], axis=1)  # (M, 9*Cin_p)

    acc = jnp.dot(patch, w_ref[...], preferred_element_type=jnp.float32)    # (M, Cout_p)
    acc = acc + b_ref[...]

    # Zero the junk W-padding columns (output flat index m has real data at m%Wp in [1, W]).
    col = lax.broadcasted_iota(jnp.int32, (m_rows, 1), 0) % wp
    valid = (col >= 1) & (col <= w_real)
    acc = jnp.where(valid, acc, 0.0)

    # Per-tile BN partial statistics from the f32 accumulator (junk columns contribute 0).
    stats = jnp.concatenate(
        [jnp.sum(acc, axis=0, keepdims=True),
         jnp.sum(acc * acc, axis=0, keepdims=True),
         jnp.zeros((6, acc.shape[1]), jnp.float32)], axis=0)                 # (8, Cout_p)
    stats_ref[...] = stats[None, None]
    y_ref[...] = acc[None].astype(y_ref.dtype)


def _bn_relu_kernel(y_ref, scale_ref, shift_ref, o_ref):
    """Final per-channel affine normalize + ReLU (lane-dense 128-channel tiles)."""
    y = y_ref[...].astype(jnp.float32)
    o_ref[...] = jnp.maximum(y * scale_ref[...] + shift_ref[...], 0.0).astype(o_ref.dtype)


# --------------------------------------------------------------------------- #
# pallas_call wrappers
# --------------------------------------------------------------------------- #
def _conv_bn_stats(xp, wmat, bias, *, H, W, TH, in_scale=None, in_shift=None,
                   act_dtype=jnp.bfloat16):
    """xp: (N, (H+4)*(W+2), Cin_p) flattened padded input (bf16).
       wmat: (9*Cin_p, Cout_p) bf16.  bias: (1, Cout_p) f32.
       Returns y: (N, H*(W+2), Cout_p) act_dtype, stats: (N, R, 8, Cout_p) f32."""
    N = xp.shape[0]
    Wp = W + 2
    Cin_p = xp.shape[-1]
    Cout_p = wmat.shape[-1]
    R = H // TH
    M = TH * Wp
    fuse = in_scale is not None

    kernel = functools.partial(_conv_bn_stats_kernel, th=TH, wp=Wp,
                               w_real=W, h_real=H, fuse_input_bn=fuse)

    in_specs = [
        pl.BlockSpec((1, M, Cin_p), lambda n, r: (n, r, 0)),                      # body
        pl.BlockSpec((1, 4 * Wp, Cin_p), lambda n, r: (n, (TH // 4) * (r + 1), 0)),  # halo
        pl.BlockSpec((9 * Cin_p, Cout_p), lambda n, r: (0, 0)),                   # weights
        pl.BlockSpec((1, Cout_p), lambda n, r: (0, 0)),                           # bias
    ]
    args = [xp, xp, wmat, bias]
    if fuse:
        in_specs += [pl.BlockSpec((1, Cin_p), lambda n, r: (0, 0))] * 2
        args += [in_scale, in_shift]

    act_bytes = jnp.dtype(act_dtype).itemsize
    flops = 2 * N * H * W * 9 * Cin_p * Cout_p
    bytes_accessed = int(xp.size * xp.dtype.itemsize
                         + wmat.size * wmat.dtype.itemsize
                         + N * H * Wp * Cout_p * act_bytes
                         + N * R * 8 * Cout_p * 4)

    y, stats = pl.pallas_call(
        kernel,
        out_shape=(jax.ShapeDtypeStruct((N, H * Wp, Cout_p), act_dtype),
                   jax.ShapeDtypeStruct((N, R, 8, Cout_p), jnp.float32)),
        grid=(N, R),
        in_specs=in_specs,
        out_specs=(pl.BlockSpec((1, M, Cout_p), lambda n, r: (n, r, 0)),
                   pl.BlockSpec((1, 1, 8, Cout_p), lambda n, r: (n, r, 0, 0))),
        compiler_params=pltpu.CompilerParams(
            dimension_semantics=("parallel", "parallel"),
            vmem_limit_bytes=64 * 1024 * 1024),
        cost_estimate=pl.CostEstimate(flops=flops, transcendentals=0,
                                      bytes_accessed=bytes_accessed),
    )(*args)
    return y, stats


def _bn_relu(y, scale, shift, *, H, W, TH):
    """y: (N, H*(W+2), Cp) -> f32 normalized+ReLU output of the same shape."""
    N = y.shape[0]
    Wp = W + 2
    Cp = y.shape[-1]
    R = H // TH
    M = TH * Wp
    return pl.pallas_call(
        _bn_relu_kernel,
        out_shape=jax.ShapeDtypeStruct((N, H * Wp, Cp), jnp.float32),
        grid=(N, R),
        in_specs=[pl.BlockSpec((1, M, Cp), lambda n, r: (n, r, 0)),
                  pl.BlockSpec((1, Cp), lambda n, r: (0, 0)),
                  pl.BlockSpec((1, Cp), lambda n, r: (0, 0))],
        out_specs=pl.BlockSpec((1, M, Cp), lambda n, r: (n, r, 0)),
        compiler_params=pltpu.CompilerParams(
            dimension_semantics=("parallel", "parallel"),
            vmem_limit_bytes=64 * 1024 * 1024),
    )(y, scale, shift)


def _stats_to_affine(stats, gamma_p, beta_p, count):
    """Combine tiny per-tile partials into the training-mode BN affine (f32)."""
    s = jnp.sum(stats[:, :, 0, :], axis=(0, 1))
    sq = jnp.sum(stats[:, :, 1, :], axis=(0, 1))
    mean = s / count
    var = jnp.maximum(sq / count - mean * mean, 0.0)        # biased var, like PyTorch BN
    scale = (gamma_p / jnp.sqrt(var + BN_EPS)).astype(jnp.float32)
    shift = (beta_p - mean * scale).astype(jnp.float32)
    return scale.reshape(1, -1), shift.reshape(1, -1)


# --------------------------------------------------------------------------- #
# Full double_conv forward
# --------------------------------------------------------------------------- #
def double_conv_forward(x_nchw, p):
    """x_nchw: (N, Cin, H, W) -> (N, Cout, H, W).  p holds PyTorch-layout parameters."""
    N, Cin, H, W = x_nchw.shape
    Cout = p["w1"].shape[0]
    assert H % 4 == 0 and W % 2 == 0, "demo tiling assumes H%4==0 and even W"
    TH = 8 if H % 8 == 0 else 4
    Wp = W + 2
    Cin_p = _round_up(Cin, 8)
    Cout_p = _round_up(Cout, 128)
    count = N * H * W

    # ---- parameter prep (tiny; const-folded / fused by XLA) ----
    def prep_w(w_oihw, cin, cin_p):
        w = jnp.transpose(w_oihw, (2, 3, 1, 0))                       # (3,3,Cin,Cout)
        w = jnp.pad(w, ((0, 0), (0, 0), (0, cin_p - cin), (0, Cout_p - Cout)))
        return w.reshape(9 * cin_p, Cout_p).astype(jnp.bfloat16)

    wmat1 = prep_w(p["w1"], Cin, Cin_p)
    wmat2 = prep_w(p["w2"], Cout, Cout_p)
    b1p = jnp.pad(p["b1"], (0, Cout_p - Cout)).reshape(1, Cout_p).astype(jnp.float32)
    b2p = jnp.pad(p["b2"], (0, Cout_p - Cout)).reshape(1, Cout_p).astype(jnp.float32)
    g1p = jnp.pad(p["g1"], (0, Cout_p - Cout))
    be1p = jnp.pad(p["be1"], (0, Cout_p - Cout))
    g2p = jnp.pad(p["g2"], (0, Cout_p - Cout))
    be2p = jnp.pad(p["be2"], (0, Cout_p - Cout))

    # ---- input: NCHW -> NHWC, pad (H: 1+3, W: 1+1, C -> Cin_p), flatten, bf16 ----
    x = jnp.transpose(x_nchw, (0, 2, 3, 1))
    xp = jnp.pad(x, ((0, 0), (1, 3), (1, 1), (0, Cin_p - Cin))).astype(jnp.bfloat16)
    xp = xp.reshape(N, (H + 4) * Wp, Cin_p)

    # ---- layer 1: conv + bias + BN partial stats ----
    y1, st1 = _conv_bn_stats(xp, wmat1, b1p, H=H, W=W, TH=TH)
    s1, h1 = _stats_to_affine(st1, g1p, be1p, count)

    # TODO(synk): this inter-layer jnp.pad (one extra HBM pass of the intermediate) could be
    # removed entirely by writing the H-halo rows from the conv kernel via a manual output DMA.
    y1p = jnp.pad(y1, ((0, 0), (Wp, 3 * Wp), (0, 0)))

    # ---- layer 2: BN1+ReLU fused into the load path, then conv + bias + BN partial stats ----
    y2, st2 = _conv_bn_stats(y1p, wmat2, b2p, H=H, W=W, TH=TH, in_scale=s1, in_shift=h1)
    s2, h2 = _stats_to_affine(st2, g2p, be2p, count)

    # ---- final BN2 + ReLU (cheap elementwise kernel), unpad, back to NCHW ----
    o = _bn_relu(y2, s2, h2, H=H, W=W, TH=TH)                 # (N, H*Wp, Cout_p) f32
    o = o.reshape(N, H, Wp, Cout_p)[:, :, 1:W + 1, :Cout]
    return jnp.transpose(o, (0, 3, 1, 2))


# --------------------------------------------------------------------------- #
# Pure-JAX reference (mirrors the kernel's bf16 quantization points)
# --------------------------------------------------------------------------- #
def _ref_conv_bf16(x_nhwc, w_oihw, b):
    w_hwio = jnp.transpose(w_oihw, (2, 3, 1, 0)).astype(jnp.bfloat16)
    y = lax.conv_general_dilated(
        x_nhwc.astype(jnp.bfloat16), w_hwio, (1, 1), ((1, 1), (1, 1)),
        dimension_numbers=("NHWC", "HWIO", "NHWC"),
        preferred_element_type=jnp.float32)
    return y + b.reshape(1, 1, 1, -1)


def _ref_bn_affine(y, gamma, beta):
    mean = jnp.mean(y, axis=(0, 1, 2))
    var = jnp.var(y, axis=(0, 1, 2))
    scale = gamma / jnp.sqrt(var + BN_EPS)
    return scale, beta - mean * scale


def ref_forward(x_nchw, p):
    x = jnp.transpose(x_nchw, (0, 2, 3, 1))
    y1 = _ref_conv_bf16(x, p["w1"], p["b1"])
    s1, h1 = _ref_bn_affine(y1, p["g1"], p["be1"])
    y1q = y1.astype(jnp.bfloat16).astype(jnp.float32)        # bf16 activation storage
    a1 = jnp.maximum(y1q * s1 + h1, 0.0)
    y2 = _ref_conv_bf16(a1, p["w2"], p["b2"])
    s2, h2 = _ref_bn_affine(y2, p["g2"], p["be2"])
    y2q = y2.astype(jnp.bfloat16).astype(jnp.float32)
    out = jnp.maximum(y2q * s2 + h2, 0.0)
    return jnp.transpose(out, (0, 3, 1, 2))


# --------------------------------------------------------------------------- #
if __name__ == "__main__":
    N, IN_CH, OUT_CH, H, W = 2, 4, 8, 16, 16

    key = jax.random.PRNGKey(0)
    k1, k2, k3, k4, k5, k6, k7, k8, kx = jax.random.split(key, 9)

    params = {
        "w1": 0.1 * jax.random.normal(k1, (OUT_CH, IN_CH, 3, 3), jnp.float32),
        "b1": 0.1 * jax.random.normal(k2, (OUT_CH,), jnp.float32),
        "w2": 0.1 * jax.random.normal(k3, (OUT_CH, OUT_CH, 3, 3), jnp.float32),
        "b2": 0.1 * jax.random.normal(k4, (OUT_CH,), jnp.float32),
        "g1": 1.0 + 0.1 * jax.random.normal(k5, (OUT_CH,), jnp.float32),
        "be1": 0.1 * jax.random.normal(k6, (OUT_CH,), jnp.float32),
        "g2": 1.0 + 0.1 * jax.random.normal(k7, (OUT_CH,), jnp.float32),
        "be2": 0.1 * jax.random.normal(k8, (OUT_CH,), jnp.float32),
    }

    x = jax.random.normal(kx, (N, IN_CH, H, W), jnp.float32)   # PyTorch NCHW input

    out = jax.block_until_ready(jax.jit(double_conv_forward)(x, params))
    ref = jax.block_until_ready(ref_forward(x, params))

    assert out.shape == (N, OUT_CH, H, W), out.shape
    max_err = float(jnp.max(jnp.abs(out - ref)))
    assert jnp.allclose(out, ref, rtol=2e-3, atol=2e-3), max_err

    print("KERNEL_OK")
</pallas_src>

<mosaic_0001>
module attributes {stable_mosaic.version = 11 : i64} {
  func.func @_conv_bn_stats_kernel(%arg0: i32, %arg1: i32, %arg2: memref<1x144x8xbf16, #tpu.memory_space<vmem>>, %arg3: memref<1x72x8xbf16, #tpu.memory_space<vmem>>, %arg4: memref<72x128xbf16, #tpu.memory_space<vmem>>, %arg5: memref<1x128xf32, #tpu.memory_space<vmem>>, %arg6: memref<1x144x128xbf16, #tpu.memory_space<vmem>>, %arg7: memref<1x1x8x128xf32, #tpu.memory_space<vmem>>) attributes {dimension_semantics = [#tpu.dimension_semantics<parallel>, #tpu.dimension_semantics<parallel>], iteration_bounds = array<i64: 2, 2>, scalar_prefetch = 0 : i64, scratch_operands = 0 : i64, tpu.core_type = #tpu.core_type<tc>, window_params = [{transform_indices = @transform_0, window_bounds = array<i64: 1, 144, 8>}, {transform_indices = @transform_1, window_bounds = array<i64: 1, 72, 8>}, {pipeline_mode = #tpu.pipeline_mode<synchronous>, transform_indices = @transform_2, window_bounds = array<i64: 72, 128>}, {pipeline_mode = #tpu.pipeline_mode<synchronous>, transform_indices = @transform_3, window_bounds = array<i64: 1, 128>}, {transform_indices = @transform_4, window_bounds = array<i64: 1, 144, 128>}, {transform_indices = @transform_5, window_bounds = array<i64: 1, 1, 8, 128>}]} {
    %cst = arith.constant 0.000000e+00 : bf16
    %0 = vector.broadcast %cst : bf16 to vector<1x8xbf16>
    %c0 = arith.constant 0 : index
    %c0_0 = arith.constant 0 : index
    %c0_1 = arith.constant 0 : index
    %1 = vector.load %arg2[%c0, %c0_0, %c0_1] : memref<1x144x8xbf16, #tpu.memory_space<vmem>>, vector<1x144x8xbf16>
    %2 = vector.shape_cast %1 : vector<1x144x8xbf16> to vector<144x8xbf16>
    %c0_2 = arith.constant 0 : index
    %c0_3 = arith.constant 0 : index
    %c0_4 = arith.constant 0 : index
    %3 = vector.load %arg3[%c0_2, %c0_3, %c0_4] : memref<1x72x8xbf16, #tpu.memory_space<vmem>>, vector<1x72x8xbf16>
    %4 = vector.shape_cast %3 : vector<1x72x8xbf16> to vector<72x8xbf16>
    %5 = tpu.concatenate %0, %2, %4 in 0 : vector<1x8xbf16>, vector<144x8xbf16>, vector<72x8xbf16> -> vector<217x8xbf16>
    %6 = vector.extract_strided_slice %5 {offsets = [0, 0], sizes = [144, 8], strides = [1, 1]} : vector<217x8xbf16> to vector<144x8xbf16>
    %7 = vector.extract_strided_slice %5 {offsets = [1, 0], sizes = [144, 8], strides = [1, 1]} : vector<217x8xbf16> to vector<144x8xbf16>
    %8 = vector.extract_strided_slice %5 {offsets = [2, 0], sizes = [144, 8], strides = [1, 1]} : vector<217x8xbf16> to vector<144x8xbf16>
    %9 = vector.extract_strided_slice %5 {offsets = [18, 0], sizes = [144, 8], strides = [1, 1]} : vector<217x8xbf16> to vector<144x8xbf16>
    %10 = vector.extract_strided_slice %5 {offsets = [19, 0], sizes = [144, 8], strides = [1, 1]} : vector<217x8xbf16> to vector<144x8xbf16>
    %11 = vector.extract_strided_slice %5 {offsets = [20, 0], sizes = [144, 8], strides = [1, 1]} : vector<217x8xbf16> to vector<144x8xbf16>
    %12 = vector.extract_strided_slice %5 {offsets = [36, 0], sizes = [144, 8], strides = [1, 1]} : vector<217x8xbf16> to vector<144x8xbf16>
    %13 = vector.extract_strided_slice %5 {offsets = [37, 0], sizes = [144, 8], strides = [1, 1]} : vector<217x8xbf16> to vector<144x8xbf16>
    %14 = vector.extract_strided_slice %5 {offsets = [38, 0], sizes = [144, 8], strides = [1, 1]} : vector<217x8xbf16> to vector<144x8xbf16>
    %15 = tpu.concatenate %6, %7, %8, %9, %10, %11, %12, %13, %14 in 1 : vector<144x8xbf16>, vector<144x8xbf16>, vector<144x8xbf16>, vector<144x8xbf16>, vector<144x8xbf16>, vector<144x8xbf16>, vector<144x8xbf16>, vector<144x8xbf16>, vector<144x8xbf16> -> vector<144x72xbf16>
    %c0_5 = arith.constant 0 : index
    %c0_6 = arith.constant 0 : index
    %16 = vector.load %arg4[%c0_5, %c0_6] : memref<72x128xbf16, #tpu.memory_space<vmem>>, vector<72x128xbf16>
    %cst_7 = arith.constant dense<0.000000e+00> : vector<144x128xf32>
    %17 = tpu.matmul %15, %16, %cst_7 {dimension_numbers = #tpu.dot_dimension_numbers<[1], [0], [0], [1], [0, 0, 1, 1], [], []>} : vector<144x72xbf16>, vector<72x128xbf16>, vector<144x128xf32> -> vector<144x128xf32>
    %c0_8 = arith.constant 0 : index
    %c0_9 = arith.constant 0 : index
    %18 = vector.load %arg5[%c0_8, %c0_9] : memref<1x128xf32, #tpu.memory_space<vmem>>, vector<1x128xf32>
    %19 = vector.broadcast %18 : vector<1x128xf32> to vector<144x128xf32>
    %20 = arith.addf %17, %19 : vector<144x128xf32>
    %21 = tpu.iota {dimensions = array<i32: 0>} : vector<144x1xi32>
    %c18_i32 = arith.constant 18 : i32
    %c0_i32 = arith.constant 0 : i32
    %22 = arith.cmpi eq, %c18_i32, %c0_i32 : i32
    %c1_i32 = arith.constant 1 : i32
    %23 = arith.select %22, %c1_i32, %c18_i32 : i32
    %24 = vector.broadcast %23 : i32 to vector<144x1xi32>
    %25 = arith.remsi %21, %24 : vector<144x1xi32>
    %c0_i32_10 = arith.constant 0 : i32
    %26 = vector.broadcast %c0_i32_10 : i32 to vector<144x1xi32>
    %27 = arith.cmpi ne, %25, %26 : vector<144x1xi32>
    %c0_i32_11 = arith.constant 0 : i32
    %28 = vector.broadcast %c0_i32_11 : i32 to vector<144x1xi32>
    %29 = arith.cmpi slt, %25, %28 : vector<144x1xi32>
    %c0_i32_12 = arith.constant 0 : i32
    %30 = arith.cmpi slt, %23, %c0_i32_12 : i32
    %31 = vector.broadcast %30 : i1 to vector<144x1xi1>
    %32 = vector.broadcast %31 : vector<144x1xi1> to vector<144x1xi1>
    %33 = arith.xori %29, %32 : vector<144x1xi1>
    %34 = arith.andi %33, %27 : vector<144x1xi1>
    %35 = vector.broadcast %23 : i32 to vector<144x1xi32>
    %36 = arith.addi %25, %35 : vector<144x1xi32>
    %37 = arith.select %34, %36, %25 : vector<144x1xi1>, vector<144x1xi32>
    %c1_i32_13 = arith.constant 1 : i32
    %38 = vector.broadcast %c1_i32_13 : i32 to vector<144x1xi32>
    %39 = arith.cmpi sge, %37, %38 : vector<144x1xi32>
    %c16_i32 = arith.constant 16 : i32
    %40 = vector.broadcast %c16_i32 : i32 to vector<144x1xi32>
    %41 = arith.cmpi sle, %37, %40 : vector<144x1xi32>
    %42 = arith.andi %39, %41 : vector<144x1xi1>
    %cst_14 = arith.constant 0.000000e+00 : f32
    %43 = vector.shape_cast %42 : vector<144x1xi1> to vector<144x1xi1>
    %44 = vector.broadcast %43 : vector<144x1xi1> to vector<144x128xi1>
    %45 = vector.broadcast %cst_14 : f32 to vector<144x128xf32>
    %46 = arith.select %44, %20, %45 : vector<144x128xi1>, vector<144x128xf32>
    %cst_15 = arith.constant dense<0.000000e+00> : vector<128xf32>
    %47 = vector.multi_reduction <add>, %46, %cst_15 [0] : vector<144x128xf32> to vector<128xf32>
    %48 = vector.shape_cast %47 : vector<128xf32> to vector<1x128xf32>
    %49 = arith.mulf %46, %46 : vector<144x128xf32>
    %cst_16 = arith.constant dense<0.000000e+00> : vector<128xf32>
    %50 = vector.multi_reduction <add>, %49, %cst_16 [0] : vector<144x128xf32> to vector<128xf32>
    %51 = vector.shape_cast %50 : vector<128xf32> to vector<1x128xf32>
    %cst_17 = arith.constant 0.000000e+00 : f32
    %52 = vector.broadcast %cst_17 : f32 to vector<6x128xf32>
    %53 = tpu.concatenate %48, %51, %52 in 0 : vector<1x128xf32>, vector<1x128xf32>, vector<6x128xf32> -> vector<8x128xf32>
    %54 = vector.shape_cast %53 : vector<8x128xf32> to vector<1x1x8x128xf32>
    %c0_18 = arith.constant 0 : index
    %c0_19 = arith.constant 0 : index
    %c0_20 = arith.constant 0 : index
    %c0_21 = arith.constant 0 : index
    %55 = vector.load %arg7[%c0_18, %c0_19, %c0_20, %c0_21] : memref<1x1x8x128xf32, #tpu.memory_space<vmem>>, vector<1x1x8x128xf32>
    tpu.vector_store %arg7[%c0_18, %c0_19, %c0_20, %c0_21], %54 {strides = array<i32>} : memref<1x1x8x128xf32, #tpu.memory_space<vmem>>, vector<1x1x8x128xf32>,
    %56 = vector.shape_cast %46 : vector<144x128xf32> to vector<1x144x128xf32>
    %57 = arith.truncf %56 : vector<1x144x128xf32> to vector<1x144x128xbf16>
    %c0_22 = arith.constant 0 : index
    %c0_23 = arith.constant 0 : index
    %c0_24 = arith.constant 0 : index
    %58 = vector.load %arg6[%c0_22, %c0_23, %c0_24] : memref<1x144x128xbf16, #tpu.memory_space<vmem>>, vector<1x144x128xbf16>
    tpu.vector_store %arg6[%c0_22, %c0_23, %c0_24], %57 {strides = array<i32>} : memref<1x144x128xbf16, #tpu.memory_space<vmem>>, vector<1x144x128xbf16>,
    return
  }
  func.func @transform_0(%arg0: i32, %arg1: i32) -> (i32, i32, i32) {
    %c0_i32 = arith.constant 0 : i32
    %c0_i32_0 = arith.constant 0 : i32
    return %arg0, %arg1, %c0_i32 : i32, i32, i32
  }
  func.func @transform_1(%arg0: i32, %arg1: i32) -> (i32, i32, i32) {
    %c1_i32 = arith.constant 1 : i32
    %0 = arith.addi %arg1, %c1_i32 : i32
    %c2_i32 = arith.constant 2 : i32
    %1 = arith.muli %c2_i32, %0 : i32
    %c0_i32 = arith.constant 0 : i32
    %c0_i32_0 = arith.constant 0 : i32
    return %arg0, %1, %c0_i32 : i32, i32, i32
  }
  func.func @transform_2(%arg0: i32, %arg1: i32) -> (i32, i32) {
    %c0_i32 = arith.constant 0 : i32
    %c0_i32_0 = arith.constant 0 : i32
    %c0_i32_1 = arith.constant 0 : i32
    return %c0_i32, %c0_i32_0 : i32, i32
  }
  func.func @transform_3(%arg0: i32, %arg1: i32) -> (i32, i32) {
    %c0_i32 = arith.constant 0 : i32
    %c0_i32_0 = arith.constant 0 : i32
    %c0_i32_1 = arith.constant 0 : i32
    return %c0_i32, %c0_i32_0 : i32, i32
  }
  func.func @transform_4(%arg0: i32, %arg1: i32) -> (i32, i32, i32) {
    %c0_i32 = arith.constant 0 : i32
    %c0_i32_0 = arith.constant 0 : i32
    return %arg0, %arg1, %c0_i32 : i32, i32, i32
  }
  func.func @transform_5(%arg0: i32, %arg1: i32) -> (i32, i32, i32, i32) {
    %c0_i32 = arith.constant 0 : i32
    %c0_i32_0 = arith.constant 0 : i32
    %c0_i32_1 = arith.constant 0 : i32
    return %arg0, %arg1, %c0_i32, %c0_i32_0 : i32, i32, i32, i32
  }
}

module attributes {stable_mosaic.version = 11 : i64} {
  func.func @_conv_bn_stats_kernel(%arg0: i32, %arg1: i32, %arg2: memref<1x144x128xbf16, #tpu.memory_space<vmem>>, %arg3: memref<1x72x128xbf16, #tpu.memory_space<vmem>>, %arg4: memref<1152x128xbf16, #tpu.memory_space<vmem>>, %arg5: memref<1x128xf32, #tpu.memory_space<vmem>>, %arg6: memref<1x128xf32, #tpu.memory_space<vmem>>, %arg7: memref<1x128xf32, #tpu.memory_space<vmem>>, %arg8: memref<1x144x128xbf16, #tpu.memory_space<vmem>>, %arg9: memref<1x1x8x128xf32, #tpu.memory_space<vmem>>) attributes {dimension_semantics = [#tpu.dimension_semantics<parallel>, #tpu.dimension_semantics<parallel>], iteration_bounds = array<i64: 2, 2>, scalar_prefetch = 0 : i64, scratch_operands = 0 : i64, tpu.core_type = #tpu.core_type<tc>, window_params = [{transform_indices = @transform_0, window_bounds = array<i64: 1, 144, 128>}, {transform_indices = @transform_1, window_bounds = array<i64: 1, 72, 128>}, {pipeline_mode = #tpu.pipeline_mode<synchronous>, transform_indices = @transform_2, window_bounds = array<i64: 1152, 128>}, {pipeline_mode = #tpu.pipeline_mode<synchronous>, transform_indices = @transform_3, window_bounds = array<i64: 1, 128>}, {pipeline_mode = #tpu.pipeline_mode<synchronous>, transform_indices = @transform_4, window_bounds = array<i64: 1, 128>}, {pipeline_mode = #tpu.pipeline_mode<synchronous>, transform_indices = @transform_5, window_bounds = array<i64: 1, 128>}, {transform_indices = @transform_6, window_bounds = array<i64: 1, 144, 128>}, {transform_indices = @transform_7, window_bounds = array<i64: 1, 1, 8, 128>}]} {
    %cst = arith.constant 0.000000e+00 : bf16
    %0 = vector.broadcast %cst : bf16 to vector<1x128xbf16>
    %c0 = arith.constant 0 : index
    %c0_0 = arith.constant 0 : index
    %c0_1 = arith.constant 0 : index
    %1 = vector.load %arg2[%c0, %c0_0, %c0_1] : memref<1x144x128xbf16, #tpu.memory_space<vmem>>, vector<1x144x128xbf16>
    %2 = vector.shape_cast %1 : vector<1x144x128xbf16> to vector<144x128xbf16>
    %c0_2 = arith.constant 0 : index
    %c0_3 = arith.constant 0 : index
    %c0_4 = arith.constant 0 : index
    %3 = vector.load %arg3[%c0_2, %c0_3, %c0_4] : memref<1x72x128xbf16, #tpu.memory_space<vmem>>, vector<1x72x128xbf16>
    %4 = vector.shape_cast %3 : vector<1x72x128xbf16> to vector<72x128xbf16>
    %5 = tpu.concatenate %0, %2, %4 in 0 : vector<1x128xbf16>, vector<144x128xbf16>, vector<72x128xbf16> -> vector<217x128xbf16>
    %6 = tpu.iota {dimensions = array<i32: 0>} : vector<217x1xi32>
    %c144_i32 = arith.constant 144 : i32
    %7 = arith.muli %arg1, %c144_i32 : i32
    %8 = vector.broadcast %7 : i32 to vector<217x1xi32>
    %9 = arith.addi %8, %6 : vector<217x1xi32>
    %c1_i32 = arith.constant 1 : i32
    %10 = vector.broadcast %c1_i32 : i32 to vector<217x1xi32>
    %11 = arith.subi %9, %10 : vector<217x1xi32>
    %c18_i32 = arith.constant 18 : i32
    %c0_i32 = arith.constant 0 : i32
    %12 = arith.cmpi eq, %c18_i32, %c0_i32 : i32
    %c1_i32_5 = arith.constant 1 : i32
    %13 = arith.select %12, %c1_i32_5, %c18_i32 : i32
    %14 = vector.broadcast %13 : i32 to vector<217x1xi32>
    %15 = arith.remsi %11, %14 : vector<217x1xi32>
    %c0_i32_6 = arith.constant 0 : i32
    %16 = vector.broadcast %c0_i32_6 : i32 to vector<217x1xi32>
    %17 = arith.cmpi ne, %15, %16 : vector<217x1xi32>
    %c0_i32_7 = arith.constant 0 : i32
    %18 = vector.broadcast %c0_i32_7 : i32 to vector<217x1xi32>
    %19 = arith.cmpi slt, %15, %18 : vector<217x1xi32>
    %c0_i32_8 = arith.constant 0 : i32
    %20 = arith.cmpi slt, %13, %c0_i32_8 : i32
    %21 = vector.broadcast %20 : i1 to vector<217x1xi1>
    %22 = vector.broadcast %21 : vector<217x1xi1> to vector<217x1xi1>
    %23 = arith.xori %19, %22 : vector<217x1xi1>
    %24 = arith.andi %23, %17 : vector<217x1xi1>
    %25 = vector.broadcast %13 : i32 to vector<217x1xi32>
    %26 = arith.addi %15, %25 : vector<217x1xi32>
    %27 = arith.select %24, %26, %15 : vector<217x1xi1>, vector<217x1xi32>
    %c0_i32_9 = arith.constant 0 : i32
    %28 = vector.broadcast %c0_i32_9 : i32 to vector<217x1xi32>
    %29 = arith.cmpi eq, %27, %28 : vector<217x1xi32>
    %c17_i32 = arith.constant 17 : i32
    %30 = vector.broadcast %c17_i32 : i32 to vector<217x1xi32>
    %31 = arith.cmpi eq, %27, %30 : vector<217x1xi32>
    %32 = arith.ori %29, %31 : vector<217x1xi1>
    %c18_i32_10 = arith.constant 18 : i32
    %33 = vector.broadcast %c18_i32_10 : i32 to vector<217x1xi32>
    %34 = arith.cmpi slt, %11, %33 : vector<217x1xi32>
    %35 = arith.ori %32, %34 : vector<217x1xi1>
    %c306_i32 = arith.constant 306 : i32
    %36 = vector.broadcast %c306_i32 : i32 to vector<217x1xi32>
    %37 = arith.cmpi sge, %11, %36 : vector<217x1xi32>
    %38 = arith.ori %35, %37 : vector<217x1xi1>
    %39 = arith.extf %5 : vector<217x128xbf16> to vector<217x128xf32>
    %c0_11 = arith.constant 0 : index
    %c0_12 = arith.constant 0 : index
    %40 = vector.load %arg6[%c0_11, %c0_12] : memref<1x128xf32, #tpu.memory_space<vmem>>, vector<1x128xf32>
    %41 = vector.broadcast %40 : vector<1x128xf32> to vector<217x128xf32>
    %42 = arith.mulf %39, %41 : vector<217x128xf32>
    %c0_13 = arith.constant 0 : index
    %c0_14 = arith.constant 0 : index
    %43 = vector.load %arg7[%c0_13, %c0_14] : memref<1x128xf32, #tpu.memory_space<vmem>>, vector<1x128xf32>
    %44 = vector.broadcast %43 : vector<1x128xf32> to vector<217x128xf32>
    %45 = arith.addf %42, %44 : vector<217x128xf32>
    %cst_15 = arith.constant 0.000000e+00 : f32
    %46 = vector.broadcast %cst_15 : f32 to vector<217x128xf32>
    %47 = arith.maximumf %45, %46 : vector<217x128xf32>
    %cst_16 = arith.constant 0.000000e+00 : f32
    %48 = vector.shape_cast %38 : vector<217x1xi1> to vector<217x1xi1>
    %49 = vector.broadcast %48 : vector<217x1xi1> to vector<217x128xi1>
    %50 = vector.broadcast %cst_16 : f32 to vector<217x128xf32>
    %51 = arith.select %49, %50, %47 : vector<217x128xi1>, vector<217x128xf32>
    %52 = arith.truncf %51 : vector<217x128xf32> to vector<217x128xbf16>
    %53 = vector.extract_strided_slice %52 {offsets = [0, 0], sizes = [144, 128], strides = [1, 1]} : vector<217x128xbf16> to vector<144x128xbf16>
    %54 = vector.extract_strided_slice %52 {offsets = [1, 0], sizes = [144, 128], strides = [1, 1]} : vector<217x128xbf16> to vector<144x128xbf16>
    %55 = vector.extract_strided_slice %52 {offsets = [2, 0], sizes = [144, 128], strides = [1, 1]} : vector<217x128xbf16> to vector<144x128xbf16>
    %56 = vector.extract_strided_slice %52 {offsets = [18, 0], sizes = [144, 128], strides = [1, 1]} : vector<217x128xbf16> to vector<144x128xbf16>
    %57 = vector.extract_strided_slice %52 {offsets = [19, 0], sizes = [144, 128], strides = [1, 1]} : vector<217x128xbf16> to vector<144x128xbf16>
    %58 = vector.extract_strided_slice %52 {offsets = [20, 0], sizes = [144, 128], strides = [1, 1]} : vector<217x128xbf16> to vector<144x128xbf16>
    %59 = vector.extract_strided_slice %52 {offsets = [36, 0], sizes = [144, 128], strides = [1, 1]} : vector<217x128xbf16> to vector<144x128xbf16>
    %60 = vector.extract_strided_slice %52 {offsets = [37, 0], sizes = [144, 128], strides = [1, 1]} : vector<217x128xbf16> to vector<144x128xbf16>
    %61 = vector.extract_strided_slice %52 {offsets = [38, 0], sizes = [144, 128], strides = [1, 1]} : vector<217x128xbf16> to vector<144x128xbf16>
    %62 = tpu.concatenate %53, %54, %55, %56, %57, %58, %59, %60, %61 in 1 : vector<144x128xbf16>, vector<144x128xbf16>, vector<144x128xbf16>, vector<144x128xbf16>, vector<144x128xbf16>, vector<144x128xbf16>, vector<144x128xbf16>, vector<144x128xbf16>, vector<144x128xbf16> -> vector<144x1152xbf16>
    %c0_17 = arith.constant 0 : index
    %c0_18 = arith.constant 0 : index
    %63 = vector.load %arg4[%c0_17, %c0_18] : memref<1152x128xbf16, #tpu.memory_space<vmem>>, vector<1152x128xbf16>
    %cst_19 = arith.constant dense<0.000000e+00> : vector<144x128xf32>
    %64 = tpu.matmul %62, %63, %cst_19 {dimension_numbers = #tpu.dot_dimension_numbers<[1], [0], [0], [1], [0, 0, 1, 1], [], []>} : vector<144x1152xbf16>, vector<1152x128xbf16>, vector<144x128xf32> -> vector<144x128xf32>
    %c0_20 = arith.constant 0 : index
    %c0_21 = arith.constant 0 : index
    %65 = vector.load %arg5[%c0_20, %c0_21] : memref<1x128xf32, #tpu.memory_space<vmem>>, vector<1x128xf32>
    %66 = vector.broadcast %65 : vector<1x128xf32> to vector<144x128xf32>
    %67 = arith.addf %64, %66 : vector<144x128xf32>
    %68 = tpu.iota {dimensions = array<i32: 0>} : vector<144x1xi32>
    %c18_i32_22 = arith.constant 18 : i32
    %c0_i32_23 = arith.constant 0 : i32
    %69 = arith.cmpi eq, %c18_i32_22, %c0_i32_23 : i32
    %c1_i32_24 = arith.constant 1 : i32
    %70 = arith.select %69, %c1_i32_24, %c18_i32_22 : i32
    %71 = vector.broadcast %70 : i32 to vector<144x1xi32>
    %72 = arith.remsi %68, %71 : vector<144x1xi32>
    %c0_i32_25 = arith.constant 0 : i32
    %73 = vector.broadcast %c0_i32_25 : i32 to vector<144x1xi32>
    %74 = arith.cmpi ne, %72, %73 : vector<144x1xi32>
    %c0_i32_26 = arith.constant 0 : i32
    %75 = vector.broadcast %c0_i32_26 : i32 to vector<144x1xi32>
    %76 = arith.cmpi slt, %72, %75 : vector<144x1xi32>
    %c0_i32_27 = arith.constant 0 : i32
    %77 = arith.cmpi slt, %70, %c0_i32_27 : i32
    %78 = vector.broadcast %77 : i1 to vector<144x1xi1>
    %79 = vector.broadcast %78 : vector<144x1xi1> to vector<144x1xi1>
    %80 = arith.xori %76, %79 : vector<144x1xi1>
    %81 = arith.andi %80, %74 : vector<144x1xi1>
    %82 = vector.broadcast %70 : i32 to vector<144x1xi32>
    %83 = arith.addi %72, %82 : vector<144x1xi32>
    %84 = arith.select %81, %83, %72 : vector<144x1xi1>, vector<144x1xi32>
    %c1_i32_28 = arith.constant 1 : i32
    %85 = vector.broadcast %c1_i32_28 : i32 to vector<144x1xi32>
    %86 = arith.cmpi sge, %84, %85 : vector<144x1xi32>
    %c16_i32 = arith.constant 16 : i32
    %87 = vector.broadcast %c16_i32 : i32 to vector<144x1xi32>
    %88 = arith.cmpi sle, %84, %87 : vector<144x1xi32>
    %89 = arith.andi %86, %88 : vector<144x1xi1>
    %cst_29 = arith.constant 0.000000e+00 : f32
    %90 = vector.shape_cast %89 : vector<144x1xi1> to vector<144x1xi1>
    %91 = vector.broadcast %90 : vector<144x1xi1> to vector<144x128xi1>
    %92 = vector.broadcast %cst_29 : f32 to vector<144x128xf32>
    %93 = arith.select %91, %67, %92 : vector<144x128xi1>, vector<144x128xf32>
    %cst_30 = arith.constant dense<0.000000e+00> : vector<128xf32>
    %94 = vector.multi_reduction <add>, %93, %cst_30 [0] : vector<144x128xf32> to vector<128xf32>
    %95 = vector.shape_cast %94 : vector<128xf32> to vector<1x128xf32>
    %96 = arith.mulf %93, %93 : vector<144x128xf32>
    %cst_31 = arith.constant dense<0.000000e+00> : vector<128xf32>
    %97 = vector.multi_reduction <add>, %96, %cst_31 [0] : vector<144x128xf32> to vector<128xf32>
    %98 = vector.shape_cast %97 : vector<128xf32> to vector<1x128xf32>
    %cst_32 = arith.constant 0.000000e+00 : f32
    %99 = vector.broadcast %cst_32 : f32 to vector<6x128xf32>
    %100 = tpu.concatenate %95, %98, %99 in 0 : vector<1x128xf32>, vector<1x128xf32>, vector<6x128xf32> -> vector<8x128xf32>
    %101 = vector.shape_cast %100 : vector<8x128xf32> to vector<1x1x8x128xf32>
    %c0_33 = arith.constant 0 : index
    %c0_34 = arith.constant 0 : index
    %c0_35 = arith.constant 0 : index
    %c0_36 = arith.constant 0 : index
    %102 = vector.load %arg9[%c0_33, %c0_34, %c0_35, %c0_36] : memref<1x1x8x128xf32, #tpu.memory_space<vmem>>, vector<1x1x8x128xf32>
    tpu.vector_store %arg9[%c0_33, %c0_34, %c0_35, %c0_36], %101 {strides = array<i32>} : memref<1x1x8x128xf32, #tpu.memory_space<vmem>>, vector<1x1x8x128xf32>,
    %103 = vector.shape_cast %93 : vector<144x128xf32> to vector<1x144x128xf32>
    %104 = arith.truncf %103 : vector<1x144x128xf32> to vector<1x144x128xbf16>
    %c0_37 = arith.constant 0 : index
    %c0_38 = arith.constant 0 : index
    %c0_39 = arith.constant 0 : index
    %105 = vector.load %arg8[%c0_37, %c0_38, %c0_39] : memref<1x144x128xbf16, #tpu.memory_space<vmem>>, vector<1x144x128xbf16>
    tpu.vector_store %arg8[%c0_37, %c0_38, %c0_39], %104 {strides = array<i32>} : memref<1x144x128xbf16, #tpu.memory_space<vmem>>, vector<1x144x128xbf16>,
    return
  }
  func.func @transform_0(%arg0: i32, %arg1: i32) -> (i32, i32, i32) {
    %c0_i32 = arith.constant 0 : i32
    %c0_i32_0 = arith.constant 0 : i32
    return %arg0, %arg1, %c0_i32 : i32, i32, i32
  }
  func.func @transform_1(%arg0: i32, %arg1: i32) -> (i32, i32, i32) {
    %c1_i32 = arith.constant 1 : i32
    %0 = arith.addi %arg1, %c1_i32 : i32
    %c2_i32 = arith.constant 2 : i32
    %1 = arith.muli %c2_i32, %0 : i32
    %c0_i32 = arith.constant 0 : i32
    %c0_i32_0 = arith.constant 0 : i32
    return %arg0, %1, %c0_i32 : i32, i32, i32
  }
  func.func @transform_2(%arg0: i32, %arg1: i32) -> (i32, i32) {
    %c0_i32 = arith.constant 0 : i32
    %c0_i32_0 = arith.constant 0 : i32
    %c0_i32_1 = arith.constant 0 : i32
    return %c0_i32, %c0_i32_0 : i32, i32
  }
  func.func @transform_3(%arg0: i32, %arg1: i32) -> (i32, i32) {
    %c0_i32 = arith.constant 0 : i32
    %c0_i32_0 = arith.constant 0 : i32
    %c0_i32_1 = arith.constant 0 : i32
    return %c0_i32, %c0_i32_0 : i32, i32
  }
  func.func @transform_4(%arg0: i32, %arg1: i32) -> (i32, i32) {
    %c0_i32 = arith.constant 0 : i32
    %c0_i32_0 = arith.constant 0 : i32
    %c0_i32_1 = arith.constant 0 : i32
    return %c0_i32, %c0_i32_0 : i32, i32
  }
  func.func @transform_5(%arg0: i32, %arg1: i32) -> (i32, i32) {
    %c0_i32 = arith.constant 0 : i32
    %c0_i32_0 = arith.constant 0 : i32
    %c0_i32_1 = arith.constant 0 : i32
    return %c0_i32, %c0_i32_0 : i32, i32
  }
  func.func @transform_6(%arg0: i32, %arg1: i32) -> (i32, i32, i32) {
    %c0_i32 = arith.constant 0 : i32
    %c0_i32_0 = arith.constant 0 : i32
    return %arg0, %arg1, %c0_i32 : i32, i32, i32
  }
  func.func @transform_7(%arg0: i32, %arg1: i32) -> (i32, i32, i32, i32) {
    %c0_i32 = arith.constant 0 : i32
    %c0_i32_0 = arith.constant 0 : i32
    %c0_i32_1 = arith.constant 0 : i32
    return %arg0, %arg1, %c0_i32, %c0_i32_0 : i32, i32, i32, i32
  }
}

module attributes {stable_mosaic.version = 11 : i64} {
  func.func @_bn_relu_kernel(%arg0: i32, %arg1: i32, %arg2: memref<1x144x128xbf16, #tpu.memory_space<vmem>>, %arg3: memref<1x128xf32, #tpu.memory_space<vmem>>, %arg4: memref<1x128xf32, #tpu.memory_space<vmem>>, %arg5: memref<1x144x128xf32, #tpu.memory_space<vmem>>) attributes {dimension_semantics = [#tpu.dimension_semantics<parallel>, #tpu.dimension_semantics<parallel>], iteration_bounds = array<i64: 2, 2>, scalar_prefetch = 0 : i64, scratch_operands = 0 : i64, tpu.core_type = #tpu.core_type<tc>, window_params = [{transform_indices = @transform_0, window_bounds = array<i64: 1, 144, 128>}, {pipeline_mode = #tpu.pipeline_mode<synchronous>, transform_indices = @transform_1, window_bounds = array<i64: 1, 128>}, {pipeline_mode = #tpu.pipeline_mode<synchronous>, transform_indices = @transform_2, window_bounds = array<i64: 1, 128>}, {transform_indices = @transform_3, window_bounds = array<i64: 1, 144, 128>}]} {
    %c0 = arith.constant 0 : index
    %c0_0 = arith.constant 0 : index
    %c0_1 = arith.constant 0 : index
    %0 = vector.load %arg2[%c0, %c0_0, %c0_1] : memref<1x144x128xbf16, #tpu.memory_space<vmem>>, vector<1x144x128xbf16>
    %1 = arith.extf %0 : vector<1x144x128xbf16> to vector<1x144x128xf32>
    %c0_2 = arith.constant 0 : index
    %c0_3 = arith.constant 0 : index
    %2 = vector.load %arg3[%c0_2, %c0_3] : memref<1x128xf32, #tpu.memory_space<vmem>>, vector<1x128xf32>
    %3 = vector.shape_cast %2 : vector<1x128xf32> to vector<1x1x128xf32>
    %4 = vector.broadcast %3 : vector<1x1x128xf32> to vector<1x144x128xf32>
    %5 = arith.mulf %1, %4 : vector<1x144x128xf32>
    %c0_4 = arith.constant 0 : index
    %c0_5 = arith.constant 0 : index
    %6 = vector.load %arg4[%c0_4, %c0_5] : memref<1x128xf32, #tpu.memory_space<vmem>>, vector<1x128xf32>
    %7 = vector.shape_cast %6 : vector<1x128xf32> to vector<1x1x128xf32>
    %8 = vector.broadcast %7 : vector<1x1x128xf32> to vector<1x144x128xf32>
    %9 = arith.addf %5, %8 : vector<1x144x128xf32>
    %cst = arith.constant 0.000000e+00 : f32
    %10 = vector.broadcast %cst : f32 to vector<1x144x128xf32>
    %11 = arith.maximumf %9, %10 : vector<1x144x128xf32>
    %c0_6 = arith.constant 0 : index
    %c0_7 = arith.constant 0 : index
    %c0_8 = arith.constant 0 : index
    %12 = vector.load %arg5[%c0_6, %c0_7, %c0_8] : memref<1x144x128xf32, #tpu.memory_space<vmem>>, vector<1x144x128xf32>
    tpu.vector_store %arg5[%c0_6, %c0_7, %c0_8], %11 {strides = array<i32>} : memref<1x144x128xf32, #tpu.memory_space<vmem>>, vector<1x144x128xf32>,
    return
  }
  func.func @transform_0(%arg0: i32, %arg1: i32) -> (i32, i32, i32) {
    %c0_i32 = arith.constant 0 : i32
    %c0_i32_0 = arith.constant 0 : i32
    return %arg0, %arg1, %c0_i32 : i32, i32, i32
  }
  func.func @transform_1(%arg0: i32, %arg1: i32) -> (i32, i32) {
    %c0_i32 = arith.constant 0 : i32
    %c0_i32_0 = arith.constant 0 : i32
    %c0_i32_1 = arith.constant 0 : i32
    return %c0_i32, %c0_i32_0 : i32, i32
  }
  func.func @transform_2(%arg0: i32, %arg1: i32) -> (i32, i32) {
    %c0_i32 = arith.constant 0 : i32
    %c0_i32_0 = arith.constant 0 : i32
    %c0_i32_1 = arith.constant 0 : i32
    return %c0_i32, %c0_i32_0 : i32, i32
  }
  func.func @transform_3(%arg0: i32, %arg1: i32) -> (i32, i32, i32) {
    %c0_i32 = arith.constant 0 : i32
    %c0_i32_0 = arith.constant 0 : i32
    return %arg0, %arg1, %c0_i32 : i32, i32, i32
  }
}

</mosaic_0001>

<llo_original>
// kernel: double_conv_forward.5
$region0: #{double_conv_forward.5}
  #allocation0 [shape = 'u32[]', space=smem, size = 0x4, offset = 0x4, fixed_abs, tag = 'smem constant byte address 0x4 - core index']
  #allocation1 [shape = 'u32[144,128]{1,0:T(1,128)}', space=vmem, size = 0x12000, scoped, tag = 'internal scratch']
  %s0 = inlined_call_operand.vmem [shape: bf16[2,288,128], index: 0, kind: input, shape index: {}]
  %s1 = inlined_call_operand.vmem [shape: f32[1,128], index: 1, kind: input, shape index: {}]
  %s2 = inlined_call_operand.vmem [shape: f32[1,128], index: 2, kind: input, shape index: {}]
  %s3 = inlined_call_operand.vmem [shape: f32[2,288,128], index: 3, kind: output, shape index: {}]
  %s4 = sld [smem:[#allocation0]]
  $region45: #{double_conv_forward.5} parent=0
    _
  %s6 = ssub.s32 1, %s4
  %s7 = scalar_select 0, %s6, %s4
  loop: start=0, step=1, limit=6
  $region2: #{double_conv_forward.5} parent=0 // loop_pre_header
    _
  $region3: #{double_conv_forward.5} parent=0 // loop_header
    %s9 = sphi 0, %s13
    %p10 = scmp.ge.s32.totalorder %s9, 6
    %s16 = sphi 0, %s28
    %s17 = sphi 0, %s24
    %s18 = sphi 0, %s16
    %s19 = sphi 0, %s17
    %s20 = sphi 0, %s18
    %s21 = sphi 0, %s19
    %s33 = sphi 0, %s35
    %s36 = sphi 0, %s33
    %s37 = sphi 0, %s36
    %s53 = sphi 0, %s37
    %s57 = sphi 0, %s57
    %s59 = sphi 0, %s57
    %s60 = sphi 0, %s59
    %s74 = sphi 0, %s60
    %s78 = sphi 0, %s78
    %s80 = sphi 0, %s78
    %s81 = sphi 0, %s80
    %s95 = sphi 0, %s81
    %s103 = sphi 0, %s105
    %s106 = sphi 0, %s103
    %s107 = sphi 0, %s106
    %s123 = sphi 0, %s107
  $region4: #{double_conv_forward.5} parent=0 // loop_header_branch
    %12 = sbr.rel (%p10) target = $region8
  $region5: #{double_conv_forward.5} parent=0 // loop_body
    %s14 = ssub.s32 %s9, 1
    %s15 = ssub.s32 %s9, 2
    %s22 = sadd.s32 1, %s17
    %p23 = scmp.ge.s32.totalorder %s22, 2
    %s24 = scalar_select %p23, 0, %s22
    %s25 = sadd.s32 1, %s16
    %s26 = scalar_select %p23, %s25, %s16
    %p27 = scmp.ge.s32.totalorder %s26, 2
    %s28 = scalar_select %p27, 0, %s26
    %s29 = ssub.s32 %s16, %s28
    %s30 = ssub.s32 %s17, %s24
    %s31 = sor.u32 %s29, %s30
    %p32 = scmp.eq.s32.totalorder %s31, 0
    %s34 = sadd.s32 %s33, 1
    %s35 = scalar_select %p32, %s33, %s34
    %p38 = pneg %p32
    %p39 = scmp.eq.s32.totalorder %s9, 3
    %p40 = por %p38, %p39
    %p41 = scmp.ne.s32.totalorder %s33, %s36
    %p42 = scmp.eq.s32.totalorder %s9, 0
    %p43 = por %p41, %p42
    %p44 = scmp.ne.s32.totalorder %s33, %s36
    %p45 = scmp.eq.s32.totalorder %s14, 3
    %p46 = por %p44, %p45
    %p47 = scmp.ne.s32.totalorder %s36, %s37
    %p48 = scmp.eq.s32.totalorder %s14, 0
    %p49 = por %p47, %p48
    %p50 = scmp.ne.s32.totalorder %s36, %s37
    %p51 = scmp.eq.s32.totalorder %s15, 3
    %p52 = por %p50, %p51
    %p54 = scmp.ne.s32.totalorder %s37, %s53
    %p55 = scmp.eq.s32.totalorder %s15, 0
    %p56 = por %p54, %p55
    %s58 = sadd.s32 %s57, 1
    %p61 = scmp.eq.s32.totalorder %s9, 3
    %p62 = scmp.ne.s32.totalorder %s57, %s59
    %p63 = scmp.eq.s32.totalorder %s9, 0
    %p64 = por %p62, %p63
    %p65 = scmp.ne.s32.totalorder %s57, %s59
    %p66 = scmp.eq.s32.totalorder %s14, 3
    %p67 = por %p65, %p66
    %p68 = scmp.ne.s32.totalorder %s59, %s60
    %p69 = scmp.eq.s32.totalorder %s14, 0
    %p70 = por %p68, %p69
    %p71 = scmp.ne.s32.totalorder %s59, %s60
    %p72 = scmp.eq.s32.totalorder %s15, 3
    %p73 = por %p71, %p72
    %p75 = scmp.ne.s32.totalorder %s60, %s74
    %p76 = scmp.eq.s32.totalorder %s15, 0
    %p77 = por %p75, %p76
    %s79 = sadd.s32 %s78, 1
    %p82 = scmp.eq.s32.totalorder %s9, 3
    %p83 = scmp.ne.s32.totalorder %s78, %s80
    %p84 = scmp.eq.s32.totalorder %s9, 0
    %p85 = por %p83, %p84
    %p86 = scmp.ne.s32.totalorder %s78, %s80
    %p87 = scmp.eq.s32.totalorder %s14, 3
    %p88 = por %p86, %p87
    %p89 = scmp.ne.s32.totalorder %s80, %s81
    %p90 = scmp.eq.s32.totalorder %s14, 0
    %p91 = por %p89, %p90
    %p92 = scmp.ne.s32.totalorder %s80, %s81
    %p93 = scmp.eq.s32.totalorder %s15, 3
    %p94 = por %p92, %p93
    %p96 = scmp.ne.s32.totalorder %s81, %s95
    %p97 = scmp.eq.s32.totalorder %s15, 0
    %p98 = por %p96, %p97
    %s99 = ssub.s32 %s16, %s28
    %s100 = ssub.s32 %s17, %s24
    %s101 = sor.u32 %s99, %s100
    %p102 = scmp.eq.s32.totalorder %s101, 0
    %s104 = sadd.s32 %s103, 1
    %s105 = scalar_select %p102, %s103, %s104
    %p108 = pneg %p102
    %p109 = scmp.eq.s32.totalorder %s9, 3
    %p110 = por %p108, %p109
    %p111 = scmp.ne.s32.totalorder %s103, %s106
    %p112 = scmp.eq.s32.totalorder %s9, 0
    %p113 = por %p111, %p112
    %p114 = scmp.ne.s32.totalorder %s103, %s106
    %p115 = scmp.eq.s32.totalorder %s14, 3
    %p116 = por %p114, %p115
    %p117 = scmp.ne.s32.totalorder %s106, %s107
    %p118 = scmp.eq.s32.totalorder %s14, 0
    %p119 = por %p117, %p118
    %p120 = scmp.ne.s32.totalorder %s106, %s107
    %p121 = scmp.eq.s32.totalorder %s15, 3
    %p122 = por %p120, %p121
    %p124 = scmp.ne.s32.totalorder %s107, %s123
    %p125 = scmp.eq.s32.totalorder %s15, 0
    %p126 = por %p124, %p125
    %p127 = scmp.le.s32.totalorder 1, %s9
    %p128 = scmp.lt.s32.totalorder %s9, 5
    %p129 = pnand %p127, %p128
    %p130 = pneg %p129
    // Predicated region
    $region9: #{double_conv_forward.5} parent=5 // pred_check
      _
    $region10: #{double_conv_forward.5} parent=5 // pred_check_branch
      %132 = sbr.rel (%p129) target = $region12
    $region11: #{double_conv_forward.5} parent=5 // pred_region
      %s133 = ssub.s32 %s9, 1
      // Predicated region
      $region13: #{double_conv_forward.5} parent=11 // pred_check
        %p134 = pneg %p70
      $region14: #{double_conv_forward.5} parent=11 // pred_check_branch
        %136 = sbr.rel (%p134) target = $region16
      $region15: #{double_conv_forward.5} parent=11 // pred_region
        _
      $region16: #{double_conv_forward.5} parent=11 // pred_fallthru
        _
      // Predicated region
      $region17: #{double_conv_forward.5} parent=11 // pred_check
        %p137 = pneg %p91
      $region18: #{double_conv_forward.5} parent=11 // pred_check_branch
        %139 = sbr.rel (%p137) target = $region20
      $region19: #{double_conv_forward.5} parent=11 // pred_region
        _
      $region20: #{double_conv_forward.5} parent=11 // pred_fallthru
        _
    $region12: #{double_conv_forward.5} parent=5 // pred_fallthru
      _
    %p140 = scmp.lt.s32.totalorder %s9, 4
    // Predicated region
    $region21: #{double_conv_forward.5} parent=5 // pred_check
      %p141 = pneg %p140
    $region22: #{double_conv_forward.5} parent=5 // pred_check_branch
      %143 = sbr.rel (%p141) target = $region24
    $region23: #{double_conv_forward.5} parent=5 // pred_region
      // Predicated region
      $region25: #{double_conv_forward.5} parent=23 // pred_check
        %p144 = pneg %p43
      $region26: #{double_conv_forward.5} parent=23 // pred_check_branch
        %146 = sbr.rel (%p144) target = $region28
      $region27: #{double_conv_forward.5} parent=23 // pred_region
        %s147 = smul.u32 18, %s17
        %p148 = scmp.lt.s32.totalorder %s16, 1
        %s149 = scalar_select %p148, %s16, 1
        %p150 = scmp.lt.s32.totalorder %s147, 35
        %s151 = scalar_select %p150, %s147, 35
        %s152 = smul.addr %s149, 36
        %s153 = sadd.s32 %s151, %s152
        %s154 = smul.addr %s153, 4
        %s155 = scalar_lea.vmem %s0, %s154
        %s156 = smul.u32 18, %s17
      $region28: #{double_conv_forward.5} parent=23 // pred_fallthru
        _
    $region24: #{double_conv_forward.5} parent=5 // pred_fallthru
      _
    %p157 = scmp.le.s32.totalorder 1, %s9
    %p158 = scmp.lt.s32.totalorder %s9, 5
    %p159 = pnand %p157, %p158
    %p160 = pneg %p159
    // Predicated region
    $region29: #{double_conv_forward.5} parent=5 // pred_check
      _
    $region30: #{double_conv_forward.5} parent=5 // pred_check_branch
      %162 = sbr.rel (%p159) target = $region32
    $region31: #{double_conv_forward.5} parent=5 // pred_region
      %s163 = ssub.s32 %s9, 1
      %s164 = smul.u32 18, %s19
      %p165 = scmp.lt.s32.totalorder %s18, 1
      %s166 = scalar_select %p165, %s18, 1
      %p167 = scmp.lt.s32.totalorder %s164, 35
      %s168 = scalar_select %p167, %s164, 35
      %s169 = smul.addr %s166, 36
      %s170 = sadd.s32 %s168, %s169
      %s171 = smul.addr %s170, 4
      %s172 = scalar_lea.vmem %s0, %s171
      %p173 = pneg %p49
      %p174 = pneg %p46
      %p175 = pneg %p70
      %p176 = pneg %p67
      %p177 = pneg %p91
      %p178 = pneg %p88
      %p179 = pneg %p119
      %p180 = pneg %p116
      %s181 = smul.u32 18, %s19
      %p182 = scmp.lt.s32.totalorder %s18, 1
      %s183 = scalar_select %p182, %s18, 1
      %p184 = scmp.lt.s32.totalorder %s181, 35
      %s185 = scalar_select %p184, %s181, 35
      %s186 = smul.addr %s183, 36
      %s187 = sadd.s32 %s185, %s186
      %s188 = smul.addr %s187, 8
      %s189 = scalar_lea.vmem %s3, %s188
      %s190 = smul.u32 18, %s19
      %p191 = scmp.lt.s32.totalorder %s18, 1
      %s192 = scalar_select %p191, %s18, 1
      %p193 = scmp.lt.s32.totalorder %s190, 35
      %s194 = scalar_select %p193, %s190, 35
      %s195 = smul.addr %s192, 36
      %s196 = sadd.s32 %s194, %s195
      %s197 = smul.addr %s196, 4
      %s198 = scalar_lea.vmem %s0, %s197
      %s199 = smul.u32 18, %s19
      %s200 = smul.u32 18, %s19
      %p201 = scmp.lt.s32.totalorder %s18, 1
      %s202 = scalar_select %p201, %s18, 1
      %p203 = scmp.lt.s32.totalorder %s200, 35
      %s204 = scalar_select %p203, %s200, 35
      %s205 = smul.addr %s202, 36
      %s206 = sadd.s32 %s204, %s205
      %s207 = smul.addr %s206, 8
      %s208 = scalar_lea.vmem %s3, %s207
      %s209 = smul.u32 18, %s19
      %v210 = vld [vmem:[%s198] sm:$0xf]
      %v211 = vld [vmem:[%s198 + $0x4] sm:$0xf]
      %v212 = vld [vmem:[%s198 + $0x8] sm:$0xf]
      %v213 = vld [vmem:[%s198 + $0xc] sm:$0xf]
      %v214 = vld [vmem:[%s198 + $0x10] sm:$0xf]
      %v215 = vld [vmem:[%s198 + $0x14] sm:$0xf]
      %v216 = vld [vmem:[%s198 + $0x18] sm:$0xf]
      %v217 = vld [vmem:[%s198 + $0x1c] sm:$0xf]
      %v218 = vld [vmem:[%s198 + $0x20] sm:$0xf]
      %v219 = vld [vmem:[%s198 + $0x24] sm:$0xf]
      %v220 = vld [vmem:[%s198 + $0x28] sm:$0xf]
      %v221 = vld [vmem:[%s198 + $0x2c] sm:$0xf]
      %v222 = vld [vmem:[%s198 + $0x30] sm:$0xf]
      %v223 = vld [vmem:[%s198 + $0x34] sm:$0xf]
      %v224 = vld [vmem:[%s198 + $0x38] sm:$0xf]
      %v225 = vld [vmem:[%s198 + $0x3c] sm:$0xf]
      %v226 = vld [vmem:[%s198 + $0x40] sm:$0xf]
      %v227 = vld [vmem:[%s198 + $0x44] sm:$0xf]
      %v228 = vunpack.c.l.bf16 %v210
      %v229 = vunpack.c.l.bf16 %v211
      %v230 = vunpack.c.l.bf16 %v212
      %v231 = vunpack.c.l.bf16 %v213
      %v232 = vunpack.c.l.bf16 %v214
      %v233 = vunpack.c.l.bf16 %v215
      %v234 = vunpack.c.l.bf16 %v216
      %v235 = vunpack.c.l.bf16 %v217
      %v236 = vunpack.c.l.bf16 %v218
      %v237 = vunpack.c.l.bf16 %v219
      %v238 = vunpack.c.l.bf16 %v220
      %v239 = vunpack.c.l.bf16 %v221
      %v240 = vunpack.c.l.bf16 %v222
      %v241 = vunpack.c.l.bf16 %v223
      %v242 = vunpack.c.l.bf16 %v224
      %v243 = vunpack.c.l.bf16 %v225
      %v244 = vunpack.c.l.bf16 %v226
      %v245 = vunpack.c.l.bf16 %v227
      %v246 = vld [vmem:[%s1] sm:$0x1]
      %v248 = vlaneseq
      %v249 = vshrl.u32 %v248, 7
      %v250 = vsub.s32 0, %v249
      %v251 = vrot.slane %v246, %v250
      %v253 = vmul.f32 %v228, %v251
      %v254 = vmul.f32 %v229, %v251
      %v255 = vmul.f32 %v230, %v251
      %v256 = vmul.f32 %v231, %v251
      %v257 = vmul.f32 %v232, %v251
      %v258 = vmul.f32 %v233, %v251
      %v259 = vmul.f32 %v234, %v251
      %v260 = vmul.f32 %v235, %v251
      %v261 = vmul.f32 %v236, %v251
      %v262 = vmul.f32 %v237, %v251
      %v263 = vmul.f32 %v238, %v251
      %v264 = vmul.f32 %v239, %v251
      %v265 = vmul.f32 %v240, %v251
      %v266 = vmul.f32 %v241, %v251
      %v267 = vmul.f32 %v242, %v251
      %v268 = vmul.f32 %v243, %v251
      %v269 = vmul.f32 %v244, %v251
      %v270 = vmul.f32 %v245, %v251
      %v271 = vld [vmem:[%s2] sm:$0x1]
      %v273 = vlaneseq
      %v274 = vshrl.u32 %v273, 7
      %v275 = vsub.s32 0, %v274
      %v276 = vrot.slane %v271, %v275
      %v278 = vadd.f32 %v253, %v276
      %v279 = vadd.f32 %v254, %v276
      %v280 = vadd.f32 %v255, %v276
      %v281 = vadd.f32 %v256, %v276
      %v282 = vadd.f32 %v257, %v276
      %v283 = vadd.f32 %v258, %v276
      %v284 = vadd.f32 %v259, %v276
      %v285 = vadd.f32 %v260, %v276
      %v286 = vadd.f32 %v261, %v276
      %v287 = vadd.f32 %v262, %v276
      %v288 = vadd.f32 %v263, %v276
      %v289 = vadd.f32 %v264, %v276
      %v290 = vadd.f32 %v265, %v276
      %v291 = vadd.f32 %v266, %v276
      %v292 = vadd.f32 %v267, %v276
      %v293 = vadd.f32 %v268, %v276
      %v294 = vadd.f32 %v269, %v276
      %v295 = vadd.f32 %v270, %v276
      %v296 = vmax.f32 %v278, 0.0
      %v297 = vmax.f32 %v279, 0.0
      %v298 = vmax.f32 %v280, 0.0
      %v299 = vmax.f32 %v281, 0.0
      %v300 = vmax.f32 %v282, 0.0
      %v301 = vmax.f32 %v283, 0.0
      %v302 = vmax.f32 %v284, 0.0
      %v303 = vmax.f32 %v285, 0.0
      %v304 = vmax.f32 %v286, 0.0
      %v305 = vmax.f32 %v287, 0.0
      %v306 = vmax.f32 %v288, 0.0
      %v307 = vmax.f32 %v289, 0.0
      %v308 = vmax.f32 %v290, 0.0
      %v309 = vmax.f32 %v291, 0.0
      %v310 = vmax.f32 %v292, 0.0
      %v311 = vmax.f32 %v293, 0.0
      %v312 = vmax.f32 %v294, 0.0
      %v313 = vmax.f32 %v295, 0.0
      %314 = vst [vmem:[%s208] sm:$0xff] %v296
      %315 = vst [vmem:[%s208 + $0x8] sm:$0xff] %v297
      %316 = vst [vmem:[%s208 + $0x10] sm:$0xff] %v298
      %317 = vst [vmem:[%s208 + $0x18] sm:$0xff] %v299
      %318 = vst [vmem:[%s208 + $0x20] sm:$0xff] %v300
      %319 = vst [vmem:[%s208 + $0x28] sm:$0xff] %v301
      %320 = vst [vmem:[%s208 + $0x30] sm:$0xff] %v302
      %321 = vst [vmem:[%s208 + $0x38] sm:$0xff] %v303
      %322 = vst [vmem:[%s208 + $0x40] sm:$0xff] %v304
      %323 = vst [vmem:[%s208 + $0x48] sm:$0xff] %v305
      %324 = vst [vmem:[%s208 + $0x50] sm:$0xff] %v306
      %325 = vst [vmem:[%s208 + $0x58] sm:$0xff] %v307
      %326 = vst [vmem:[%s208 + $0x60] sm:$0xff] %v308
      %327 = vst [vmem:[%s208 + $0x68] sm:$0xff] %v309
      %328 = vst [vmem:[%s208 + $0x70] sm:$0xff] %v310
      %329 = vst [vmem:[%s208 + $0x78] sm:$0xff] %v311
      %330 = vst [vmem:[%s208 + $0x80] sm:$0xff] %v312
      %331 = vst [vmem:[%s208 + $0x88] sm:$0xff] %v313
      %s332 = smul.u32 18, %s19
      %p333 = scmp.lt.s32.totalorder %s18, 1
      %s334 = scalar_select %p333, %s18, 1
      %p335 = scmp.lt.s32.totalorder %s332, 35
      %s336 = scalar_select %p335, %s332, 35
      %s337 = smul.addr %s334, 36
      %s338 = sadd.s32 %s336, %s337
      %s339 = smul.addr %s338, 8
      %s340 = scalar_lea.vmem %s3, %s339
      // Predicated region
      $region33: #{double_conv_forward.5} parent=31 // pred_check
        %p341 = pneg %p116
      $region34: #{double_conv_forward.5} parent=31 // pred_check_branch
        %343 = sbr.rel (%p341) target = $region36
      $region35: #{double_conv_forward.5} parent=31 // pred_region
        %s344 = smul.u32 18, %s19
      $region36: #{double_conv_forward.5} parent=31 // pred_fallthru
        _
    $region32: #{double_conv_forward.5} parent=5 // pred_fallthru
      _
    %p345 = scmp.le.s32.totalorder 2, %s9
    // Predicated region
    $region37: #{double_conv_forward.5} parent=5 // pred_check
      %p346 = pneg %p345
    $region38: #{double_conv_forward.5} parent=5 // pred_check_branch
      %348 = sbr.rel (%p346) target = $region40
    $region39: #{double_conv_forward.5} parent=5 // pred_region
      %s349 = ssub.s32 %s9, 2
      // Predicated region
      $region41: #{double_conv_forward.5} parent=39 // pred_check
        %p350 = pneg %p122
      $region42: #{double_conv_forward.5} parent=39 // pred_check_branch
        %352 = sbr.rel (%p350) target = $region44
      $region43: #{double_conv_forward.5} parent=39 // pred_region
        %s353 = smul.u32 18, %s21
        %p354 = scmp.lt.s32.totalorder %s20, 1
        %s355 = scalar_select %p354, %s20, 1
        %p356 = scmp.lt.s32.totalorder %s353, 35
        %s357 = scalar_select %p356, %s353, 35
        %s358 = smul.addr %s355, 36
        %s359 = sadd.s32 %s357, %s358
        %s360 = smul.addr %s359, 8
        %s361 = scalar_lea.vmem %s3, %s360
      $region44: #{double_conv_forward.5} parent=39 // pred_fallthru
        _
    $region40: #{double_conv_forward.5} parent=5 // pred_fallthru
      _
  $region6: #{double_conv_forward.5} parent=0 // loop_footer
    %s13 = sadd.s32 1, %s9
  $region7: #{double_conv_forward.5} parent=0 // loop_footer_branch
    %8 = sbr.rel target = $region3
  $region8: #{double_conv_forward.5} parent=0 // loop_exit
    _

// kernel: double_conv_forward.3
$region0: #{double_conv_forward.3}
  #allocation0 [shape = 'u32[]', space=smem, size = 0x4, offset = 0x4, fixed_abs, tag = 'smem constant byte address 0x4 - core index']
  #allocation1 [shape = 'u32[144,128]{1,0:T(1,128)}', space=vmem, size = 0x12000, scoped, tag = 'internal scratch']
  %s0 = inlined_call_operand.vmem [shape: bf16[2,360,8], index: 0, kind: input, shape index: {}, may-alias: {0,1}]
  %s1 = inlined_call_operand.vmem [shape: bf16[2,360,8], index: 1, kind: input, shape index: {}, may-alias: {0,1}]
  %s2 = inlined_call_operand.vmem [shape: bf16[72,128], index: 2, kind: input, shape index: {}]
  %s3 = inlined_call_operand.vmem [shape: f32[1,128], index: 3, kind: input, shape index: {}]
  %s4 = inlined_call_operand.vmem [shape: bf16[2,288,128], index: 4, kind: output, shape index: {0}]
  %s5 = inlined_call_operand.vmem [shape: f32[2,2,8,128], index: 5, kind: output, shape index: {1}]
  %6 = xla_tuple %s4, %s5
  %s7 = sld [smem:[#allocation0]]
  $region57: #{double_conv_forward.3} parent=0
    _
  %s9 = ssub.s32 1, %s7
  %s10 = scalar_select 0, %s9, %s7
  loop: start=0, step=1, limit=6
  $region2: #{double_conv_forward.3} parent=0 // loop_pre_header
    _
  $region3: #{double_conv_forward.3} parent=0 // loop_header
    %s12 = sphi 0, %s16
    %p13 = scmp.ge.s32.totalorder %s12, 6
    %s19 = sphi 0, %s31
    %s20 = sphi 0, %s27
    %s21 = sphi 0, %s19
    %s22 = sphi 0, %s20
    %s23 = sphi 0, %s21
    %s24 = sphi 0, %s22
    %s36 = sphi 0, %s38
    %s39 = sphi 0, %s36
    %s40 = sphi 0, %s39
    %s56 = sphi 0, %s40
    %s68 = sphi 0, %s70
    %s71 = sphi 0, %s68
    %s72 = sphi 0, %s71
    %s88 = sphi 0, %s72
    %s92 = sphi 0, %s92
    %s94 = sphi 0, %s92
    %s95 = sphi 0, %s94
    %s109 = sphi 0, %s95
    %s113 = sphi 0, %s113
    %s115 = sphi 0, %s113
    %s116 = sphi 0, %s115
    %s130 = sphi 0, %s116
    %s138 = sphi 0, %s140
    %s141 = sphi 0, %s138
    %s142 = sphi 0, %s141
    %s158 = sphi 0, %s142
    %s166 = sphi 0, %s168
    %s169 = sphi 0, %s166
    %s170 = sphi 0, %s169
    %s186 = sphi 0, %s170
  $region4: #{double_conv_forward.3} parent=0 // loop_header_branch
    %15 = sbr.rel (%p13) target = $region8
  $region5: #{double_conv_forward.3} parent=0 // loop_body
    %s17 = ssub.s32 %s12, 1
    %s18 = ssub.s32 %s12, 2
    %s25 = sadd.s32 1, %s20
    %p26 = scmp.ge.s32.totalorder %s25, 2
    %s27 = scalar_select %p26, 0, %s25
    %s28 = sadd.s32 1, %s19
    %s29 = scalar_select %p26, %s28, %s19
    %p30 = scmp.ge.s32.totalorder %s29, 2
    %s31 = scalar_select %p30, 0, %s29
    %s32 = ssub.s32 %s19, %s31
    %s33 = ssub.s32 %s20, %s27
    %s34 = sor.u32 %s32, %s33
    %p35 = scmp.eq.s32.totalorder %s34, 0
    %s37 = sadd.s32 %s36, 1
    %s38 = scalar_select %p35, %s36, %s37
    %p41 = pneg %p35
    %p42 = scmp.eq.s32.totalorder %s12, 3
    %p43 = por %p41, %p42
    %p44 = scmp.ne.s32.totalorder %s36, %s39
    %p45 = scmp.eq.s32.totalorder %s12, 0
    %p46 = por %p44, %p45
    %p47 = scmp.ne.s32.totalorder %s36, %s39
    %p48 = scmp.eq.s32.totalorder %s17, 3
    %p49 = por %p47, %p48
    %p50 = scmp.ne.s32.totalorder %s39, %s40
    %p51 = scmp.eq.s32.totalorder %s17, 0
    %p52 = por %p50, %p51
    %p53 = scmp.ne.s32.totalorder %s39, %s40
    %p54 = scmp.eq.s32.totalorder %s18, 3
    %p55 = por %p53, %p54
    %p57 = scmp.ne.s32.totalorder %s40, %s56
    %p58 = scmp.eq.s32.totalorder %s18, 0
    %p59 = por %p57, %p58
    %s60 = sadd.s32 %s20, 1
    %s61 = smul.u32 %s60, 2
    %s62 = sadd.s32 %s27, 1
    %s63 = smul.u32 %s62, 2
    %s64 = ssub.s32 %s19, %s31
    %s65 = ssub.s32 %s61, %s63
    %s66 = sor.u32 %s64, %s65
    %p67 = scmp.eq.s32.totalorder %s66, 0
    %s69 = sadd.s32 %s68, 1
    %s70 = scalar_select %p67, %s68, %s69
    %p73 = pneg %p67
    %p74 = scmp.eq.s32.totalorder %s12, 3
    %p75 = por %p73, %p74
    %p76 = scmp.ne.s32.totalorder %s68, %s71
    %p77 = scmp.eq.s32.totalorder %s12, 0
    %p78 = por %p76, %p77
    %p79 = scmp.ne.s32.totalorder %s68, %s71
    %p80 = scmp.eq.s32.totalorder %s17, 3
    %p81 = por %p79, %p80
    %p82 = scmp.ne.s32.totalorder %s71, %s72
    %p83 = scmp.eq.s32.totalorder %s17, 0
    %p84 = por %p82, %p83
    %p85 = scmp.ne.s32.totalorder %s71, %s72
    %p86 = scmp.eq.s32.totalorder %s18, 3
    %p87 = por %p85, %p86
    %p89 = scmp.ne.s32.totalorder %s72, %s88
    %p90 = scmp.eq.s32.totalorder %s18, 0
    %p91 = por %p89, %p90
    %s93 = sadd.s32 %s92, 1
    %p96 = scmp.eq.s32.totalorder %s12, 3
    %p97 = scmp.ne.s32.totalorder %s92, %s94
    %p98 = scmp.eq.s32.totalorder %s12, 0
    %p99 = por %p97, %p98
    %p100 = scmp.ne.s32.totalorder %s92, %s94
    %p101 = scmp.eq.s32.totalorder %s17, 3
    %p102 = por %p100, %p101
    %p103 = scmp.ne.s32.totalorder %s94, %s95
    %p104 = scmp.eq.s32.totalorder %s17, 0
    %p105 = por %p103, %p104
    %p106 = scmp.ne.s32.totalorder %s94, %s95
    %p107 = scmp.eq.s32.totalorder %s18, 3
    %p108 = por %p106, %p107
    %p110 = scmp.ne.s32.totalorder %s95, %s109
    %p111 = scmp.eq.s32.totalorder %s18, 0
    %p112 = por %p110, %p111
    %s114 = sadd.s32 %s113, 1
    %p117 = scmp.eq.s32.totalorder %s12, 3
    %p118 = scmp.ne.s32.totalorder %s113, %s115
    %p119 = scmp.eq.s32.totalorder %s12, 0
    %p120 = por %p118, %p119
    %p121 = scmp.ne.s32.totalorder %s113, %s115
    %p122 = scmp.eq.s32.totalorder %s17, 3
    %p123 = por %p121, %p122
    %p124 = scmp.ne.s32.totalorder %s115, %s116
    %p125 = scmp.eq.s32.totalorder %s17, 0
    %p126 = por %p124, %p125
    %p127 = scmp.ne.s32.totalorder %s115, %s116
    %p128 = scmp.eq.s32.totalorder %s18, 3
    %p129 = por %p127, %p128
    %p131 = scmp.ne.s32.totalorder %s116, %s130
    %p132 = scmp.eq.s32.totalorder %s18, 0
    %p133 = por %p131, %p132
    %s134 = ssub.s32 %s19, %s31
    %s135 = ssub.s32 %s20, %s27
    %s136 = sor.u32 %s134, %s135
    %p137 = scmp.eq.s32.totalorder %s136, 0
    %s139 = sadd.s32 %s138, 1
    %s140 = scalar_select %p137, %s138, %s139
    %p143 = pneg %p137
    %p144 = scmp.eq.s32.totalorder %s12, 3
    %p145 = por %p143, %p144
    %p146 = scmp.ne.s32.totalorder %s138, %s141
    %p147 = scmp.eq.s32.totalorder %s12, 0
    %p148 = por %p146, %p147
    %p149 = scmp.ne.s32.totalorder %s138, %s141
    %p150 = scmp.eq.s32.totalorder %s17, 3
    %p151 = por %p149, %p150
    %p152 = scmp.ne.s32.totalorder %s141, %s142
    %p153 = scmp.eq.s32.totalorder %s17, 0
    %p154 = por %p152, %p153
    %p155 = scmp.ne.s32.totalorder %s141, %s142
    %p156 = scmp.eq.s32.totalorder %s18, 3
    %p157 = por %p155, %p156
    %p159 = scmp.ne.s32.totalorder %s142, %s158
    %p160 = scmp.eq.s32.totalorder %s18, 0
    %p161 = por %p159, %p160
    %s162 = ssub.s32 %s19, %s31
    %s163 = ssub.s32 %s20, %s27
    %s164 = sor.u32 %s162, %s163
    %p165 = scmp.eq.s32.totalorder %s164, 0
    %s167 = sadd.s32 %s166, 1
    %s168 = scalar_select %p165, %s166, %s167
    %p171 = pneg %p165
    %p172 = scmp.eq.s32.totalorder %s12, 3
    %p173 = por %p171, %p172
    %p174 = scmp.ne.s32.totalorder %s166, %s169
    %p175 = scmp.eq.s32.totalorder %s12, 0
    %p176 = por %p174, %p175
    %p177 = scmp.ne.s32.totalorder %s166, %s169
    %p178 = scmp.eq.s32.totalorder %s17, 3
    %p179 = por %p177, %p178
    %p180 = scmp.ne.s32.totalorder %s169, %s170
    %p181 = scmp.eq.s32.totalorder %s17, 0
    %p182 = por %p180, %p181
    %p183 = scmp.ne.s32.totalorder %s169, %s170
    %p184 = scmp.eq.s32.totalorder %s18, 3
    %p185 = por %p183, %p184
    %p187 = scmp.ne.s32.totalorder %s170, %s186
    %p188 = scmp.eq.s32.totalorder %s18, 0
    %p189 = por %p187, %p188
    %p190 = scmp.le.s32.totalorder 1, %s12
    %p191 = scmp.lt.s32.totalorder %s12, 5
    %p192 = pnand %p190, %p191
    %p193 = pneg %p192
    // Predicated region
    $region9: #{double_conv_forward.3} parent=5 // pred_check
      _
    $region10: #{double_conv_forward.3} parent=5 // pred_check_branch
      %195 = sbr.rel (%p192) target = $region12
    $region11: #{double_conv_forward.3} parent=5 // pred_region
      %s196 = ssub.s32 %s12, 1
      // Predicated region
      $region13: #{double_conv_forward.3} parent=11 // pred_check
        %p197 = pneg %p105
      $region14: #{double_conv_forward.3} parent=11 // pred_check_branch
        %199 = sbr.rel (%p197) target = $region16
      $region15: #{double_conv_forward.3} parent=11 // pred_region
        _
      $region16: #{double_conv_forward.3} parent=11 // pred_fallthru
        _
      // Predicated region
      $region17: #{double_conv_forward.3} parent=11 // pred_check
        %p200 = pneg %p126
      $region18: #{double_conv_forward.3} parent=11 // pred_check_branch
        %202 = sbr.rel (%p200) target = $region20
      $region19: #{double_conv_forward.3} parent=11 // pred_region
        _
      $region20: #{double_conv_forward.3} parent=11 // pred_fallthru
        _
    $region12: #{double_conv_forward.3} parent=5 // pred_fallthru
      _
    %p203 = scmp.lt.s32.totalorder %s12, 4
    // Predicated region
    $region21: #{double_conv_forward.3} parent=5 // pred_check
      %p204 = pneg %p203
    $region22: #{double_conv_forward.3} parent=5 // pred_check_branch
      %206 = sbr.rel (%p204) target = $region24
    $region23: #{double_conv_forward.3} parent=5 // pred_region
      // Predicated region
      $region25: #{double_conv_forward.3} parent=23 // pred_check
        %p207 = pneg %p46
      $region26: #{double_conv_forward.3} parent=23 // pred_check_branch
        %209 = sbr.rel (%p207) target = $region28
      $region27: #{double_conv_forward.3} parent=23 // pred_region
        %s210 = smul.u32 18, %s20
        %s211 = ssub.s32 45, %s210
        %p212 = scmp.lt.s32.totalorder %s211, 18
        %s213 = scalar_select %p212, %s211, 18
        %s214 = smul.u32 64, %s213
        %p215 = scmp.lt.s32.totalorder %s19, 1
        %s216 = scalar_select %p215, %s19, 1
        %p217 = scmp.lt.s32.totalorder %s210, 44
        %s218 = scalar_select %p217, %s210, 44
        %s219 = smul.addr %s216, 45
        %s220 = sadd.s32 %s218, %s219
        %s221 = smul.addr %s220, 4
        %s222 = scalar_lea.vmem %s0, %s221
        %s223 = smul.u32 18, %s20
        %s224 = ssub.s32 45, %s223
        %p225 = scmp.lt.s32.totalorder %s224, 18
        %s226 = scalar_select %p225, %s224, 18
        %s227 = smul.u32 64, %s226
      $region28: #{double_conv_forward.3} parent=23 // pred_fallthru
        _
      // Predicated region
      $region29: #{double_conv_forward.3} parent=23 // pred_check
        %p228 = pneg %p78
      $region30: #{double_conv_forward.3} parent=23 // pred_check_branch
        %230 = sbr.rel (%p228) target = $region32
      $region31: #{double_conv_forward.3} parent=23 // pred_region
        %s231 = sadd.s32 %s20, 1
        %s232 = smul.u32 %s231, 2
        %s233 = smul.u32 9, %s232
        %p234 = scmp.lt.s32.totalorder %s19, 1
        %s235 = scalar_select %p234, %s19, 1
        %p236 = scmp.lt.s32.totalorder %s233, 44
        %s237 = scalar_select %p236, %s233, 44
        %s238 = smul.addr %s235, 45
        %s239 = sadd.s32 %s237, %s238
        %s240 = smul.addr %s239, 4
        %s241 = scalar_lea.vmem %s1, %s240
        %s242 = sadd.s32 %s20, 1
        %s243 = smul.u32 %s242, 2
        %s244 = smul.u32 9, %s243
      $region32: #{double_conv_forward.3} parent=23 // pred_fallthru
        _
    $region24: #{double_conv_forward.3} parent=5 // pred_fallthru
      _
    %p245 = scmp.le.s32.totalorder 1, %s12
    %p246 = scmp.lt.s32.totalorder %s12, 5
    %p247 = pnand %p245, %p246
    %p248 = pneg %p247
    // Predicated region
    $region33: #{double_conv_forward.3} parent=5 // pred_check
      _
    $region34: #{double_conv_forward.3} parent=5 // pred_check_branch
      %250 = sbr.rel (%p247) target = $region36
    $region35: #{double_conv_forward.3} parent=5 // pred_region
      %s251 = ssub.s32 %s12, 1
      %s252 = smul.u32 18, %s22
      %s253 = ssub.s32 45, %s252
      %p254 = scmp.lt.s32.totalorder %s253, 18
      %s255 = scalar_select %p254, %s253, 18
      %s256 = smul.u32 64, %s255
      %p257 = scmp.lt.s32.totalorder %s21, 1
      %s258 = scalar_select %p257, %s21, 1
      %p259 = scmp.lt.s32.totalorder %s252, 44
      %s260 = scalar_select %p259, %s252, 44
      %s261 = smul.addr %s258, 45
      %s262 = sadd.s32 %s260, %s261
      %s263 = smul.addr %s262, 4
      %s264 = scalar_lea.vmem %s0, %s263
      %p265 = pneg %p52
      %p266 = pneg %p49
      %s267 = sadd.s32 %s22, 1
      %s268 = smul.u32 %s267, 2
      %s269 = smul.u32 9, %s268
      %p270 = scmp.lt.s32.totalorder %s21, 1
      %s271 = scalar_select %p270, %s21, 1
      %p272 = scmp.lt.s32.totalorder %s269, 44
      %s273 = scalar_select %p272, %s269, 44
      %s274 = smul.addr %s271, 45
      %s275 = sadd.s32 %s273, %s274
      %s276 = smul.addr %s275, 4
      %s277 = scalar_lea.vmem %s1, %s276
      %p278 = pneg %p84
      %p279 = pneg %p81
      %p280 = pneg %p105
      %p281 = pneg %p102
      %p282 = pneg %p126
      %p283 = pneg %p123
      %p284 = pneg %p154
      %p285 = pneg %p151
      %s286 = smul.u32 18, %s22
      %p287 = scmp.lt.s32.totalorder %s21, 1
      %s288 = scalar_select %p287, %s21, 1
      %p289 = scmp.lt.s32.totalorder %s286, 35
      %s290 = scalar_select %p289, %s286, 35
      %s291 = smul.addr %s288, 36
      %s292 = sadd.s32 %s290, %s291
      %s293 = smul.addr %s292, 4
      %s294 = scalar_lea.vmem %s4, %s293
      %p295 = pneg %p182
      %p296 = pneg %p179
      %p297 = scmp.lt.s32.totalorder %s21, 1
      %s298 = scalar_select %p297, %s21, 1
      %p299 = scmp.lt.s32.totalorder %s22, 1
      %s300 = scalar_select %p299, %s22, 1
      %s301 = smul.addr %s298, 2
      %s302 = sadd.s32 %s300, %s301
      %s303 = smul.addr %s302, 8
      %s304 = scalar_lea.vmem %s5, %s303
      %s305 = smul.u32 18, %s22
      %s306 = ssub.s32 45, %s305
      %p307 = scmp.lt.s32.totalorder %s306, 18
      %s308 = scalar_select %p307, %s306, 18
      %s309 = smul.u32 64, %s308
      %p310 = scmp.lt.s32.totalorder %s21, 1
      %s311 = scalar_select %p310, %s21, 1
      %p312 = scmp.lt.s32.totalorder %s305, 44
      %s313 = scalar_select %p312, %s305, 44
      %s314 = smul.addr %s311, 45
      %s315 = sadd.s32 %s313, %s314
      %s316 = smul.addr %s315, 4
      %s317 = scalar_lea.vmem %s0, %s316
      %s318 = smul.u32 18, %s22
      %s319 = ssub.s32 45, %s318
      %p320 = scmp.lt.s32.totalorder %s319, 18
      %s321 = scalar_select %p320, %s319, 18
      %s322 = smul.u32 64, %s321
      %s323 = sadd.s32 %s22, 1
      %s324 = smul.u32 %s323, 2
      %s325 = smul.u32 9, %s324
      %p326 = scmp.lt.s32.totalorder %s21, 1
      %s327 = scalar_select %p326, %s21, 1
      %p328 = scmp.lt.s32.totalorder %s325, 44
      %s329 = scalar_select %p328, %s325, 44
      %s330 = smul.addr %s327, 45
      %s331 = sadd.s32 %s329, %s330
      %s332 = smul.addr %s331, 4
      %s333 = scalar_lea.vmem %s1, %s332
      %s334 = sadd.s32 %s22, 1
      %s335 = smul.u32 %s334, 2
      %s336 = smul.u32 9, %s335
      %s337 = smul.u32 18, %s22
      %p338 = scmp.lt.s32.totalorder %s21, 1
      %s339 = scalar_select %p338, %s21, 1
      %p340 = scmp.lt.s32.totalorder %s337, 35
      %s341 = scalar_select %p340, %s337, 35
      %s342 = smul.addr %s339, 36
      %s343 = sadd.s32 %s341, %s342
      %s344 = smul.addr %s343, 4
      %s345 = scalar_lea.vmem %s4, %s344
      %s346 = smul.u32 18, %s22
      %p347 = scmp.lt.s32.totalorder %s21, 1
      %s348 = scalar_select %p347, %s21, 1
      %p349 = scmp.lt.s32.totalorder %s22, 1
      %s350 = scalar_select %p349, %s22, 1
      %s351 = smul.addr %s348, 2
      %s352 = sadd.s32 %s350, %s351
      %s353 = smul.addr %s352, 8
      %s354 = scalar_lea.vmem %s5, %s353
      %v356 = vld [vmem:[%s317] sm:$0xf]
      %v357 = vld [vmem:[%s317 + $0x4] sm:$0xf]
      %v358 = vld [vmem:[%s317 + $0x8] sm:$0xf]
      %v359 = vld [vmem:[%s317 + $0xc] sm:$0xf]
      %v360 = vld [vmem:[%s317 + $0x10] sm:$0xf]
      %v361 = vld [vmem:[%s317 + $0x14] sm:$0xf]
      %v362 = vld [vmem:[%s317 + $0x18] sm:$0xf]
      %v363 = vld [vmem:[%s317 + $0x1c] sm:$0xf]
      %v364 = vld [vmem:[%s317 + $0x20] sm:$0xf]
      %v365 = vld [vmem:[%s317 + $0x24] sm:$0xf]
      %v366 = vld [vmem:[%s317 + $0x28] sm:$0xf]
      %v367 = vld [vmem:[%s317 + $0x2c] sm:$0xf]
      %v368 = vld [vmem:[%s317 + $0x30] sm:$0xf]
      %v369 = vld [vmem:[%s317 + $0x34] sm:$0xf]
      %v370 = vld [vmem:[%s317 + $0x38] sm:$0xf]
      %v371 = vld [vmem:[%s317 + $0x3c] sm:$0xf]
      %v372 = vld [vmem:[%s317 + $0x40] sm:$0xf]
      %v373 = vld [vmem:[%s317 + $0x44] sm:$0xf]
      %v374 = vld [vmem:[%s333] sm:$0xf]
      %v375 = vld [vmem:[%s333 + $0x4] sm:$0xf]
      %v376 = vld [vmem:[%s333 + $0x8] sm:$0xf]
      %v377 = vld [vmem:[%s333 + $0xc] sm:$0xf]
      %v378 = vld [vmem:[%s333 + $0x10] sm:$0xf]
      %v379 = vld [vmem:[%s333 + $0x14] sm:$0xf]
      %v398 = vunpack.c.l.b16 %v356
      %v399 = vunpack.c.l.b16 %v357
      %v400 = vunpack.c.l.b16 %v358
      %v401 = vunpack.c.l.b16 %v359
      %v402 = vunpack.c.l.b16 %v360
      %v403 = vunpack.c.l.b16 %v361
      %v404 = vunpack.c.l.b16 %v362
      %v405 = vunpack.c.l.b16 %v363
      %v406 = vunpack.c.l.b16 %v364
      %v407 = vunpack.c.l.b16 %v365
      %v408 = vunpack.c.l.b16 %v366
      %v409 = vunpack.c.l.b16 %v367
      %v410 = vunpack.c.l.b16 %v368
      %v411 = vunpack.c.l.b16 %v369
      %v412 = vunpack.c.l.b16 %v370
      %v413 = vunpack.c.l.b16 %v371
      %v414 = vunpack.c.l.b16 %v372
      %v415 = vunpack.c.l.b16 %v373
      %v416 = vpack.c.b16 %v399, %v398
      %v417 = vpack.c.b16 %v401, %v400
      %v418 = vpack.c.b16 %v403, %v402
      %v419 = vpack.c.b16 %v405, %v404
      %v420 = vpack.c.b16 %v407, %v406
      %v421 = vpack.c.b16 %v409, %v408
      %v422 = vpack.c.b16 %v411, %v410
      %v423 = vpack.c.b16 %v413, %v412
      %v424 = vpack.c.b16 %v415, %v414
      %vm425 = vsmask.f32 256
      %v427 = vshrl.u32 %v416, 16
      %v429 = vrot.slane %v427, 7
      %v430 = vshll.u32 %v416, 16
      %v432 = vor.u32 %v429, %v430
      %v434 = vshrl.u32 %v417, 16
      %v436 = vrot.slane %v434, 7
      %v437 = vshll.u32 %v417, 16
      %v439 = vor.u32 %v436, %v437
      %v440 = vsel %vm425, %v429, %v439
      %v442 = vshrl.u32 %v418, 16
      %v444 = vrot.slane %v442, 7
      %v445 = vshll.u32 %v418, 16
      %v447 = vor.u32 %v444, %v445
      %v448 = vsel %vm425, %v436, %v447
      %v450 = vshrl.u32 %v419, 16
      %v452 = vrot.slane %v450, 7
      %v453 = vshll.u32 %v419, 16
      %v455 = vor.u32 %v452, %v453
      %v456 = vsel %vm425, %v444, %v455
      %v458 = vshrl.u32 %v420, 16
      %v460 = vrot.slane %v458, 7
      %v461 = vshll.u32 %v420, 16
      %v463 = vor.u32 %v460, %v461
      %v464 = vsel %vm425, %v452, %v463
      %v466 = vshrl.u32 %v421, 16
      %v468 = vrot.slane %v466, 7
      %v469 = vshll.u32 %v421, 16
      %v471 = vor.u32 %v468, %v469
      %v472 = vsel %vm425, %v460, %v471
      %v474 = vshrl.u32 %v422, 16
      %v476 = vrot.slane %v474, 7
      %v477 = vshll.u32 %v422, 16
      %v479 = vor.u32 %v476, %v477
      %v480 = vsel %vm425, %v468, %v479
      %v482 = vshrl.u32 %v423, 16
      %v484 = vrot.slane %v482, 7
      %v485 = vshll.u32 %v423, 16
      %v487 = vor.u32 %v484, %v485
      %v488 = vsel %vm425, %v476, %v487
      %v490 = vshrl.u32 %v424, 16
      %v492 = vrot.slane %v490, 7
      %v493 = vshll.u32 %v424, 16
      %v495 = vor.u32 %v492, %v493
      %v496 = vsel %vm425, %v484, %v495
      %v505 = vunpack.c.l.b16 %v374
      %v506 = vunpack.c.l.b16 %v375
      %v507 = vunpack.c.l.b16 %v376
      %v508 = vunpack.c.l.b16 %v377
      %v509 = vunpack.c.l.b16 %v378
      %v510 = vunpack.c.l.b16 %v379
      %v511 = vpack.c.b16 %v506, %v505
      %v512 = vpack.c.b16 %v508, %v507
      %v513 = vpack.c.b16 %v510, %v509
      %v515 = vshrl.u32 %v511, 16
      %v517 = vrot.slane %v515, 7
      %v518 = vshll.u32 %v511, 16
      %v520 = vor.u32 %v517, %v518
      %v522 = vshrl.u32 %v512, 16
      %v524 = vrot.slane %v522, 7
      %v525 = vshll.u32 %v512, 16
      %v527 = vor.u32 %v524, %v525
      %v528 = vsel %vm425, %v517, %v527
      %v530 = vshrl.u32 %v513, 16
      %v532 = vrot.slane %v530, 7
      %v533 = vshll.u32 %v513, 16
      %v535 = vor.u32 %v532, %v533
      %v536 = vsel %vm425, %v524, %v535
      %vm538 = vcmask 1040384
      %vm539 = vmand %vm538, %vm425
      %v540 = vsel %vm539, 0, %v432
      %v541 = vsel %vm539, %v492, %v520
      %vm542 = vsmask.f32 7424
      %v544 = vshrl.u32 %v540, 16
      %v546 = vshll.u32 %v540, 16
      %v548 = vrot.slane %v546, 1
      %v549 = vor.u32 %v544, %v548
      %v551 = vshll.u32 %v440, 16
      %v553 = vrot.slane %v551, 1
      %v554 = vsel %vm542, %v549, %v553
      %v555 = vshrl.u32 %v440, 16
      %v557 = vor.u32 %v555, %v553
      %v559 = vshll.u32 %v448, 16
      %v561 = vrot.slane %v559, 1
      %v562 = vsel %vm542, %v557, %v561
      %v563 = vshrl.u32 %v448, 16
      %v565 = vor.u32 %v563, %v561
      %v567 = vshll.u32 %v456, 16
      %v569 = vrot.slane %v567, 1
      %v570 = vsel %vm542, %v565, %v569
      %v571 = vshrl.u32 %v456, 16
      %v573 = vor.u32 %v571, %v569
      %v575 = vshll.u32 %v464, 16
      %v577 = vrot.slane %v575, 1
      %v578 = vsel %vm542, %v573, %v577
      %v579 = vshrl.u32 %v464, 16
      %v581 = vor.u32 %v579, %v577
      %v583 = vshll.u32 %v472, 16
      %v585 = vrot.slane %v583, 1
      %v586 = vsel %vm542, %v581, %v585
      %v587 = vshrl.u32 %v472, 16
      %v589 = vor.u32 %v587, %v585
      %v591 = vshll.u32 %v480, 16
      %v593 = vrot.slane %v591, 1
      %v594 = vsel %vm542, %v589, %v593
      %v595 = vshrl.u32 %v480, 16
      %v597 = vor.u32 %v595, %v593
      %v599 = vshll.u32 %v488, 16
      %v601 = vrot.slane %v599, 1
      %v602 = vsel %vm542, %v597, %v601
      %v603 = vshrl.u32 %v488, 16
      %v605 = vor.u32 %v603, %v601
      %v607 = vshll.u32 %v496, 16
      %v609 = vrot.slane %v607, 1
      %v610 = vsel %vm542, %v605, %v609
      %v611 = vshrl.u32 %v496, 16
      %v613 = vor.u32 %v611, %v609
      %v615 = vshll.u32 %v541, 16
      %v617 = vrot.slane %v615, 1
      %v618 = vsel %vm542, %v613, %v617
      %619 = vrot.lane.b32.xlu0 %v554, 8
      %v620 = vpop.permute.xlu0 %619
      %621 = vrot.lane.b32.xlu0 %v562, 8
      %v622 = vpop.permute.xlu0 %621
      %623 = vrot.lane.b32.xlu0 %v570, 8
      %v624 = vpop.permute.xlu0 %623
      %625 = vrot.lane.b32.xlu0 %v578, 8
      %v626 = vpop.permute.xlu0 %625
      %627 = vrot.lane.b32.xlu0 %v586, 8
      %v628 = vpop.permute.xlu0 %627
      %629 = vrot.lane.b32.xlu0 %v594, 8
      %v630 = vpop.permute.xlu0 %629
      %631 = vrot.lane.b32.xlu0 %v602, 8
      %v632 = vpop.permute.xlu0 %631
      %633 = vrot.lane.b32.xlu0 %v610, 8
      %v634 = vpop.permute.xlu0 %633
      %635 = vrot.lane.b32.xlu0 %v618, 8
      %v636 = vpop.permute.xlu0 %635
      %vm639 = vcmask 1046528
      %v640 = vrot.slane %v540, 1
      %v641 = vrot.slane %v440, 1
      %v642 = vsel %vm639, %v640, %v641
      %v643 = vrot.slane %v448, 1
      %v644 = vsel %vm639, %v641, %v643
      %v645 = vrot.slane %v456, 1
      %v646 = vsel %vm639, %v643, %v645
      %v647 = vrot.slane %v464, 1
      %v648 = vsel %vm639, %v645, %v647
      %v649 = vrot.slane %v472, 1
      %v650 = vsel %vm639, %v647, %v649
      %v651 = vrot.slane %v480, 1
      %v652 = vsel %vm639, %v649, %v651
      %v653 = vrot.slane %v488, 1
      %v654 = vsel %vm639, %v651, %v653
      %v655 = vrot.slane %v496, 1
      %v656 = vsel %vm639, %v653, %v655
      %v657 = vrot.slane %v541, 1
      %v658 = vsel %vm639, %v655, %v657
      %659 = vrot.lane.b32.xlu0 %v642, 16
      %v660 = vpop.permute.xlu0 %659
      %661 = vrot.lane.b32.xlu0 %v644, 16
      %v662 = vpop.permute.xlu0 %661
      %663 = vrot.lane.b32.xlu0 %v646, 16
      %v664 = vpop.permute.xlu0 %663
      %665 = vrot.lane.b32.xlu0 %v648, 16
      %v666 = vpop.permute.xlu0 %665
      %667 = vrot.lane.b32.xlu0 %v650, 16
      %v668 = vpop.permute.xlu0 %667
      %669 = vrot.lane.b32.xlu0 %v652, 16
      %v670 = vpop.permute.xlu0 %669
      %671 = vrot.lane.b32.xlu0 %v654, 16
      %v672 = vpop.permute.xlu0 %671
      %673 = vrot.lane.b32.xlu0 %v656, 16
      %v674 = vpop.permute.xlu0 %673
      %675 = vrot.lane.b32.xlu0 %v658, 16
      %v676 = vpop.permute.xlu0 %675
      %v677 = vrot.slane %v528, 1
      %v678 = vsel %vm639, %v657, %v677
      %679 = vrot.lane.b32.xlu0 %v644, 24
      %v680 = vpop.permute.xlu0 %679
      %681 = vrot.lane.b32.xlu0 %v646, 24
      %v682 = vpop.permute.xlu0 %681
      %683 = vrot.lane.b32.xlu0 %v648, 24
      %v684 = vpop.permute.xlu0 %683
      %685 = vrot.lane.b32.xlu0 %v650, 24
      %v686 = vpop.permute.xlu0 %685
      %687 = vrot.lane.b32.xlu0 %v652, 24
      %v688 = vpop.permute.xlu0 %687
      %689 = vrot.lane.b32.xlu0 %v654, 24
      %v690 = vpop.permute.xlu0 %689
      %691 = vrot.lane.b32.xlu0 %v656, 24
      %v692 = vpop.permute.xlu0 %691
      %693 = vrot.lane.b32.xlu0 %v658, 24
      %v694 = vpop.permute.xlu0 %693
      %695 = vrot.lane.b32.xlu0 %v678, 24
      %v696 = vpop.permute.xlu0 %695
      %vm697 = vsmask.f32 6400
      %v698 = vrot.slane %v555, 1
      %v699 = vrot.slane %v551, 2
      %v700 = vor.u32 %v698, %v699
      %v701 = vrot.slane %v563, 1
      %v702 = vrot.slane %v559, 2
      %v703 = vor.u32 %v701, %v702
      %v704 = vsel %vm697, %v700, %v703
      %v705 = vrot.slane %v571, 1
      %v706 = vrot.slane %v567, 2
      %v707 = vor.u32 %v705, %v706
      %v708 = vsel %vm697, %v703, %v707
      %v709 = vrot.slane %v579, 1
      %v710 = vrot.slane %v575, 2
      %v711 = vor.u32 %v709, %v710
      %v712 = vsel %vm697, %v707, %v711
      %v713 = vrot.slane %v587, 1
      %v714 = vrot.slane %v583, 2
      %v715 = vor.u32 %v713, %v714
      %v716 = vsel %vm697, %v711, %v715
      %v717 = vrot.slane %v595, 1
      %v718 = vrot.slane %v591, 2
      %v719 = vor.u32 %v717, %v718
      %v720 = vsel %vm697, %v715, %v719
      %v721 = vrot.slane %v603, 1
      %v722 = vrot.slane %v599, 2
      %v723 = vor.u32 %v721, %v722
      %v724 = vsel %vm697, %v719, %v723
      %v725 = vrot.slane %v611, 1
      %v726 = vrot.slane %v607, 2
      %v727 = vor.u32 %v725, %v726
      %v728 = vsel %vm697, %v723, %v727
      %v729 = vshrl.u32 %v541, 16
      %v731 = vrot.slane %v729, 1
      %v732 = vrot.slane %v615, 2
      %v733 = vor.u32 %v731, %v732
      %v734 = vsel %vm697, %v727, %v733
      %v736 = vshrl.u32 %v528, 16
      %v738 = vrot.slane %v736, 1
      %v739 = vshll.u32 %v528, 16
      %v741 = vrot.slane %v739, 2
      %v742 = vor.u32 %v738, %v741
      %v743 = vsel %vm697, %v733, %v742
      %744 = vrot.lane.b32.xlu0 %v704, 32
      %v745 = vpop.permute.xlu0 %744
      %746 = vrot.lane.b32.xlu0 %v708, 32
      %v747 = vpop.permute.xlu0 %746
      %748 = vrot.lane.b32.xlu0 %v712, 32
      %v749 = vpop.permute.xlu0 %748
      %750 = vrot.lane.b32.xlu0 %v716, 32
      %v751 = vpop.permute.xlu0 %750
      %752 = vrot.lane.b32.xlu0 %v720, 32
      %v753 = vpop.permute.xlu0 %752
      %754 = vrot.lane.b32.xlu0 %v724, 32
      %v755 = vpop.permute.xlu0 %754
      %756 = vrot.lane.b32.xlu0 %v728, 32
      %v757 = vpop.permute.xlu0 %756
      %758 = vrot.lane.b32.xlu0 %v734, 32
      %v759 = vpop.permute.xlu0 %758
      %760 = vrot.lane.b32.xlu0 %v743, 32
      %v761 = vpop.permute.xlu0 %760
      %vm762 = vcmask 1045504
      %v763 = vrot.slane %v440, 2
      %v764 = vrot.slane %v448, 2
      %v765 = vsel %vm762, %v763, %v764
      %v766 = vrot.slane %v456, 2
      %v767 = vsel %vm762, %v764, %v766
      %v768 = vrot.slane %v464, 2
      %v769 = vsel %vm762, %v766, %v768
      %v770 = vrot.slane %v472, 2
      %v771 = vsel %vm762, %v768, %v770
      %v772 = vrot.slane %v480, 2
      %v773 = vsel %vm762, %v770, %v772
      %v774 = vrot.slane %v488, 2
      %v775 = vsel %vm762, %v772, %v774
      %v776 = vrot.slane %v496, 2
      %v777 = vsel %vm762, %v774, %v776
      %v778 = vrot.slane %v541, 2
      %v779 = vsel %vm762, %v776, %v778
      %v780 = vrot.slane %v528, 2
      %v781 = vsel %vm762, %v778, %v780
      %782 = vrot.lane.b32.xlu0 %v765, 40
      %v783 = vpop.permute.xlu0 %782
      %784 = vrot.lane.b32.xlu0 %v767, 40
      %v785 = vpop.permute.xlu0 %784
      %786 = vrot.lane.b32.xlu0 %v769, 40
      %v787 = vpop.permute.xlu0 %786
      %788 = vrot.lane.b32.xlu0 %v771, 40
      %v789 = vpop.permute.xlu0 %788
      %790 = vrot.lane.b32.xlu0 %v773, 40
      %v791 = vpop.permute.xlu0 %790
      %792 = vrot.lane.b32.xlu0 %v775, 40
      %v793 = vpop.permute.xlu0 %792
      %794 = vrot.lane.b32.xlu0 %v777, 40
      %v795 = vpop.permute.xlu0 %794
      %796 = vrot.lane.b32.xlu0 %v779, 40
      %v797 = vpop.permute.xlu0 %796
      %798 = vrot.lane.b32.xlu0 %v781, 40
      %v799 = vpop.permute.xlu0 %798
      %v800 = vrot.slane %v536, 2
      %v801 = vsel %vm762, %v780, %v800
      %802 = vrot.lane.b32.xlu0 %v767, 48
      %v803 = vpop.permute.xlu0 %802
      %804 = vrot.lane.b32.xlu0 %v769, 48
      %v805 = vpop.permute.xlu0 %804
      %806 = vrot.lane.b32.xlu0 %v771, 48
      %v807 = vpop.permute.xlu0 %806
      %808 = vrot.lane.b32.xlu0 %v773, 48
      %v809 = vpop.permute.xlu0 %808
      %810 = vrot.lane.b32.xlu0 %v775, 48
      %v811 = vpop.permute.xlu0 %810
      %812 = vrot.lane.b32.xlu0 %v777, 48
      %v813 = vpop.permute.xlu0 %812
      %814 = vrot.lane.b32.xlu0 %v779, 48
      %v815 = vpop.permute.xlu0 %814
      %816 = vrot.lane.b32.xlu0 %v781, 48
      %v817 = vpop.permute.xlu0 %816
      %818 = vrot.lane.b32.xlu0 %v801, 48
      %v819 = vpop.permute.xlu0 %818
      %vm820 = vsmask.f32 5376
      %v821 = vrot.slane %v563, 2
      %v822 = vrot.slane %v559, 3
      %v823 = vor.u32 %v821, %v822
      %v824 = vrot.slane %v571, 2
      %v825 = vrot.slane %v567, 3
      %v826 = vor.u32 %v824, %v825
      %v827 = vsel %vm820, %v823, %v826
      %v828 = vrot.slane %v579, 2
      %v829 = vrot.slane %v575, 3
      %v830 = vor.u32 %v828, %v829
      %v831 = vsel %vm820, %v826, %v830
      %v832 = vrot.slane %v587, 2
      %v833 = vrot.slane %v583, 3
      %v834 = vor.u32 %v832, %v833
      %v835 = vsel %vm820, %v830, %v834
      %v836 = vrot.slane %v595, 2
      %v837 = vrot.slane %v591, 3
      %v838 = vor.u32 %v836, %v837
      %v839 = vsel %vm820, %v834, %v838
      %v840 = vrot.slane %v603, 2
      %v841 = vrot.slane %v599, 3
      %v842 = vor.u32 %v840, %v841
      %v843 = vsel %vm820, %v838, %v842
      %v844 = vrot.slane %v611, 2
      %v845 = vrot.slane %v607, 3
      %v846 = vor.u32 %v844, %v845
      %v847 = vsel %vm820, %v842, %v846
      %v848 = vrot.slane %v729, 2
      %v849 = vrot.slane %v615, 3
      %v850 = vor.u32 %v848, %v849
      %v851 = vsel %vm820, %v846, %v850
      %v852 = vrot.slane %v736, 2
      %v853 = vrot.slane %v739, 3
      %v854 = vor.u32 %v852, %v853
      %v855 = vsel %vm820, %v850, %v854
      %v857 = vshrl.u32 %v536, 16
      %v859 = vrot.slane %v857, 2
      %v860 = vshll.u32 %v536, 16
      %v862 = vrot.slane %v860, 3
      %v863 = vor.u32 %v859, %v862
      %v864 = vsel %vm820, %v854, %v863
      %865 = vrot.lane.b32.xlu0 %v827, 56
      %v866 = vpop.permute.xlu0 %865
      %867 = vrot.lane.b32.xlu0 %v831, 56
      %v868 = vpop.permute.xlu0 %867
      %869 = vrot.lane.b32.xlu0 %v835, 56
      %v870 = vpop.permute.xlu0 %869
      %871 = vrot.lane.b32.xlu0 %v839, 56
      %v872 = vpop.permute.xlu0 %871
      %873 = vrot.lane.b32.xlu0 %v843, 56
      %v874 = vpop.permute.xlu0 %873
      %875 = vrot.lane.b32.xlu0 %v847, 56
      %v876 = vpop.permute.xlu0 %875
      %877 = vrot.lane.b32.xlu0 %v851, 56
      %v878 = vpop.permute.xlu0 %877
      %879 = vrot.lane.b32.xlu0 %v855, 56
      %v880 = vpop.permute.xlu0 %879
      %881 = vrot.lane.b32.xlu0 %v864, 56
      %v882 = vpop.permute.xlu0 %881
      %vm883 = vcmask 1044480
      %v884 = vrot.slane %v448, 3
      %v885 = vrot.slane %v456, 3
      %v886 = vsel %vm883, %v884, %v885
      %v887 = vrot.slane %v464, 3
      %v888 = vsel %vm883, %v885, %v887
      %v889 = vrot.slane %v472, 3
      %v890 = vsel %vm883, %v887, %v889
      %v891 = vrot.slane %v480, 3
      %v892 = vsel %vm883, %v889, %v891
      %v893 = vrot.slane %v488, 3
      %v894 = vsel %vm883, %v891, %v893
      %v895 = vrot.slane %v496, 3
      %v896 = vsel %vm883, %v893, %v895
      %v897 = vrot.slane %v541, 3
      %v898 = vsel %vm883, %v895, %v897
      %v899 = vrot.slane %v528, 3
      %v900 = vsel %vm883, %v897, %v899
      %v901 = vrot.slane %v536, 3
      %v902 = vsel %vm883, %v899, %v901
      %903 = vrot.lane.b32.xlu0 %v886, 64
      %v904 = vpop.permute.xlu0 %903
      %905 = vrot.lane.b32.xlu0 %v888, 64
      %v906 = vpop.permute.xlu0 %905
      %907 = vrot.lane.b32.xlu0 %v890, 64
      %v908 = vpop.permute.xlu0 %907
      %909 = vrot.lane.b32.xlu0 %v892, 64
      %v910 = vpop.permute.xlu0 %909
      %911 = vrot.lane.b32.xlu0 %v894, 64
      %v912 = vpop.permute.xlu0 %911
      %913 = vrot.lane.b32.xlu0 %v896, 64
      %v914 = vpop.permute.xlu0 %913
      %915 = vrot.lane.b32.xlu0 %v898, 64
      %v916 = vpop.permute.xlu0 %915
      %917 = vrot.lane.b32.xlu0 %v900, 64
      %v918 = vpop.permute.xlu0 %917
      %919 = vrot.lane.b32.xlu0 %v902, 64
      %v920 = vpop.permute.xlu0 %919
      %vm921 = vcmask 64512
      %v923 = vsel %vm921, %v540, %v620
      %v925 = vsel %vm921, %v440, %v622
      %v927 = vsel %vm921, %v448, %v624
      %v929 = vsel %vm921, %v456, %v626
      %v931 = vsel %vm921, %v464, %v628
      %v933 = vsel %vm921, %v472, %v630
      %v935 = vsel %vm921, %v480, %v632
      %v937 = vsel %vm921, %v488, %v634
      %v939 = vsel %vm921, %v496, %v636
      %vm940 = vcmask 130048
      %v942 = vsel %vm940, %v923, %v660
      %v944 = vsel %vm940, %v925, %v662
      %v946 = vsel %vm940, %v927, %v664
      %v948 = vsel %vm940, %v929, %v666
      %v950 = vsel %vm940, %v931, %v668
      %v952 = vsel %vm940, %v933, %v670
      %v954 = vsel %vm940, %v935, %v672
      %v956 = vsel %vm940, %v937, %v674
      %v958 = vsel %vm940, %v939, %v676
      %vm959 = vcmask 195584
      %v961 = vsel %vm959, %v942, %v680
      %v963 = vsel %vm959, %v944, %v682
      %v965 = vsel %vm959, %v946, %v684
      %v967 = vsel %vm959, %v948, %v686
      %v969 = vsel %vm959, %v950, %v688
      %v971 = vsel %vm959, %v952, %v690
      %v973 = vsel %vm959, %v954, %v692
      %v975 = vsel %vm959, %v956, %v694
      %v977 = vsel %vm959, %v958, %v696
      %vm978 = vcmask 261120
      %v980 = vsel %vm978, %v961, %v745
      %v982 = vsel %vm978, %v963, %v747
      %v984 = vsel %vm978, %v965, %v749
      %v986 = vsel %vm978, %v967, %v751
      %v988 = vsel %vm978, %v969, %v753
      %v990 = vsel %vm978, %v971, %v755
      %v992 = vsel %vm978, %v973, %v757
      %v994 = vsel %vm978, %v975, %v759
      %v996 = vsel %vm978, %v977, %v761
      %vm997 = vcmask 326656
      %v999 = vsel %vm997, %v980, %v783
      %v1001 = vsel %vm997, %v982, %v785
      %v1003 = vsel %vm997, %v984, %v787
      %v1005 = vsel %vm997, %v986, %v789
      %v1007 = vsel %vm997, %v988, %v791
      %v1009 = vsel %vm997, %v990, %v793
      %v1011 = vsel %vm997, %v992, %v795
      %v1013 = vsel %vm997, %v994, %v797
      %v1015 = vsel %vm997, %v996, %v799
      %vm1016 = vcmask 392192
      %v1018 = vsel %vm1016, %v999, %v803
      %v1020 = vsel %vm1016, %v1001, %v805
      %v1022 = vsel %vm1016, %v1003, %v807
      %v1024 = vsel %vm1016, %v1005, %v809
      %v1026 = vsel %vm1016, %v1007, %v811
      %v1028 = vsel %vm1016, %v1009, %v813
      %v1030 = vsel %vm1016, %v1011, %v815
      %v1032 = vsel %vm1016, %v1013, %v817
      %v1034 = vsel %vm1016, %v1015, %v819
      %vm1035 = vcmask 457728
      %v1037 = vsel %vm1035, %v1018, %v866
      %v1039 = vsel %vm1035, %v1020, %v868
      %v1041 = vsel %vm1035, %v1022, %v870
      %v1043 = vsel %vm1035, %v1024, %v872
      %v1045 = vsel %vm1035, %v1026, %v874
      %v1047 = vsel %vm1035, %v1028, %v876
      %v1049 = vsel %vm1035, %v1030, %v878
      %v1051 = vsel %vm1035, %v1032, %v880
      %v1053 = vsel %vm1035, %v1034, %v882
      %vm1054 = vcmask 523264
      %v1056 = vsel %vm1054, %v1037, %v904
      %v1058 = vsel %vm1054, %v1039, %v906
      %v1060 = vsel %vm1054, %v1041, %v908
      %v1062 = vsel %vm1054, %v1043, %v910
      %v1064 = vsel %vm1054, %v1045, %v912
      %v1066 = vsel %vm1054, %v1047, %v914
      %v1068 = vsel %vm1054, %v1049, %v916
      %v1070 = vsel %vm1054, %v1051, %v918
      %v1072 = vsel %vm1054, %v1053, %v920
      %v1073 = vld [vmem:[%s2] sm:$0xf]
      %v1074 = vld [vmem:[%s2 + $0x4] sm:$0xf]
      %v1075 = vld [vmem:[%s2 + $0x8] sm:$0xf]
      %v1076 = vld [vmem:[%s2 + $0xc] sm:$0xf]
      %v1077 = vld [vmem:[%s2 + $0x10] sm:$0xf]
      %v1078 = vld [vmem:[%s2 + $0x14] sm:$0xf]
      %v1079 = vld [vmem:[%s2 + $0x18] sm:$0xf]
      %v1080 = vld [vmem:[%s2 + $0x1c] sm:$0xf]
      %v1081 = vld [vmem:[%s2 + $0x20] sm:$0xf]
      %v1082 = vld [vmem:[%s3] sm:$0x1]
      %v1084 = vlaneseq
      %v1085 = vshrl.u32 %v1084, 7
      %v1086 = vsub.s32 0, %v1085
      %v1087 = vrot.slane %v1082, %v1086
      %v1098 = vunpack.c.l.b16 %v1073
      %v1099 = vunpack.c.l.b16 %v1074
      %v1100 = vunpack.c.l.b16 %v1075
      %v1101 = vunpack.c.l.b16 %v1076
      %v1102 = vunpack.c.l.b16 %v1077
      %v1103 = vunpack.c.l.b16 %v1078
      %v1104 = vunpack.c.l.b16 %v1079
      %v1105 = vunpack.c.l.b16 %v1080
      %v1106 = vunpack.c.l.b16 %v1081
      %v1107 = vpack.c.b16 %v1099, %v1098
      %v1108 = vpack.c.b16 %v1101, %v1100
      %v1109 = vpack.c.b16 %v1103, %v1102
      %v1110 = vpack.c.b16 %v1105, %v1104
      %v1111 = vpack.c.b16 %v1106, %v1106
      %vm1116 = vcmask 588800
      %v1117 = vsel %vm1116, %v1056, 0
      %v1119 = vsel %vm1116, %v1058, 0
      %v1121 = vsel %vm1116, %v1060, 0
      %v1123 = vsel %vm1116, %v1062, 0
      %v1125 = vsel %vm1116, %v1064, 0
      %v1127 = vsel %vm1116, %v1066, 0
      %v1129 = vsel %vm1116, %v1068, 0
      %v1131 = vsel %vm1116, %v1070, 0
      %v1133 = vsel %vm1116, %v1072, 0
      %vm1135 = vcmask 1043456
      %v1137 = vsel %vm1135, %v1111, 0
      %1139 = vmatprep.subr.bf16.mxu0 0
      %1140 = vmatpush1.bf16.msra.mxu0 0
      %1141 = vmatprep.subr.bf16.mxu0 0
      %1142 = vmatpush1.bf16.msra.mxu0 0
      %1143 = vmatprep.subr.bf16.mxu0 0
      %1144 = vmatpush1.bf16.msra.mxu0 0
      %1145 = vmatprep.subr.bf16.mxu0 0
      %1146 = vmatpush1.bf16.msra.mxu0 %v1137
      %1147 = vmatprep.subr.bf16.mxu0 0
      %1148 = vmatpush1.bf16.msra.mxu0 %v1110
      %1149 = vmatprep.subr.bf16.mxu0 0
      %1150 = vmatpush1.bf16.msra.mxu0 %v1109
      %1151 = vmatprep.subr.bf16.mxu0 0
      %1152 = vmatpush1.bf16.msra.mxu0 %v1108
      %1153 = vmatprep.subr.bf16.mxu0 0
      %1154 = vmatpush1.bf16.msra.mxu0 %v1107
      %1155 = vmatprep.subr.bf16.mxu0 0
      %1156 = vmatpush2.bf16.msra.mxu0 0
      %1157 = vmatprep.subr.bf16.mxu0 0
      %1158 = vmatpush2.bf16.msra.mxu0 0
      %1159 = vmatprep.subr.bf16.mxu0 0
      %1160 = vmatpush2.bf16.msra.mxu0 0
      %1161 = vmatprep.subr.bf16.mxu0 0
      %1162 = vmatpush2.bf16.msra.mxu0 0
      %1163 = vmatprep.subr.bf16.mxu0 0
      %1164 = vmatpush2.bf16.msra.mxu0 0
      %1165 = vmatprep.subr.bf16.mxu0 0
      %1166 = vmatpush2.bf16.msra.mxu0 0
      %1167 = vmatprep.subr.bf16.mxu0 0
      %1168 = vmatpush2.bf16.msra.mxu0 0
      %1169 = vmatprep.subr.bf16.mxu0 0
      %1170 = vmatpush2.bf16.msra.mxu0 0
      %1171 = vmatprep.mubr.bf16.mxu0 0
      %1172 = vmatmul.mubr.bf16.gmra.mxu0 %v1117
      %v1173 = vpop.f32.mrf.mxu0
      %v1174 = vadd.f32 %v1087, %v1173
      %v1175 = vpop.f32.mrf.mxu0
      %v1176 = vpop.f32.mrf.mxu0
      %v1177 = vadd.f32 %v1087, %v1176
      %v1178 = vpop.f32.mrf.mxu0
      %1179 = vmatprep.mubr.bf16.mxu0 0
      %1180 = vmatmul.mubr.bf16.gmra.mxu0 %v1119
      %v1181 = vpop.f32.mrf.mxu0
      %v1182 = vadd.f32 %v1087, %v1181
      %v1183 = vpop.f32.mrf.mxu0
      %v1184 = vpop.f32.mrf.mxu0
      %v1185 = vadd.f32 %v1087, %v1184
      %v1186 = vpop.f32.mrf.mxu0
      %1187 = vmatprep.mubr.bf16.mxu0 0
      %1188 = vmatmul.mubr.bf16.gmra.mxu0 %v1121
      %v1189 = vpop.f32.mrf.mxu0
      %v1190 = vadd.f32 %v1087, %v1189
      %v1191 = vpop.f32.mrf.mxu0
      %v1192 = vpop.f32.mrf.mxu0
      %v1193 = vadd.f32 %v1087, %v1192
      %v1194 = vpop.f32.mrf.mxu0
      %1195 = vmatprep.mubr.bf16.mxu0 0
      %1196 = vmatmul.mubr.bf16.gmra.mxu0 %v1123
      %v1197 = vpop.f32.mrf.mxu0
      %v1198 = vadd.f32 %v1087, %v1197
      %v1199 = vpop.f32.mrf.mxu0
      %v1200 = vpop.f32.mrf.mxu0
      %v1201 = vadd.f32 %v1087, %v1200
      %v1202 = vpop.f32.mrf.mxu0
      %1203 = vmatprep.mubr.bf16.mxu0 0
      %1204 = vmatmul.mubr.bf16.gmra.mxu0 %v1125
      %v1205 = vpop.f32.mrf.mxu0
      %v1206 = vadd.f32 %v1087, %v1205
      %v1207 = vpop.f32.mrf.mxu0
      %v1208 = vpop.f32.mrf.mxu0
      %v1209 = vadd.f32 %v1087, %v1208
      %v1210 = vpop.f32.mrf.mxu0
      %1211 = vmatprep.mubr.bf16.mxu0 0
      %1212 = vmatmul.mubr.bf16.gmra.mxu0 %v1127
      %v1213 = vpop.f32.mrf.mxu0
      %v1214 = vadd.f32 %v1087, %v1213
      %v1215 = vpop.f32.mrf.mxu0
      %v1216 = vpop.f32.mrf.mxu0
      %v1217 = vadd.f32 %v1087, %v1216
      %v1218 = vpop.f32.mrf.mxu0
      %1219 = vmatprep.mubr.bf16.mxu0 0
      %1220 = vmatmul.mubr.bf16.gmra.mxu0 %v1129
      %v1221 = vpop.f32.mrf.mxu0
      %v1222 = vadd.f32 %v1087, %v1221
      %v1223 = vpop.f32.mrf.mxu0
      %v1224 = vpop.f32.mrf.mxu0
      %v1225 = vadd.f32 %v1087, %v1224
      %v1226 = vpop.f32.mrf.mxu0
      %1227 = vmatprep.mubr.bf16.mxu0 0
      %1228 = vmatmul.mubr.bf16.gmra.mxu0 %v1131
      %v1229 = vpop.f32.mrf.mxu0
      %v1230 = vadd.f32 %v1087, %v1229
      %v1231 = vpop.f32.mrf.mxu0
      %v1232 = vpop.f32.mrf.mxu0
      %v1233 = vadd.f32 %v1087, %v1232
      %v1234 = vpop.f32.mrf.mxu0
      %1235 = vmatprep.mubr.bf16.mxu0 0
      %1236 = vmatmul.mubr.bf16.gmra.mxu0 %v1133
      %v1237 = vpop.f32.mrf.mxu0
      %v1238 = vadd.f32 %v1087, %v1237
      %v1239 = vpop.f32.mrf.mxu0
      %v1240 = vpop.f32.mrf.mxu0
      %v1241 = vadd.f32 %v1087, %v1240
      %v1242 = vpop.f32.mrf.mxu0
      %1243 = vdwg.mxu0
      %v1244 = vlaneseq
      %v1245 = vshrl.u32 %v1244, 7
      %v1246 = vadd.s32 %v1245, 8
      %v1247 = vadd.s32 %v1245, 16
      %v1248 = vadd.s32 %v1245, 24
      %v1249 = vadd.s32 %v1245, 32
      %v1250 = vadd.s32 %v1245, 40
      %v1251 = vadd.s32 %v1245, 48
      %v1252 = vadd.s32 %v1245, 56
      %v1253 = vadd.s32 %v1245, 64
      %v1254 = vadd.s32 %v1245, 72
      %v1255 = vadd.s32 %v1245, 80
      %v1256 = vadd.s32 %v1245, 88
      %v1257 = vadd.s32 %v1245, 96
      %v1258 = vadd.s32 %v1245, 104
      %v1259 = vadd.s32 %v1245, 112
      %v1260 = vadd.s32 %v1245, 120
      %v1261 = vadd.s32 %v1245, 128
      %v1262 = vadd.s32 %v1245, 136
      %vm1263 = vcmp.lt.s32.totalorder %v1245, 0
      %v1264 = vsub.s32 0, %v1245
      %v1265 = vsel %vm1263, %v1264, %v1245
      %v1266 = vmul.u32.u64.compose %v1265, 3817748708
      %v1267 = vextract.low.u32 %v1266
      %v1268 = vextract.high.u32 %v1266
      %v1269 = vshrl.u32 %v1268, 4
      %v1270 = vmul.u32 %v1269, 18
      %v1271 = vsub.s32 %v1265, %v1270
      %v1272 = vsub.s32 0, %v1271
      %v1273 = vsel %vm1263, %v1272, %v1271
      %vm1274 = vcmp.lt.s32.totalorder %v1246, 0
      %v1275 = vsub.s32 0, %v1246
      %v1276 = vsel %vm1274, %v1275, %v1246
      %v1277 = vmul.u32.u64.compose %v1276, 3817748708
      %v1278 = vextract.low.u32 %v1277
      %v1279 = vextract.high.u32 %v1277
      %v1280 = vshrl.u32 %v1279, 4
      %v1281 = vmul.u32 %v1280, 18
      %v1282 = vsub.s32 %v1276, %v1281
      %v1283 = vsub.s32 0, %v1282
      %v1284 = vsel %vm1274, %v1283, %v1282
      %vm1285 = vcmp.lt.s32.totalorder %v1247, 0
      %v1286 = vsub.s32 0, %v1247
      %v1287 = vsel %vm1285, %v1286, %v1247
      %v1288 = vmul.u32.u64.compose %v1287, 3817748708
      %v1289 = vextract.low.u32 %v1288
      %v1290 = vextract.high.u32 %v1288
      %v1291 = vshrl.u32 %v1290, 4
      %v1292 = vmul.u32 %v1291, 18
      %v1293 = vsub.s32 %v1287, %v1292
      %v1294 = vsub.s32 0, %v1293
      %v1295 = vsel %vm1285, %v1294, %v1293
      %vm1296 = vcmp.lt.s32.totalorder %v1248, 0
      %v1297 = vsub.s32 0, %v1248
      %v1298 = vsel %vm1296, %v1297, %v1248
      %v1299 = vmul.u32.u64.compose %v1298, 3817748708
      %v1300 = vextract.low.u32 %v1299
      %v1301 = vextract.high.u32 %v1299
      %v1302 = vshrl.u32 %v1301, 4
      %v1303 = vmul.u32 %v1302, 18
      %v1304 = vsub.s32 %v1298, %v1303
      %v1305 = vsub.s32 0, %v1304
      %v1306 = vsel %vm1296, %v1305, %v1304
      %vm1307 = vcmp.lt.s32.totalorder %v1249, 0
      %v1308 = vsub.s32 0, %v1249
      %v1309 = vsel %vm1307, %v1308, %v1249
      %v1310 = vmul.u32.u64.compose %v1309, 3817748708
      %v1311 = vextract.low.u32 %v1310
      %v1312 = vextract.high.u32 %v1310
      %v1313 = vshrl.u32 %v1312, 4
      %v1314 = vmul.u32 %v1313, 18
      %v1315 = vsub.s32 %v1309, %v1314
      %v1316 = vsub.s32 0, %v1315
      %v1317 = vsel %vm1307, %v1316, %v1315
      %vm1318 = vcmp.lt.s32.totalorder %v1250, 0
      %v1319 = vsub.s32 0, %v1250
      %v1320 = vsel %vm1318, %v1319, %v1250
      %v1321 = vmul.u32.u64.compose %v1320, 3817748708
      %v1322 = vextract.low.u32 %v1321
      %v1323 = vextract.high.u32 %v1321
      %v1324 = vshrl.u32 %v1323, 4
      %v1325 = vmul.u32 %v1324, 18
      %v1326 = vsub.s32 %v1320, %v1325
      %v1327 = vsub.s32 0, %v1326
      %v1328 = vsel %vm1318, %v1327, %v1326
      %vm1329 = vcmp.lt.s32.totalorder %v1251, 0
      %v1330 = vsub.s32 0, %v1251
      %v1331 = vsel %vm1329, %v1330, %v1251
      %v1332 = vmul.u32.u64.compose %v1331, 3817748708
      %v1333 = vextract.low.u32 %v1332
      %v1334 = vextract.high.u32 %v1332
      %v1335 = vshrl.u32 %v1334, 4
      %v1336 = vmul.u32 %v1335, 18
      %v1337 = vsub.s32 %v1331, %v1336
      %v1338 = vsub.s32 0, %v1337
      %v1339 = vsel %vm1329, %v1338, %v1337
      %vm1340 = vcmp.lt.s32.totalorder %v1252, 0
      %v1341 = vsub.s32 0, %v1252
      %v1342 = vsel %vm1340, %v1341, %v1252
      %v1343 = vmul.u32.u64.compose %v1342, 3817748708
      %v1344 = vextract.low.u32 %v1343
      %v1345 = vextract.high.u32 %v1343
      %v1346 = vshrl.u32 %v1345, 4
      %v1347 = vmul.u32 %v1346, 18
      %v1348 = vsub.s32 %v1342, %v1347
      %v1349 = vsub.s32 0, %v1348
      %v1350 = vsel %vm1340, %v1349, %v1348
      %vm1351 = vcmp.lt.s32.totalorder %v1253, 0
      %v1352 = vsub.s32 0, %v1253
      %v1353 = vsel %vm1351, %v1352, %v1253
      %v1354 = vmul.u32.u64.compose %v1353, 3817748708
      %v1355 = vextract.low.u32 %v1354
      %v1356 = vextract.high.u32 %v1354
      %v1357 = vshrl.u32 %v1356, 4
      %v1358 = vmul.u32 %v1357, 18
      %v1359 = vsub.s32 %v1353, %v1358
      %v1360 = vsub.s32 0, %v1359
      %v1361 = vsel %vm1351, %v1360, %v1359
      %vm1362 = vcmp.lt.s32.totalorder %v1254, 0
      %v1363 = vsub.s32 0, %v1254
      %v1364 = vsel %vm1362, %v1363, %v1254
      %v1365 = vmul.u32.u64.compose %v1364, 3817748708
      %v1366 = vextract.low.u32 %v1365
      %v1367 = vextract.high.u32 %v1365
      %v1368 = vshrl.u32 %v1367, 4
      %v1369 = vmul.u32 %v1368, 18
      %v1370 = vsub.s32 %v1364, %v1369
      %v1371 = vsub.s32 0, %v1370
      %v1372 = vsel %vm1362, %v1371, %v1370
      %vm1373 = vcmp.lt.s32.totalorder %v1255, 0
      %v1374 = vsub.s32 0, %v1255
      %v1375 = vsel %vm1373, %v1374, %v1255
      %v1376 = vmul.u32.u64.compose %v1375, 3817748708
      %v1377 = vextract.low.u32 %v1376
      %v1378 = vextract.high.u32 %v1376
      %v1379 = vshrl.u32 %v1378, 4
      %v1380 = vmul.u32 %v1379, 18
      %v1381 = vsub.s32 %v1375, %v1380
      %v1382 = vsub.s32 0, %v1381
      %v1383 = vsel %vm1373, %v1382, %v1381
      %vm1384 = vcmp.lt.s32.totalorder %v1256, 0
      %v1385 = vsub.s32 0, %v1256
      %v1386 = vsel %vm1384, %v1385, %v1256
      %v1387 = vmul.u32.u64.compose %v1386, 3817748708
      %v1388 = vextract.low.u32 %v1387
      %v1389 = vextract.high.u32 %v1387
      %v1390 = vshrl.u32 %v1389, 4
      %v1391 = vmul.u32 %v1390, 18
      %v1392 = vsub.s32 %v1386, %v1391
      %v1393 = vsub.s32 0, %v1392
      %v1394 = vsel %vm1384, %v1393, %v1392
      %vm1395 = vcmp.lt.s32.totalorder %v1257, 0
      %v1396 = vsub.s32 0, %v1257
      %v1397 = vsel %vm1395, %v1396, %v1257
      %v1398 = vmul.u32.u64.compose %v1397, 3817748708
      %v1399 = vextract.low.u32 %v1398
      %v1400 = vextract.high.u32 %v1398
      %v1401 = vshrl.u32 %v1400, 4
      %v1402 = vmul.u32 %v1401, 18
      %v1403 = vsub.s32 %v1397, %v1402
      %v1404 = vsub.s32 0, %v1403
      %v1405 = vsel %vm1395, %v1404, %v1403
      %vm1406 = vcmp.lt.s32.totalorder %v1258, 0
      %v1407 = vsub.s32 0, %v1258
      %v1408 = vsel %vm1406, %v1407, %v1258
      %v1409 = vmul.u32.u64.compose %v1408, 3817748708
      %v1410 = vextract.low.u32 %v1409
      %v1411 = vextract.high.u32 %v1409
      %v1412 = vshrl.u32 %v1411, 4
      %v1413 = vmul.u32 %v1412, 18
      %v1414 = vsub.s32 %v1408, %v1413
      %v1415 = vsub.s32 0, %v1414
      %v1416 = vsel %vm1406, %v1415, %v1414
      %vm1417 = vcmp.lt.s32.totalorder %v1259, 0
      %v1418 = vsub.s32 0, %v1259
      %v1419 = vsel %vm1417, %v1418, %v1259
      %v1420 = vmul.u32.u64.compose %v1419, 3817748708
      %v1421 = vextract.low.u32 %v1420
      %v1422 = vextract.high.u32 %v1420
      %v1423 = vshrl.u32 %v1422, 4
      %v1424 = vmul.u32 %v1423, 18
      %v1425 = vsub.s32 %v1419, %v1424
      %v1426 = vsub.s32 0, %v1425
      %v1427 = vsel %vm1417, %v1426, %v1425
      %vm1428 = vcmp.lt.s32.totalorder %v1260, 0
      %v1429 = vsub.s32 0, %v1260
      %v1430 = vsel %vm1428, %v1429, %v1260
      %v1431 = vmul.u32.u64.compose %v1430, 3817748708
      %v1432 = vextract.low.u32 %v1431
      %v1433 = vextract.high.u32 %v1431
      %v1434 = vshrl.u32 %v1433, 4
      %v1435 = vmul.u32 %v1434, 18
      %v1436 = vsub.s32 %v1430, %v1435
      %v1437 = vsub.s32 0, %v1436
      %v1438 = vsel %vm1428, %v1437, %v1436
      %vm1439 = vcmp.lt.s32.totalorder %v1261, 0
      %v1440 = vsub.s32 0, %v1261
      %v1441 = vsel %vm1439, %v1440, %v1261
      %v1442 = vmul.u32.u64.compose %v1441, 3817748708
      %v1443 = vextract.low.u32 %v1442
      %v1444 = vextract.high.u32 %v1442
      %v1445 = vshrl.u32 %v1444, 4
      %v1446 = vmul.u32 %v1445, 18
      %v1447 = vsub.s32 %v1441, %v1446
      %v1448 = vsub.s32 0, %v1447
      %v1449 = vsel %vm1439, %v1448, %v1447
      %vm1450 = vcmp.lt.s32.totalorder %v1262, 0
      %v1451 = vsub.s32 0, %v1262
      %v1452 = vsel %vm1450, %v1451, %v1262
      %v1453 = vmul.u32.u64.compose %v1452, 3817748708
      %v1454 = vextract.low.u32 %v1453
      %v1455 = vextract.high.u32 %v1453
      %v1456 = vshrl.u32 %v1455, 4
      %v1457 = vmul.u32 %v1456, 18
      %v1458 = vsub.s32 %v1452, %v1457
      %v1459 = vsub.s32 0, %v1458
      %v1460 = vsel %vm1450, %v1459, %v1458
      %vm1461 = vcmp.ne.s32.totalorder %v1273, 0
      %vm1462 = vcmp.ne.s32.totalorder %v1284, 0
      %vm1463 = vcmp.ne.s32.totalorder %v1295, 0
      %vm1464 = vcmp.ne.s32.totalorder %v1306, 0
      %vm1465 = vcmp.ne.s32.totalorder %v1317, 0
      %vm1466 = vcmp.ne.s32.totalorder %v1328, 0
      %vm1467 = vcmp.ne.s32.totalorder %v1339, 0
      %vm1468 = vcmp.ne.s32.totalorder %v1350, 0
      %vm1469 = vcmp.ne.s32.totalorder %v1361, 0
      %vm1470 = vcmp.ne.s32.totalorder %v1372, 0
      %vm1471 = vcmp.ne.s32.totalorder %v1383, 0
      %vm1472 = vcmp.ne.s32.totalorder %v1394, 0
      %vm1473 = vcmp.ne.s32.totalorder %v1405, 0
      %vm1474 = vcmp.ne.s32.totalorder %v1416, 0
      %vm1475 = vcmp.ne.s32.totalorder %v1427, 0
      %vm1476 = vcmp.ne.s32.totalorder %v1438, 0
      %vm1477 = vcmp.ne.s32.totalorder %v1449, 0
      %vm1478 = vcmp.ne.s32.totalorder %v1460, 0
      %vm1479 = vcmp.lt.s32.totalorder %v1273, 0
      %vm1480 = vcmp.lt.s32.totalorder %v1284, 0
      %vm1481 = vcmp.lt.s32.totalorder %v1295, 0
      %vm1482 = vcmp.lt.s32.totalorder %v1306, 0
      %vm1483 = vcmp.lt.s32.totalorder %v1317, 0
      %vm1484 = vcmp.lt.s32.totalorder %v1328, 0
      %vm1485 = vcmp.lt.s32.totalorder %v1339, 0
      %vm1486 = vcmp.lt.s32.totalorder %v1350, 0
      %vm1487 = vcmp.lt.s32.totalorder %v1361, 0
      %vm1488 = vcmp.lt.s32.totalorder %v1372, 0
      %vm1489 = vcmp.lt.s32.totalorder %v1383, 0
      %vm1490 = vcmp.lt.s32.totalorder %v1394, 0
      %vm1491 = vcmp.lt.s32.totalorder %v1405, 0
      %vm1492 = vcmp.lt.s32.totalorder %v1416, 0
      %vm1493 = vcmp.lt.s32.totalorder %v1427, 0
      %vm1494 = vcmp.lt.s32.totalorder %v1438, 0
      %vm1495 = vcmp.lt.s32.totalorder %v1449, 0
      %vm1496 = vcmp.lt.s32.totalorder %v1460, 0
      %vm1497 = vmand %vm1479, %vm1461
      %vm1498 = vmand %vm1480, %vm1462
      %vm1499 = vmand %vm1481, %vm1463
      %vm1500 = vmand %vm1482, %vm1464
      %vm1501 = vmand %vm1483, %vm1465
      %vm1502 = vmand %vm1484, %vm1466
      %vm1503 = vmand %vm1485, %vm1467
      %vm1504 = vmand %vm1486, %vm1468
      %vm1505 = vmand %vm1487, %vm1469
      %vm1506 = vmand %vm1488, %vm1470
      %vm1507 = vmand %vm1489, %vm1471
      %vm1508 = vmand %vm1490, %vm1472
      %vm1509 = vmand %vm1491, %vm1473
      %vm1510 = vmand %vm1492, %vm1474
      %vm1511 = vmand %vm1493, %vm1475
      %vm1512 = vmand %vm1494, %vm1476
      %vm1513 = vmand %vm1495, %vm1477
      %vm1514 = vmand %vm1496, %vm1478
      %v1515 = vadd.s32 %v1273, 18
      %v1516 = vadd.s32 %v1284, 18
      %v1517 = vadd.s32 %v1295, 18
      %v1518 = vadd.s32 %v1306, 18
      %v1519 = vadd.s32 %v1317, 18
      %v1520 = vadd.s32 %v1328, 18
      %v1521 = vadd.s32 %v1339, 18
      %v1522 = vadd.s32 %v1350, 18
      %v1523 = vadd.s32 %v1361, 18
      %v1524 = vadd.s32 %v1372, 18
      %v1525 = vadd.s32 %v1383, 18
      %v1526 = vadd.s32 %v1394, 18
      %v1527 = vadd.s32 %v1405, 18
      %v1528 = vadd.s32 %v1416, 18
      %v1529 = vadd.s32 %v1427, 18
      %v1530 = vadd.s32 %v1438, 18
      %v1531 = vadd.s32 %v1449, 18
      %v1532 = vadd.s32 %v1460, 18
      %v1533 = vsel %vm1497, %v1515, %v1273
      %v1534 = vsel %vm1498, %v1516, %v1284
      %v1535 = vsel %vm1499, %v1517, %v1295
      %v1536 = vsel %vm1500, %v1518, %v1306
      %v1537 = vsel %vm1501, %v1519, %v1317
      %v1538 = vsel %vm1502, %v1520, %v1328
      %v1539 = vsel %vm1503, %v1521, %v1339
      %v1540 = vsel %vm1504, %v1522, %v1350
      %v1541 = vsel %vm1505, %v1523, %v1361
      %v1542 = vsel %vm1506, %v1524, %v1372
      %v1543 = vsel %vm1507, %v1525, %v1383
      %v1544 = vsel %vm1508, %v1526, %v1394
      %v1545 = vsel %vm1509, %v1527, %v1405
      %v1546 = vsel %vm1510, %v1528, %v1416
      %v1547 = vsel %vm1511, %v1529, %v1427
      %v1548 = vsel %vm1512, %v1530, %v1438
      %v1549 = vsel %vm1513, %v1531, %v1449
      %v1550 = vsel %vm1514, %v1532, %v1460
      %vm1551 = vcmp.ge.s32.totalorder %v1533, 1
      %vm1552 = vcmp.ge.s32.totalorder %v1534, 1
      %vm1553 = vcmp.ge.s32.totalorder %v1535, 1
      %vm1554 = vcmp.ge.s32.totalorder %v1536, 1
      %vm1555 = vcmp.ge.s32.totalorder %v1537, 1
      %vm1556 = vcmp.ge.s32.totalorder %v1538, 1
      %vm1557 = vcmp.ge.s32.totalorder %v1539, 1
      %vm1558 = vcmp.ge.s32.totalorder %v1540, 1
      %vm1559 = vcmp.ge.s32.totalorder %v1541, 1
      %vm1560 = vcmp.ge.s32.totalorder %v1542, 1
      %vm1561 = vcmp.ge.s32.totalorder %v1543, 1
      %vm1562 = vcmp.ge.s32.totalorder %v1544, 1
      %vm1563 = vcmp.ge.s32.totalorder %v1545, 1
      %vm1564 = vcmp.ge.s32.totalorder %v1546, 1
      %vm1565 = vcmp.ge.s32.totalorder %v1547, 1
      %vm1566 = vcmp.ge.s32.totalorder %v1548, 1
      %vm1567 = vcmp.ge.s32.totalorder %v1549, 1
      %vm1568 = vcmp.ge.s32.totalorder %v1550, 1
      %vm1569 = vcmp.le.s32.totalorder %v1533, 16
      %vm1570 = vcmp.le.s32.totalorder %v1534, 16
      %vm1571 = vcmp.le.s32.totalorder %v1535, 16
      %vm1572 = vcmp.le.s32.totalorder %v1536, 16
      %vm1573 = vcmp.le.s32.totalorder %v1537, 16
      %vm1574 = vcmp.le.s32.totalorder %v1538, 16
      %vm1575 = vcmp.le.s32.totalorder %v1539, 16
      %vm1576 = vcmp.le.s32.totalorder %v1540, 16
      %vm1577 = vcmp.le.s32.totalorder %v1541, 16
      %vm1578 = vcmp.le.s32.totalorder %v1542, 16
      %vm1579 = vcmp.le.s32.totalorder %v1543, 16
      %vm1580 = vcmp.le.s32.totalorder %v1544, 16
      %vm1581 = vcmp.le.s32.totalorder %v1545, 16
      %vm1582 = vcmp.le.s32.totalorder %v1546, 16
      %vm1583 = vcmp.le.s32.totalorder %v1547, 16
      %vm1584 = vcmp.le.s32.totalorder %v1548, 16
      %vm1585 = vcmp.le.s32.totalorder %v1549, 16
      %vm1586 = vcmp.le.s32.totalorder %v1550, 16
      %vm1587 = vmand %vm1551, %vm1569
      %vm1588 = vmand %vm1552, %vm1570
      %vm1589 = vmand %vm1553, %vm1571
      %vm1590 = vmand %vm1554, %vm1572
      %vm1591 = vmand %vm1555, %vm1573
      %vm1592 = vmand %vm1556, %vm1574
      %vm1593 = vmand %vm1557, %vm1575
      %vm1594 = vmand %vm1558, %vm1576
      %vm1595 = vmand %vm1559, %vm1577
      %vm1596 = vmand %vm1560, %vm1578
      %vm1597 = vmand %vm1561, %vm1579
      %vm1598 = vmand %vm1562, %vm1580
      %vm1599 = vmand %vm1563, %vm1581
      %vm1600 = vmand %vm1564, %vm1582
      %vm1601 = vmand %vm1565, %vm1583
      %vm1602 = vmand %vm1566, %vm1584
      %vm1603 = vmand %vm1567, %vm1585
      %vm1604 = vmand %vm1568, %vm1586
      %v1605 = vsel %vm1587, 1, 0
      %v1606 = vsel %vm1588, 1, 0
      %v1607 = vsel %vm1589, 1, 0
      %v1608 = vsel %vm1590, 1, 0
      %v1609 = vsel %vm1591, 1, 0
      %v1610 = vsel %vm1592, 1, 0
      %v1611 = vsel %vm1593, 1, 0
      %v1612 = vsel %vm1594, 1, 0
      %v1613 = vsel %vm1595, 1, 0
      %v1614 = vsel %vm1596, 1, 0
      %v1615 = vsel %vm1597, 1, 0
      %v1616 = vsel %vm1598, 1, 0
      %v1617 = vsel %vm1599, 1, 0
      %v1618 = vsel %vm1600, 1, 0
      %v1619 = vsel %vm1601, 1, 0
      %v1620 = vsel %vm1602, 1, 0
      %v1621 = vsel %vm1603, 1, 0
      %v1622 = vsel %vm1604, 1, 0
      %vm1623 = vcmp.eq.s32.totalorder %v1605, 1
      %vm1624 = vcmp.eq.s32.totalorder %v1606, 1
      %vm1625 = vcmp.eq.s32.totalorder %v1607, 1
      %vm1626 = vcmp.eq.s32.totalorder %v1608, 1
      %vm1627 = vcmp.eq.s32.totalorder %v1609, 1
      %vm1628 = vcmp.eq.s32.totalorder %v1610, 1
      %vm1629 = vcmp.eq.s32.totalorder %v1611, 1
      %vm1630 = vcmp.eq.s32.totalorder %v1612, 1
      %vm1631 = vcmp.eq.s32.totalorder %v1613, 1
      %vm1632 = vcmp.eq.s32.totalorder %v1614, 1
      %vm1633 = vcmp.eq.s32.totalorder %v1615, 1
      %vm1634 = vcmp.eq.s32.totalorder %v1616, 1
      %vm1635 = vcmp.eq.s32.totalorder %v1617, 1
      %vm1636 = vcmp.eq.s32.totalorder %v1618, 1
      %vm1637 = vcmp.eq.s32.totalorder %v1619, 1
      %vm1638 = vcmp.eq.s32.totalorder %v1620, 1
      %vm1639 = vcmp.eq.s32.totalorder %v1621, 1
      %vm1640 = vcmp.eq.s32.totalorder %v1622, 1
      %v1641 = vsel %vm1623, %v1174, 0.0
      %v1642 = vsel %vm1624, %v1177, 0.0
      %v1643 = vsel %vm1625, %v1182, 0.0
      %v1644 = vsel %vm1626, %v1185, 0.0
      %v1645 = vsel %vm1627, %v1190, 0.0
      %v1646 = vsel %vm1628, %v1193, 0.0
      %v1647 = vsel %vm1629, %v1198, 0.0
      %v1648 = vsel %vm1630, %v1201, 0.0
      %v1649 = vsel %vm1631, %v1206, 0.0
      %v1650 = vsel %vm1632, %v1209, 0.0
      %v1651 = vsel %vm1633, %v1214, 0.0
      %v1652 = vsel %vm1634, %v1217, 0.0
      %v1653 = vsel %vm1635, %v1222, 0.0
      %v1654 = vsel %vm1636, %v1225, 0.0
      %v1655 = vsel %vm1637, %v1230, 0.0
      %v1656 = vsel %vm1638, %v1233, 0.0
      %v1657 = vsel %vm1639, %v1238, 0.0
      %v1658 = vsel %vm1640, %v1241, 0.0
      %v1659 = vadd.f32 %v1641, %v1642
      %v1660 = vadd.f32 %v1659, %v1643
      %v1661 = vadd.f32 %v1660, %v1644
      %v1662 = vadd.f32 %v1661, %v1645
      %v1663 = vadd.f32 %v1662, %v1646
      %v1664 = vadd.f32 %v1663, %v1647
      %v1665 = vadd.f32 %v1664, %v1648
      %v1666 = vadd.f32 %v1665, %v1649
      %v1667 = vadd.f32 %v1666, %v1650
      %v1668 = vadd.f32 %v1667, %v1651
      %v1669 = vadd.f32 %v1668, %v1652
      %v1670 = vadd.f32 %v1669, %v1653
      %v1671 = vadd.f32 %v1670, %v1654
      %v1672 = vadd.f32 %v1671, %v1655
      %v1673 = vadd.f32 %v1672, %v1656
      %v1674 = vadd.f32 %v1673, %v1657
      %v1675 = vadd.f32 %v1674, %v1658
      %v1676 = vrot.slane %v1675, 4
      %v1677 = vadd.f32 %v1675, %v1676
      %v1678 = vrot.slane %v1677, 2
      %v1679 = vadd.f32 %v1677, %v1678
      %v1680 = vrot.slane %v1679, 1
      %v1681 = vadd.f32 %v1679, %v1680
      %v1682 = vmul.f32 %v1641, %v1641
      %v1683 = vmul.f32 %v1642, %v1642
      %v1684 = vmul.f32 %v1643, %v1643
      %v1685 = vmul.f32 %v1644, %v1644
      %v1686 = vmul.f32 %v1645, %v1645
      %v1687 = vmul.f32 %v1646, %v1646
      %v1688 = vmul.f32 %v1647, %v1647
      %v1689 = vmul.f32 %v1648, %v1648
      %v1690 = vmul.f32 %v1649, %v1649
      %v1691 = vmul.f32 %v1650, %v1650
      %v1692 = vmul.f32 %v1651, %v1651
      %v1693 = vmul.f32 %v1652, %v1652
      %v1694 = vmul.f32 %v1653, %v1653
      %v1695 = vmul.f32 %v1654, %v1654
      %v1696 = vmul.f32 %v1655, %v1655
      %v1697 = vmul.f32 %v1656, %v1656
      %v1698 = vmul.f32 %v1657, %v1657
      %v1699 = vmul.f32 %v1658, %v1658
      %v1700 = vadd.f32 %v1682, %v1683
      %v1701 = vadd.f32 %v1700, %v1684
      %v1702 = vadd.f32 %v1701, %v1685
      %v1703 = vadd.f32 %v1702, %v1686
      %v1704 = vadd.f32 %v1703, %v1687
      %v1705 = vadd.f32 %v1704, %v1688
      %v1706 = vadd.f32 %v1705, %v1689
      %v1707 = vadd.f32 %v1706, %v1690
      %v1708 = vadd.f32 %v1707, %v1691
      %v1709 = vadd.f32 %v1708, %v1692
      %v1710 = vadd.f32 %v1709, %v1693
      %v1711 = vadd.f32 %v1710, %v1694
      %v1712 = vadd.f32 %v1711, %v1695
      %v1713 = vadd.f32 %v1712, %v1696
      %v1714 = vadd.f32 %v1713, %v1697
      %v1715 = vadd.f32 %v1714, %v1698
      %v1716 = vadd.f32 %v1715, %v1699
      %v1717 = vrot.slane %v1716, 4
      %v1718 = vadd.f32 %v1716, %v1717
      %v1719 = vrot.slane %v1718, 2
      %v1720 = vadd.f32 %v1718, %v1719
      %v1721 = vrot.slane %v1720, 1
      %v1722 = vadd.f32 %v1720, %v1721
      %vm1723 = vcmask 1040384
      %v1724 = vsel %vm1723, %v1681, %v1722
      %vm1725 = vcmask 1041408
      %v1726 = vsel %vm1725, %v1724, 0.0
      %1727 = vst [vmem:[%s354] sm:$0xff] %v1726
      %v1728 = vpack.c.bf16 %v1642, %v1641
      %v1729 = vpack.c.bf16 %v1644, %v1643
      %v1730 = vpack.c.bf16 %v1646, %v1645
      %v1731 = vpack.c.bf16 %v1648, %v1647
      %v1732 = vpack.c.bf16 %v1650, %v1649
      %v1733 = vpack.c.bf16 %v1652, %v1651
      %v1734 = vpack.c.bf16 %v1654, %v1653
      %v1735 = vpack.c.bf16 %v1656, %v1655
      %v1736 = vpack.c.bf16 %v1658, %v1657
      %v1746 = vunpack.c.l.b16 %v1728
      %v1747 = vunpack.c.h.b16 %v1728
      %v1748 = vunpack.c.l.b16 %v1729
      %v1749 = vunpack.c.h.b16 %v1729
      %v1750 = vunpack.c.l.b16 %v1730
      %v1751 = vunpack.c.h.b16 %v1730
      %v1752 = vunpack.c.l.b16 %v1731
      %v1753 = vunpack.c.h.b16 %v1731
      %v1754 = vunpack.c.l.b16 %v1732
      %v1755 = vunpack.c.h.b16 %v1732
      %v1756 = vunpack.c.l.b16 %v1733
      %v1757 = vunpack.c.h.b16 %v1733
      %v1758 = vunpack.c.l.b16 %v1734
      %v1759 = vunpack.c.h.b16 %v1734
      %v1760 = vunpack.c.l.b16 %v1735
      %v1761 = vunpack.c.h.b16 %v1735
      %v1762 = vunpack.c.l.b16 %v1736
      %v1763 = vunpack.c.h.b16 %v1736
      %v1764 = vpack.c.b16 %v1746, %v1746
      %v1765 = vpack.c.b16 %v1747, %v1747
      %v1766 = vpack.c.b16 %v1748, %v1748
      %v1767 = vpack.c.b16 %v1749, %v1749
      %v1768 = vpack.c.b16 %v1750, %v1750
      %v1769 = vpack.c.b16 %v1751, %v1751
      %v1770 = vpack.c.b16 %v1752, %v1752
      %v1771 = vpack.c.b16 %v1753, %v1753
      %v1772 = vpack.c.b16 %v1754, %v1754
      %v1773 = vpack.c.b16 %v1755, %v1755
      %v1774 = vpack.c.b16 %v1756, %v1756
      %v1775 = vpack.c.b16 %v1757, %v1757
      %v1776 = vpack.c.b16 %v1758, %v1758
      %v1777 = vpack.c.b16 %v1759, %v1759
      %v1778 = vpack.c.b16 %v1760, %v1760
      %v1779 = vpack.c.b16 %v1761, %v1761
      %v1780 = vpack.c.b16 %v1762, %v1762
      %v1781 = vpack.c.b16 %v1763, %v1763
      %1800 = vst [vmem:[%s345] sm:$0xf] %v1764
      %1801 = vst [vmem:[%s345 + $0x4] sm:$0xf] %v1765
      %1802 = vst [vmem:[%s345 + $0x8] sm:$0xf] %v1766
      %1803 = vst [vmem:[%s345 + $0xc] sm:$0xf] %v1767
      %1804 = vst [vmem:[%s345 + $0x10] sm:$0xf] %v1768
      %1805 = vst [vmem:[%s345 + $0x14] sm:$0xf] %v1769
      %1806 = vst [vmem:[%s345 + $0x18] sm:$0xf] %v1770
      %1807 = vst [vmem:[%s345 + $0x1c] sm:$0xf] %v1771
      %1808 = vst [vmem:[%s345 + $0x20] sm:$0xf] %v1772
      %1809 = vst [vmem:[%s345 + $0x24] sm:$0xf] %v1773
      %1810 = vst [vmem:[%s345 + $0x28] sm:$0xf] %v1774
      %1811 = vst [vmem:[%s345 + $0x2c] sm:$0xf] %v1775
      %1812 = vst [vmem:[%s345 + $0x30] sm:$0xf] %v1776
      %1813 = vst [vmem:[%s345 + $0x34] sm:$0xf] %v1777
      %1814 = vst [vmem:[%s345 + $0x38] sm:$0xf] %v1778
      %1815 = vst [vmem:[%s345 + $0x3c] sm:$0xf] %v1779
      %1816 = vst [vmem:[%s345 + $0x40] sm:$0xf] %v1780
      %1817 = vst [vmem:[%s345 + $0x44] sm:$0xf] %v1781
      %s1818 = smul.u32 18, %s22
      %p1819 = scmp.lt.s32.totalorder %s21, 1
      %s1820 = scalar_select %p1819, %s21, 1
      %p1821 = scmp.lt.s32.totalorder %s1818, 35
      %s1822 = scalar_select %p1821, %s1818, 35
      %s1823 = smul.addr %s1820, 36
      %s1824 = sadd.s32 %s1822, %s1823
      %s1825 = smul.addr %s1824, 4
      %s1826 = scalar_lea.vmem %s4, %s1825
      %p1827 = scmp.lt.s32.totalorder %s21, 1
      %s1828 = scalar_select %p1827, %s21, 1
      %p1829 = scmp.lt.s32.totalorder %s22, 1
      %s1830 = scalar_select %p1829, %s22, 1
      %s1831 = smul.addr %s1828, 2
      %s1832 = sadd.s32 %s1830, %s1831
      %s1833 = smul.addr %s1832, 8
      %s1834 = scalar_lea.vmem %s5, %s1833
      // Predicated region
      $region37: #{double_conv_forward.3} parent=35 // pred_check
        %p1835 = pneg %p151
      $region38: #{double_conv_forward.3} parent=35 // pred_check_branch
        %1837 = sbr.rel (%p1835) target = $region40
      $region39: #{double_conv_forward.3} parent=35 // pred_region
        %s1838 = smul.u32 18, %s22
      $region40: #{double_conv_forward.3} parent=35 // pred_fallthru
        _
      // Predicated region
      $region41: #{double_conv_forward.3} parent=35 // pred_check
        %p1839 = pneg %p179
      $region42: #{double_conv_forward.3} parent=35 // pred_check_branch
        %1841 = sbr.rel (%p1839) target = $region44
      $region43: #{double_conv_forward.3} parent=35 // pred_region
        _
      $region44: #{double_conv_forward.3} parent=35 // pred_fallthru
        _
    $region36: #{double_conv_forward.3} parent=5 // pred_fallthru
      _
    %p1842 = scmp.le.s32.totalorder 2, %s12
    // Predicated region
    $region45: #{double_conv_forward.3} parent=5 // pred_check
      %p1843 = pneg %p1842
    $region46: #{double_conv_forward.3} parent=5 // pred_check_branch
      %1845 = sbr.rel (%p1843) target = $region48
    $region47: #{double_conv_forward.3} parent=5 // pred_region
      %s1846 = ssub.s32 %s12, 2
      // Predicated region
      $region49: #{double_conv_forward.3} parent=47 // pred_check
        %p1847 = pneg %p157
      $region50: #{double_conv_forward.3} parent=47 // pred_check_branch
        %1849 = sbr.rel (%p1847) target = $region52
      $region51: #{double_conv_forward.3} parent=47 // pred_region
        %s1850 = smul.u32 18, %s24
        %p1851 = scmp.lt.s32.totalorder %s23, 1
        %s1852 = scalar_select %p1851, %s23, 1
        %p1853 = scmp.lt.s32.totalorder %s1850, 35
        %s1854 = scalar_select %p1853, %s1850, 35
        %s1855 = smul.addr %s1852, 36
        %s1856 = sadd.s32 %s1854, %s1855
        %s1857 = smul.addr %s1856, 4
        %s1858 = scalar_lea.vmem %s4, %s1857
      $region52: #{double_conv_forward.3} parent=47 // pred_fallthru
        _
      // Predicated region
      $region53: #{double_conv_forward.3} parent=47 // pred_check
        %p1859 = pneg %p185
      $region54: #{double_conv_forward.3} parent=47 // pred_check_branch
        %1861 = sbr.rel (%p1859) target = $region56
      $region55: #{double_conv_forward.3} parent=47 // pred_region
        %p1862 = scmp.lt.s32.totalorder %s23, 1
        %s1863 = scalar_select %p1862, %s23, 1
        %p1864 = scmp.lt.s32.totalorder %s24, 1
        %s1865 = scalar_select %p1864, %s24, 1
        %s1866 = smul.addr %s1863, 2
        %s1867 = sadd.s32 %s1865, %s1866
        %s1868 = smul.addr %s1867, 8
        %s1869 = scalar_lea.vmem %s5, %s1868
      $region56: #{double_conv_forward.3} parent=47 // pred_fallthru
        _
    $region48: #{double_conv_forward.3} parent=5 // pred_fallthru
      _
  $region6: #{double_conv_forward.3} parent=0 // loop_footer
    %s16 = sadd.s32 1, %s12
  $region7: #{double_conv_forward.3} parent=0 // loop_footer_branch
    %11 = sbr.rel target = $region3
  $region8: #{double_conv_forward.3} parent=0 // loop_exit
    _

// kernel: double_conv_forward.4
$region0: #{double_conv_forward.4}
  #allocation0 [shape = 'u32[]', space=smem, size = 0x4, offset = 0x4, fixed_abs, tag = 'smem constant byte address 0x4 - core index']
  #allocation1 [shape = 'u32[144,128]{1,0:T(1,128)}', space=vmem, size = 0x12000, scoped, tag = 'internal scratch']
  %s0 = inlined_call_operand.vmem [shape: bf16[2,360,128], index: 0, kind: input, shape index: {}, may-alias: {0,1}]
  %s1 = inlined_call_operand.vmem [shape: bf16[2,360,128], index: 1, kind: input, shape index: {}, may-alias: {0,1}]
  %s2 = inlined_call_operand.vmem [shape: bf16[1152,128], index: 2, kind: input, shape index: {}]
  %s3 = inlined_call_operand.vmem [shape: f32[1,128], index: 3, kind: input, shape index: {}]
  %s4 = inlined_call_operand.vmem [shape: f32[1,128], index: 4, kind: input, shape index: {}]
  %s5 = inlined_call_operand.vmem [shape: f32[1,128], index: 5, kind: input, shape index: {}]
  %s6 = inlined_call_operand.vmem [shape: bf16[2,288,128], index: 6, kind: output, shape index: {0}]
  %s7 = inlined_call_operand.vmem [shape: f32[2,2,8,128], index: 7, kind: output, shape index: {1}]
  %8 = xla_tuple %s6, %s7
  %s9 = sld [smem:[#allocation0]]
  $region65: #{double_conv_forward.4} parent=0
    _
  %s11 = ssub.s32 1, %s9
  %s12 = scalar_select 0, %s11, %s9
  loop: start=0, step=1, limit=6
  $region2: #{double_conv_forward.4} parent=0 // loop_pre_header
    _
  $region3: #{double_conv_forward.4} parent=0 // loop_header
    %s14 = sphi 0, %s18
    %p15 = scmp.ge.s32.totalorder %s14, 6
    %s21 = sphi 0, %s33
    %s22 = sphi 0, %s29
    %s23 = sphi 0, %s21
    %s24 = sphi 0, %s22
    %s25 = sphi 0, %s23
    %s26 = sphi 0, %s24
    %s38 = sphi 0, %s40
    %s41 = sphi 0, %s38
    %s42 = sphi 0, %s41
    %s58 = sphi 0, %s42
    %s70 = sphi 0, %s72
    %s73 = sphi 0, %s70
    %s74 = sphi 0, %s73
    %s90 = sphi 0, %s74
    %s94 = sphi 0, %s94
    %s96 = sphi 0, %s94
    %s97 = sphi 0, %s96
    %s111 = sphi 0, %s97
    %s115 = sphi 0, %s115
    %s117 = sphi 0, %s115
    %s118 = sphi 0, %s117
    %s132 = sphi 0, %s118
    %s136 = sphi 0, %s136
    %s138 = sphi 0, %s136
    %s139 = sphi 0, %s138
    %s153 = sphi 0, %s139
    %s157 = sphi 0, %s157
    %s159 = sphi 0, %s157
    %s160 = sphi 0, %s159
    %s174 = sphi 0, %s160
    %s182 = sphi 0, %s184
    %s185 = sphi 0, %s182
    %s186 = sphi 0, %s185
    %s202 = sphi 0, %s186
    %s210 = sphi 0, %s212
    %s213 = sphi 0, %s210
    %s214 = sphi 0, %s213
    %s230 = sphi 0, %s214
  $region4: #{double_conv_forward.4} parent=0 // loop_header_branch
    %17 = sbr.rel (%p15) target = $region8
  $region5: #{double_conv_forward.4} parent=0 // loop_body
    %s19 = ssub.s32 %s14, 1
    %s20 = ssub.s32 %s14, 2
    %s27 = sadd.s32 1, %s22
    %p28 = scmp.ge.s32.totalorder %s27, 2
    %s29 = scalar_select %p28, 0, %s27
    %s30 = sadd.s32 1, %s21
    %s31 = scalar_select %p28, %s30, %s21
    %p32 = scmp.ge.s32.totalorder %s31, 2
    %s33 = scalar_select %p32, 0, %s31
    %s34 = ssub.s32 %s21, %s33
    %s35 = ssub.s32 %s22, %s29
    %s36 = sor.u32 %s34, %s35
    %p37 = scmp.eq.s32.totalorder %s36, 0
    %s39 = sadd.s32 %s38, 1
    %s40 = scalar_select %p37, %s38, %s39
    %p43 = pneg %p37
    %p44 = scmp.eq.s32.totalorder %s14, 3
    %p45 = por %p43, %p44
    %p46 = scmp.ne.s32.totalorder %s38, %s41
    %p47 = scmp.eq.s32.totalorder %s14, 0
    %p48 = por %p46, %p47
    %p49 = scmp.ne.s32.totalorder %s38, %s41
    %p50 = scmp.eq.s32.totalorder %s19, 3
    %p51 = por %p49, %p50
    %p52 = scmp.ne.s32.totalorder %s41, %s42
    %p53 = scmp.eq.s32.totalorder %s19, 0
    %p54 = por %p52, %p53
    %p55 = scmp.ne.s32.totalorder %s41, %s42
    %p56 = scmp.eq.s32.totalorder %s20, 3
    %p57 = por %p55, %p56
    %p59 = scmp.ne.s32.totalorder %s42, %s58
    %p60 = scmp.eq.s32.totalorder %s20, 0
    %p61 = por %p59, %p60
    %s62 = sadd.s32 %s22, 1
    %s63 = smul.u32 %s62, 2
    %s64 = sadd.s32 %s29, 1
    %s65 = smul.u32 %s64, 2
    %s66 = ssub.s32 %s21, %s33
    %s67 = ssub.s32 %s63, %s65
    %s68 = sor.u32 %s66, %s67
    %p69 = scmp.eq.s32.totalorder %s68, 0
    %s71 = sadd.s32 %s70, 1
    %s72 = scalar_select %p69, %s70, %s71
    %p75 = pneg %p69
    %p76 = scmp.eq.s32.totalorder %s14, 3
    %p77 = por %p75, %p76
    %p78 = scmp.ne.s32.totalorder %s70, %s73
    %p79 = scmp.eq.s32.totalorder %s14, 0
    %p80 = por %p78, %p79
    %p81 = scmp.ne.s32.totalorder %s70, %s73
    %p82 = scmp.eq.s32.totalorder %s19, 3
    %p83 = por %p81, %p82
    %p84 = scmp.ne.s32.totalorder %s73, %s74
    %p85 = scmp.eq.s32.totalorder %s19, 0
    %p86 = por %p84, %p85
    %p87 = scmp.ne.s32.totalorder %s73, %s74
    %p88 = scmp.eq.s32.totalorder %s20, 3
    %p89 = por %p87, %p88
    %p91 = scmp.ne.s32.totalorder %s74, %s90
    %p92 = scmp.eq.s32.totalorder %s20, 0
    %p93 = por %p91, %p92
    %s95 = sadd.s32 %s94, 1
    %p98 = scmp.eq.s32.totalorder %s14, 3
    %p99 = scmp.ne.s32.totalorder %s94, %s96
    %p100 = scmp.eq.s32.totalorder %s14, 0
    %p101 = por %p99, %p100
    %p102 = scmp.ne.s32.totalorder %s94, %s96
    %p103 = scmp.eq.s32.totalorder %s19, 3
    %p104 = por %p102, %p103
    %p105 = scmp.ne.s32.totalorder %s96, %s97
    %p106 = scmp.eq.s32.totalorder %s19, 0
    %p107 = por %p105, %p106
    %p108 = scmp.ne.s32.totalorder %s96, %s97
    %p109 = scmp.eq.s32.totalorder %s20, 3
    %p110 = por %p108, %p109
    %p112 = scmp.ne.s32.totalorder %s97, %s111
    %p113 = scmp.eq.s32.totalorder %s20, 0
    %p114 = por %p112, %p113
    %s116 = sadd.s32 %s115, 1
    %p119 = scmp.eq.s32.totalorder %s14, 3
    %p120 = scmp.ne.s32.totalorder %s115, %s117
    %p121 = scmp.eq.s32.totalorder %s14, 0
    %p122 = por %p120, %p121
    %p123 = scmp.ne.s32.totalorder %s115, %s117
    %p124 = scmp.eq.s32.totalorder %s19, 3
    %p125 = por %p123, %p124
    %p126 = scmp.ne.s32.totalorder %s117, %s118
    %p127 = scmp.eq.s32.totalorder %s19, 0
    %p128 = por %p126, %p127
    %p129 = scmp.ne.s32.totalorder %s117, %s118
    %p130 = scmp.eq.s32.totalorder %s20, 3
    %p131 = por %p129, %p130
    %p133 = scmp.ne.s32.totalorder %s118, %s132
    %p134 = scmp.eq.s32.totalorder %s20, 0
    %p135 = por %p133, %p134
    %s137 = sadd.s32 %s136, 1
    %p140 = scmp.eq.s32.totalorder %s14, 3
    %p141 = scmp.ne.s32.totalorder %s136, %s138
    %p142 = scmp.eq.s32.totalorder %s14, 0
    %p143 = por %p141, %p142
    %p144 = scmp.ne.s32.totalorder %s136, %s138
    %p145 = scmp.eq.s32.totalorder %s19, 3
    %p146 = por %p144, %p145
    %p147 = scmp.ne.s32.totalorder %s138, %s139
    %p148 = scmp.eq.s32.totalorder %s19, 0
    %p149 = por %p147, %p148
    %p150 = scmp.ne.s32.totalorder %s138, %s139
    %p151 = scmp.eq.s32.totalorder %s20, 3
    %p152 = por %p150, %p151
    %p154 = scmp.ne.s32.totalorder %s139, %s153
    %p155 = scmp.eq.s32.totalorder %s20, 0
    %p156 = por %p154, %p155
    %s158 = sadd.s32 %s157, 1
    %p161 = scmp.eq.s32.totalorder %s14, 3
    %p162 = scmp.ne.s32.totalorder %s157, %s159
    %p163 = scmp.eq.s32.totalorder %s14, 0
    %p164 = por %p162, %p163
    %p165 = scmp.ne.s32.totalorder %s157, %s159
    %p166 = scmp.eq.s32.totalorder %s19, 3
    %p167 = por %p165, %p166
    %p168 = scmp.ne.s32.totalorder %s159, %s160
    %p169 = scmp.eq.s32.totalorder %s19, 0
    %p170 = por %p168, %p169
    %p171 = scmp.ne.s32.totalorder %s159, %s160
    %p172 = scmp.eq.s32.totalorder %s20, 3
    %p173 = por %p171, %p172
    %p175 = scmp.ne.s32.totalorder %s160, %s174
    %p176 = scmp.eq.s32.totalorder %s20, 0
    %p177 = por %p175, %p176
    %s178 = ssub.s32 %s21, %s33
    %s179 = ssub.s32 %s22, %s29
    %s180 = sor.u32 %s178, %s179
    %p181 = scmp.eq.s32.totalorder %s180, 0
    %s183 = sadd.s32 %s182, 1
    %s184 = scalar_select %p181, %s182, %s183
    %p187 = pneg %p181
    %p188 = scmp.eq.s32.totalorder %s14, 3
    %p189 = por %p187, %p188
    %p190 = scmp.ne.s32.totalorder %s182, %s185
    %p191 = scmp.eq.s32.totalorder %s14, 0
    %p192 = por %p190, %p191
    %p193 = scmp.ne.s32.totalorder %s182, %s185
    %p194 = scmp.eq.s32.totalorder %s19, 3
    %p195 = por %p193, %p194
    %p196 = scmp.ne.s32.totalorder %s185, %s186
    %p197 = scmp.eq.s32.totalorder %s19, 0
    %p198 = por %p196, %p197
    %p199 = scmp.ne.s32.totalorder %s185, %s186
    %p200 = scmp.eq.s32.totalorder %s20, 3
    %p201 = por %p199, %p200
    %p203 = scmp.ne.s32.totalorder %s186, %s202
    %p204 = scmp.eq.s32.totalorder %s20, 0
    %p205 = por %p203, %p204
    %s206 = ssub.s32 %s21, %s33
    %s207 = ssub.s32 %s22, %s29
    %s208 = sor.u32 %s206, %s207
    %p209 = scmp.eq.s32.totalorder %s208, 0
    %s211 = sadd.s32 %s210, 1
    %s212 = scalar_select %p209, %s210, %s211
    %p215 = pneg %p209
    %p216 = scmp.eq.s32.totalorder %s14, 3
    %p217 = por %p215, %p216
    %p218 = scmp.ne.s32.totalorder %s210, %s213
    %p219 = scmp.eq.s32.totalorder %s14, 0
    %p220 = por %p218, %p219
    %p221 = scmp.ne.s32.totalorder %s210, %s213
    %p222 = scmp.eq.s32.totalorder %s19, 3
    %p223 = por %p221, %p222
    %p224 = scmp.ne.s32.totalorder %s213, %s214
    %p225 = scmp.eq.s32.totalorder %s19, 0
    %p226 = por %p224, %p225
    %p227 = scmp.ne.s32.totalorder %s213, %s214
    %p228 = scmp.eq.s32.totalorder %s20, 3
    %p229 = por %p227, %p228
    %p231 = scmp.ne.s32.totalorder %s214, %s230
    %p232 = scmp.eq.s32.totalorder %s20, 0
    %p233 = por %p231, %p232
    %p234 = scmp.le.s32.totalorder 1, %s14
    %p235 = scmp.lt.s32.totalorder %s14, 5
    %p236 = pnand %p234, %p235
    %p237 = pneg %p236
    // Predicated region
    $region9: #{double_conv_forward.4} parent=5 // pred_check
      _
    $region10: #{double_conv_forward.4} parent=5 // pred_check_branch
      %239 = sbr.rel (%p236) target = $region12
    $region11: #{double_conv_forward.4} parent=5 // pred_region
      %s240 = ssub.s32 %s14, 1
      // Predicated region
      $region13: #{double_conv_forward.4} parent=11 // pred_check
        %p241 = pneg %p107
      $region14: #{double_conv_forward.4} parent=11 // pred_check_branch
        %243 = sbr.rel (%p241) target = $region16
      $region15: #{double_conv_forward.4} parent=11 // pred_region
        _
      $region16: #{double_conv_forward.4} parent=11 // pred_fallthru
        _
      // Predicated region
      $region17: #{double_conv_forward.4} parent=11 // pred_check
        %p244 = pneg %p128
      $region18: #{double_conv_forward.4} parent=11 // pred_check_branch
        %246 = sbr.rel (%p244) target = $region20
      $region19: #{double_conv_forward.4} parent=11 // pred_region
        _
      $region20: #{double_conv_forward.4} parent=11 // pred_fallthru
        _
      // Predicated region
      $region21: #{double_conv_forward.4} parent=11 // pred_check
        %p247 = pneg %p149
      $region22: #{double_conv_forward.4} parent=11 // pred_check_branch
        %249 = sbr.rel (%p247) target = $region24
      $region23: #{double_conv_forward.4} parent=11 // pred_region
        _
      $region24: #{double_conv_forward.4} parent=11 // pred_fallthru
        _
      // Predicated region
      $region25: #{double_conv_forward.4} parent=11 // pred_check
        %p250 = pneg %p170
      $region26: #{double_conv_forward.4} parent=11 // pred_check_branch
        %252 = sbr.rel (%p250) target = $region28
      $region27: #{double_conv_forward.4} parent=11 // pred_region
        _
      $region28: #{double_conv_forward.4} parent=11 // pred_fallthru
        _
    $region12: #{double_conv_forward.4} parent=5 // pred_fallthru
      _
    %p253 = scmp.lt.s32.totalorder %s14, 4
    // Predicated region
    $region29: #{double_conv_forward.4} parent=5 // pred_check
      %p254 = pneg %p253
    $region30: #{double_conv_forward.4} parent=5 // pred_check_branch
      %256 = sbr.rel (%p254) target = $region32
    $region31: #{double_conv_forward.4} parent=5 // pred_region
      // Predicated region
      $region33: #{double_conv_forward.4} parent=31 // pred_check
        %p257 = pneg %p48
      $region34: #{double_conv_forward.4} parent=31 // pred_check_branch
        %259 = sbr.rel (%p257) target = $region36
      $region35: #{double_conv_forward.4} parent=31 // pred_region
        %s260 = smul.u32 18, %s22
        %s261 = ssub.s32 45, %s260
        %p262 = scmp.lt.s32.totalorder %s261, 18
        %s263 = scalar_select %p262, %s261, 18
        %s264 = smul.u32 64, %s263
        %p265 = scmp.lt.s32.totalorder %s21, 1
        %s266 = scalar_select %p265, %s21, 1
        %p267 = scmp.lt.s32.totalorder %s260, 44
        %s268 = scalar_select %p267, %s260, 44
        %s269 = smul.addr %s266, 45
        %s270 = sadd.s32 %s268, %s269
        %s271 = smul.addr %s270, 4
        %s272 = scalar_lea.vmem %s0, %s271
        %s273 = smul.u32 18, %s22
        %s274 = ssub.s32 45, %s273
        %p275 = scmp.lt.s32.totalorder %s274, 18
        %s276 = scalar_select %p275, %s274, 18
        %s277 = smul.u32 64, %s276
      $region36: #{double_conv_forward.4} parent=31 // pred_fallthru
        _
      // Predicated region
      $region37: #{double_conv_forward.4} parent=31 // pred_check
        %p278 = pneg %p80
      $region38: #{double_conv_forward.4} parent=31 // pred_check_branch
        %280 = sbr.rel (%p278) target = $region40
      $region39: #{double_conv_forward.4} parent=31 // pred_region
        %s281 = sadd.s32 %s22, 1
        %s282 = smul.u32 %s281, 2
        %s283 = smul.u32 9, %s282
        %p284 = scmp.lt.s32.totalorder %s21, 1
        %s285 = scalar_select %p284, %s21, 1
        %p286 = scmp.lt.s32.totalorder %s283, 44
        %s287 = scalar_select %p286, %s283, 44
        %s288 = smul.addr %s285, 45
        %s289 = sadd.s32 %s287, %s288
        %s290 = smul.addr %s289, 4
        %s291 = scalar_lea.vmem %s1, %s290
        %s292 = sadd.s32 %s22, 1
        %s293 = smul.u32 %s292, 2
        %s294 = smul.u32 9, %s293
      $region40: #{double_conv_forward.4} parent=31 // pred_fallthru
        _
    $region32: #{double_conv_forward.4} parent=5 // pred_fallthru
      _
    %p295 = scmp.le.s32.totalorder 1, %s14
    %p296 = scmp.lt.s32.totalorder %s14, 5
    %p297 = pnand %p295, %p296
    %p298 = pneg %p297
    // Predicated region
    $region41: #{double_conv_forward.4} parent=5 // pred_check
      _
    $region42: #{double_conv_forward.4} parent=5 // pred_check_branch
      %300 = sbr.rel (%p297) target = $region44
    $region43: #{double_conv_forward.4} parent=5 // pred_region
      %s301 = ssub.s32 %s14, 1
      %s302 = smul.u32 18, %s24
      %s303 = ssub.s32 45, %s302
      %p304 = scmp.lt.s32.totalorder %s303, 18
      %s305 = scalar_select %p304, %s303, 18
      %s306 = smul.u32 64, %s305
      %p307 = scmp.lt.s32.totalorder %s23, 1
      %s308 = scalar_select %p307, %s23, 1
      %p309 = scmp.lt.s32.totalorder %s302, 44
      %s310 = scalar_select %p309, %s302, 44
      %s311 = smul.addr %s308, 45
      %s312 = sadd.s32 %s310, %s311
      %s313 = smul.addr %s312, 4
      %s314 = scalar_lea.vmem %s0, %s313
      %p315 = pneg %p54
      %p316 = pneg %p51
      %s317 = sadd.s32 %s24, 1
      %s318 = smul.u32 %s317, 2
      %s319 = smul.u32 9, %s318
      %p320 = scmp.lt.s32.totalorder %s23, 1
      %s321 = scalar_select %p320, %s23, 1
      %p322 = scmp.lt.s32.totalorder %s319, 44
      %s323 = scalar_select %p322, %s319, 44
      %s324 = smul.addr %s321, 45
      %s325 = sadd.s32 %s323, %s324
      %s326 = smul.addr %s325, 4
      %s327 = scalar_lea.vmem %s1, %s326
      %p328 = pneg %p86
      %p329 = pneg %p83
      %p330 = pneg %p107
      %p331 = pneg %p104
      %p332 = pneg %p128
      %p333 = pneg %p125
      %p334 = pneg %p149
      %p335 = pneg %p146
      %p336 = pneg %p170
      %p337 = pneg %p167
      %p338 = pneg %p198
      %p339 = pneg %p195
      %s340 = smul.u32 18, %s24
      %p341 = scmp.lt.s32.totalorder %s23, 1
      %s342 = scalar_select %p341, %s23, 1
      %p343 = scmp.lt.s32.totalorder %s340, 35
      %s344 = scalar_select %p343, %s340, 35
      %s345 = smul.addr %s342, 36
      %s346 = sadd.s32 %s344, %s345
      %s347 = smul.addr %s346, 4
      %s348 = scalar_lea.vmem %s6, %s347
      %p349 = pneg %p226
      %p350 = pneg %p223
      %p351 = scmp.lt.s32.totalorder %s23, 1
      %s352 = scalar_select %p351, %s23, 1
      %p353 = scmp.lt.s32.totalorder %s24, 1
      %s354 = scalar_select %p353, %s24, 1
      %s355 = smul.addr %s352, 2
      %s356 = sadd.s32 %s354, %s355
      %s357 = smul.addr %s356, 8
      %s358 = scalar_lea.vmem %s7, %s357
      %s359 = smul.u32 18, %s24
      %s360 = ssub.s32 45, %s359
      %p361 = scmp.lt.s32.totalorder %s360, 18
      %s362 = scalar_select %p361, %s360, 18
      %s363 = smul.u32 64, %s362
      %p364 = scmp.lt.s32.totalorder %s23, 1
      %s365 = scalar_select %p364, %s23, 1
      %p366 = scmp.lt.s32.totalorder %s359, 44
      %s367 = scalar_select %p366, %s359, 44
      %s368 = smul.addr %s365, 45
      %s369 = sadd.s32 %s367, %s368
      %s370 = smul.addr %s369, 4
      %s371 = scalar_lea.vmem %s0, %s370
      %s372 = smul.u32 18, %s24
      %s373 = ssub.s32 45, %s372
      %p374 = scmp.lt.s32.totalorder %s373, 18
      %s375 = scalar_select %p374, %s373, 18
      %s376 = smul.u32 64, %s375
      %s377 = sadd.s32 %s24, 1
      %s378 = smul.u32 %s377, 2
      %s379 = smul.u32 9, %s378
      %p380 = scmp.lt.s32.totalorder %s23, 1
      %s381 = scalar_select %p380, %s23, 1
      %p382 = scmp.lt.s32.totalorder %s379, 44
      %s383 = scalar_select %p382, %s379, 44
      %s384 = smul.addr %s381, 45
      %s385 = sadd.s32 %s383, %s384
      %s386 = smul.addr %s385, 4
      %s387 = scalar_lea.vmem %s1, %s386
      %s388 = sadd.s32 %s24, 1
      %s389 = smul.u32 %s388, 2
      %s390 = smul.u32 9, %s389
      %s391 = smul.u32 18, %s24
      %p392 = scmp.lt.s32.totalorder %s23, 1
      %s393 = scalar_select %p392, %s23, 1
      %p394 = scmp.lt.s32.totalorder %s391, 35
      %s395 = scalar_select %p394, %s391, 35
      %s396 = smul.addr %s393, 36
      %s397 = sadd.s32 %s395, %s396
      %s398 = smul.addr %s397, 4
      %s399 = scalar_lea.vmem %s6, %s398
      %s400 = smul.u32 18, %s24
      %p401 = scmp.lt.s32.totalorder %s23, 1
      %s402 = scalar_select %p401, %s23, 1
      %p403 = scmp.lt.s32.totalorder %s24, 1
      %s404 = scalar_select %p403, %s24, 1
      %s405 = smul.addr %s402, 2
      %s406 = sadd.s32 %s404, %s405
      %s407 = smul.addr %s406, 8
      %s408 = scalar_lea.vmem %s7, %s407
      %v410 = vld [vmem:[%s371] sm:$0xf]
      %v411 = vld [vmem:[%s371 + $0x4] sm:$0xf]
      %v412 = vld [vmem:[%s371 + $0x8] sm:$0xf]
      %v413 = vld [vmem:[%s371 + $0xc] sm:$0xf]
      %v414 = vld [vmem:[%s371 + $0x10] sm:$0xf]
      %v415 = vld [vmem:[%s371 + $0x14] sm:$0xf]
      %v416 = vld [vmem:[%s371 + $0x18] sm:$0xf]
      %v417 = vld [vmem:[%s371 + $0x1c] sm:$0xf]
      %v418 = vld [vmem:[%s371 + $0x20] sm:$0xf]
      %v419 = vld [vmem:[%s371 + $0x24] sm:$0xf]
      %v420 = vld [vmem:[%s371 + $0x28] sm:$0xf]
      %v421 = vld [vmem:[%s371 + $0x2c] sm:$0xf]
      %v422 = vld [vmem:[%s371 + $0x30] sm:$0xf]
      %v423 = vld [vmem:[%s371 + $0x34] sm:$0xf]
      %v424 = vld [vmem:[%s371 + $0x38] sm:$0xf]
      %v425 = vld [vmem:[%s371 + $0x3c] sm:$0xf]
      %v426 = vld [vmem:[%s371 + $0x40] sm:$0xf]
      %v427 = vld [vmem:[%s371 + $0x44] sm:$0xf]
      %v428 = vld [vmem:[%s387] sm:$0xf]
      %v429 = vld [vmem:[%s387 + $0x4] sm:$0xf]
      %v430 = vld [vmem:[%s387 + $0x8] sm:$0xf]
      %v431 = vld [vmem:[%s387 + $0xc] sm:$0xf]
      %v432 = vld [vmem:[%s387 + $0x10] sm:$0xf]
      %v433 = vld [vmem:[%s387 + $0x14] sm:$0xf]
      %v452 = vunpack.c.l.b16 %v410
      %v453 = vunpack.c.l.b16 %v411
      %v454 = vunpack.c.l.b16 %v412
      %v455 = vunpack.c.l.b16 %v413
      %v456 = vunpack.c.l.b16 %v414
      %v457 = vunpack.c.l.b16 %v415
      %v458 = vunpack.c.l.b16 %v416
      %v459 = vunpack.c.l.b16 %v417
      %v460 = vunpack.c.l.b16 %v418
      %v461 = vunpack.c.l.b16 %v419
      %v462 = vunpack.c.l.b16 %v420
      %v463 = vunpack.c.l.b16 %v421
      %v464 = vunpack.c.l.b16 %v422
      %v465 = vunpack.c.l.b16 %v423
      %v466 = vunpack.c.l.b16 %v424
      %v467 = vunpack.c.l.b16 %v425
      %v468 = vunpack.c.l.b16 %v426
      %v469 = vunpack.c.l.b16 %v427
      %v470 = vpack.c.b16 %v453, %v452
      %v471 = vpack.c.b16 %v455, %v454
      %v472 = vpack.c.b16 %v457, %v456
      %v473 = vpack.c.b16 %v459, %v458
      %v474 = vpack.c.b16 %v461, %v460
      %v475 = vpack.c.b16 %v463, %v462
      %v476 = vpack.c.b16 %v465, %v464
      %v477 = vpack.c.b16 %v467, %v466
      %v478 = vpack.c.b16 %v469, %v468
      %vm479 = vsmask.f32 256
      %v481 = vshrl.u32 %v470, 16
      %v483 = vrot.slane %v481, 7
      %v484 = vshll.u32 %v470, 16
      %v486 = vor.u32 %v483, %v484
      %v488 = vshrl.u32 %v471, 16
      %v490 = vrot.slane %v488, 7
      %v491 = vshll.u32 %v471, 16
      %v493 = vor.u32 %v490, %v491
      %v494 = vsel %vm479, %v483, %v493
      %v496 = vshrl.u32 %v472, 16
      %v498 = vrot.slane %v496, 7
      %v499 = vshll.u32 %v472, 16
      %v501 = vor.u32 %v498, %v499
      %v502 = vsel %vm479, %v490, %v501
      %v504 = vshrl.u32 %v473, 16
      %v506 = vrot.slane %v504, 7
      %v507 = vshll.u32 %v473, 16
      %v509 = vor.u32 %v506, %v507
      %v510 = vsel %vm479, %v498, %v509
      %v512 = vshrl.u32 %v474, 16
      %v514 = vrot.slane %v512, 7
      %v515 = vshll.u32 %v474, 16
      %v517 = vor.u32 %v514, %v515
      %v518 = vsel %vm479, %v506, %v517
      %v520 = vshrl.u32 %v475, 16
      %v522 = vrot.slane %v520, 7
      %v523 = vshll.u32 %v475, 16
      %v525 = vor.u32 %v522, %v523
      %v526 = vsel %vm479, %v514, %v525
      %v528 = vshrl.u32 %v476, 16
      %v530 = vrot.slane %v528, 7
      %v531 = vshll.u32 %v476, 16
      %v533 = vor.u32 %v530, %v531
      %v534 = vsel %vm479, %v522, %v533
      %v536 = vshrl.u32 %v477, 16
      %v538 = vrot.slane %v536, 7
      %v539 = vshll.u32 %v477, 16
      %v541 = vor.u32 %v538, %v539
      %v542 = vsel %vm479, %v530, %v541
      %v544 = vshrl.u32 %v478, 16
      %v546 = vrot.slane %v544, 7
      %v547 = vshll.u32 %v478, 16
      %v549 = vor.u32 %v546, %v547
      %v550 = vsel %vm479, %v538, %v549
      %v567 = vunpack.c.l.b16 %v428
      %v568 = vunpack.c.l.b16 %v429
      %v569 = vunpack.c.l.b16 %v430
      %v570 = vunpack.c.l.b16 %v431
      %v571 = vunpack.c.l.b16 %v432
      %v572 = vunpack.c.l.b16 %v433
      %v573 = vpack.c.b16 %v568, %v567
      %v574 = vpack.c.b16 %v570, %v569
      %v575 = vpack.c.b16 %v572, %v571
      %v577 = vshrl.u32 %v573, 16
      %v579 = vrot.slane %v577, 7
      %v580 = vshll.u32 %v573, 16
      %v582 = vor.u32 %v579, %v580
      %v584 = vshrl.u32 %v574, 16
      %v586 = vrot.slane %v584, 7
      %v587 = vshll.u32 %v574, 16
      %v589 = vor.u32 %v586, %v587
      %v590 = vsel %vm479, %v579, %v589
      %v592 = vshrl.u32 %v575, 16
      %v594 = vrot.slane %v592, 7
      %v595 = vshll.u32 %v575, 16
      %v597 = vor.u32 %v594, %v595
      %v598 = vsel %vm479, %v586, %v597
      %vm602 = vcmask 1040384
      %vm603 = vmand %vm602, %vm479
      %v604 = vsel %vm603, 0, %v486
      %v605 = vsel %vm603, %v546, %v582
      %v606 = vlaneseq
      %v607 = vshrl.u32 %v606, 7
      %v608 = vadd.s32 %v607, 8
      %v609 = vadd.s32 %v607, 16
      %v610 = vadd.s32 %v607, 24
      %v611 = vadd.s32 %v607, 32
      %v612 = vadd.s32 %v607, 40
      %v613 = vadd.s32 %v607, 48
      %v614 = vadd.s32 %v607, 56
      %v615 = vadd.s32 %v607, 64
      %v616 = vadd.s32 %v607, 72
      %v617 = vadd.s32 %v607, 80
      %v618 = vadd.s32 %v607, 88
      %v619 = vadd.s32 %v607, 96
      %v620 = vadd.s32 %v607, 104
      %v621 = vadd.s32 %v607, 112
      %v622 = vadd.s32 %v607, 120
      %v623 = vadd.s32 %v607, 128
      %v624 = vadd.s32 %v607, 136
      %v625 = vadd.s32 %v607, 144
      %v626 = vadd.s32 %v607, 152
      %v627 = vadd.s32 %v607, 160
      %v628 = vadd.s32 %v607, 168
      %v629 = vadd.s32 %v607, 176
      %v630 = vadd.s32 %v607, 184
      %s631 = smul.u32 %s24, 144
      %v632 = vstv %s631
      %v633 = vadd.s32 %v632, %v607
      %v634 = vadd.s32 %v632, %v608
      %v635 = vadd.s32 %v632, %v609
      %v636 = vadd.s32 %v632, %v610
      %v637 = vadd.s32 %v632, %v611
      %v638 = vadd.s32 %v632, %v612
      %v639 = vadd.s32 %v632, %v613
      %v640 = vadd.s32 %v632, %v614
      %v641 = vadd.s32 %v632, %v615
      %v642 = vadd.s32 %v632, %v616
      %v643 = vadd.s32 %v632, %v617
      %v644 = vadd.s32 %v632, %v618
      %v645 = vadd.s32 %v632, %v619
      %v646 = vadd.s32 %v632, %v620
      %v647 = vadd.s32 %v632, %v621
      %v648 = vadd.s32 %v632, %v622
      %v649 = vadd.s32 %v632, %v623
      %v650 = vadd.s32 %v632, %v624
      %v651 = vadd.s32 %v632, %v625
      %v652 = vadd.s32 %v632, %v626
      %v653 = vadd.s32 %v632, %v627
      %v654 = vadd.s32 %v632, %v628
      %v655 = vadd.s32 %v632, %v629
      %v656 = vadd.s32 %v632, %v630
      %v657 = vsub.s32 %v633, 1
      %v658 = vsub.s32 %v634, 1
      %v659 = vsub.s32 %v635, 1
      %v660 = vsub.s32 %v636, 1
      %v661 = vsub.s32 %v637, 1
      %v662 = vsub.s32 %v638, 1
      %v663 = vsub.s32 %v639, 1
      %v664 = vsub.s32 %v640, 1
      %v665 = vsub.s32 %v641, 1
      %v666 = vsub.s32 %v642, 1
      %v667 = vsub.s32 %v643, 1
      %v668 = vsub.s32 %v644, 1
      %v669 = vsub.s32 %v645, 1
      %v670 = vsub.s32 %v646, 1
      %v671 = vsub.s32 %v647, 1
      %v672 = vsub.s32 %v648, 1
      %v673 = vsub.s32 %v649, 1
      %v674 = vsub.s32 %v650, 1
      %v675 = vsub.s32 %v651, 1
      %v676 = vsub.s32 %v652, 1
      %v677 = vsub.s32 %v653, 1
      %v678 = vsub.s32 %v654, 1
      %v679 = vsub.s32 %v655, 1
      %v680 = vsub.s32 %v656, 1
      %vm681 = vcmp.lt.s32.totalorder %v657, 0
      %v682 = vsub.s32 0, %v657
      %v683 = vsel %vm681, %v682, %v657
      %v684 = vmul.u32.u64.compose %v683, 3817748708
      %v685 = vextract.low.u32 %v684
      %v686 = vextract.high.u32 %v684
      %v687 = vshrl.u32 %v686, 4
      %v688 = vmul.u32 %v687, 18
      %v689 = vsub.s32 %v683, %v688
      %v690 = vsub.s32 0, %v689
      %v691 = vsel %vm681, %v690, %v689
      %vm692 = vcmp.lt.s32.totalorder %v658, 0
      %v693 = vsub.s32 0, %v658
      %v694 = vsel %vm692, %v693, %v658
      %v695 = vmul.u32.u64.compose %v694, 3817748708
      %v696 = vextract.low.u32 %v695
      %v697 = vextract.high.u32 %v695
      %v698 = vshrl.u32 %v697, 4
      %v699 = vmul.u32 %v698, 18
      %v700 = vsub.s32 %v694, %v699
      %v701 = vsub.s32 0, %v700
      %v702 = vsel %vm692, %v701, %v700
      %vm703 = vcmp.lt.s32.totalorder %v659, 0
      %v704 = vsub.s32 0, %v659
      %v705 = vsel %vm703, %v704, %v659
      %v706 = vmul.u32.u64.compose %v705, 3817748708
      %v707 = vextract.low.u32 %v706
      %v708 = vextract.high.u32 %v706
      %v709 = vshrl.u32 %v708, 4
      %v710 = vmul.u32 %v709, 18
      %v711 = vsub.s32 %v705, %v710
      %v712 = vsub.s32 0, %v711
      %v713 = vsel %vm703, %v712, %v711
      %vm714 = vcmp.lt.s32.totalorder %v660, 0
      %v715 = vsub.s32 0, %v660
      %v716 = vsel %vm714, %v715, %v660
      %v717 = vmul.u32.u64.compose %v716, 3817748708
      %v718 = vextract.low.u32 %v717
      %v719 = vextract.high.u32 %v717
      %v720 = vshrl.u32 %v719, 4
      %v721 = vmul.u32 %v720, 18
      %v722 = vsub.s32 %v716, %v721
      %v723 = vsub.s32 0, %v722
      %v724 = vsel %vm714, %v723, %v722
      %vm725 = vcmp.lt.s32.totalorder %v661, 0
      %v726 = vsub.s32 0, %v661
      %v727 = vsel %vm725, %v726, %v661
      %v728 = vmul.u32.u64.compose %v727, 3817748708
      %v729 = vextract.low.u32 %v728
      %v730 = vextract.high.u32 %v728
      %v731 = vshrl.u32 %v730, 4
      %v732 = vmul.u32 %v731, 18
      %v733 = vsub.s32 %v727, %v732
      %v734 = vsub.s32 0, %v733
      %v735 = vsel %vm725, %v734, %v733
      %vm736 = vcmp.lt.s32.totalorder %v662, 0
      %v737 = vsub.s32 0, %v662
      %v738 = vsel %vm736, %v737, %v662
      %v739 = vmul.u32.u64.compose %v738, 3817748708
      %v740 = vextract.low.u32 %v739
      %v741 = vextract.high.u32 %v739
      %v742 = vshrl.u32 %v741, 4
      %v743 = vmul.u32 %v742, 18
      %v744 = vsub.s32 %v738, %v743
      %v745 = vsub.s32 0, %v744
      %v746 = vsel %vm736, %v745, %v744
      %vm747 = vcmp.lt.s32.totalorder %v663, 0
      %v748 = vsub.s32 0, %v663
      %v749 = vsel %vm747, %v748, %v663
      %v750 = vmul.u32.u64.compose %v749, 3817748708
      %v751 = vextract.low.u32 %v750
      %v752 = vextract.high.u32 %v750
      %v753 = vshrl.u32 %v752, 4
      %v754 = vmul.u32 %v753, 18
      %v755 = vsub.s32 %v749, %v754
      %v756 = vsub.s32 0, %v755
      %v757 = vsel %vm747, %v756, %v755
      %vm758 = vcmp.lt.s32.totalorder %v664, 0
      %v759 = vsub.s32 0, %v664
      %v760 = vsel %vm758, %v759, %v664
      %v761 = vmul.u32.u64.compose %v760, 3817748708
      %v762 = vextract.low.u32 %v761
      %v763 = vextract.high.u32 %v761
      %v764 = vshrl.u32 %v763, 4
      %v765 = vmul.u32 %v764, 18
      %v766 = vsub.s32 %v760, %v765
      %v767 = vsub.s32 0, %v766
      %v768 = vsel %vm758, %v767, %v766
      %vm769 = vcmp.lt.s32.totalorder %v665, 0
      %v770 = vsub.s32 0, %v665
      %v771 = vsel %vm769, %v770, %v665
      %v772 = vmul.u32.u64.compose %v771, 3817748708
      %v773 = vextract.low.u32 %v772
      %v774 = vextract.high.u32 %v772
      %v775 = vshrl.u32 %v774, 4
      %v776 = vmul.u32 %v775, 18
      %v777 = vsub.s32 %v771, %v776
      %v778 = vsub.s32 0, %v777
      %v779 = vsel %vm769, %v778, %v777
      %vm780 = vcmp.lt.s32.totalorder %v666, 0
      %v781 = vsub.s32 0, %v666
      %v782 = vsel %vm780, %v781, %v666
      %v783 = vmul.u32.u64.compose %v782, 3817748708
      %v784 = vextract.low.u32 %v783
      %v785 = vextract.high.u32 %v783
      %v786 = vshrl.u32 %v785, 4
      %v787 = vmul.u32 %v786, 18
      %v788 = vsub.s32 %v782, %v787
      %v789 = vsub.s32 0, %v788
      %v790 = vsel %vm780, %v789, %v788
      %vm791 = vcmp.lt.s32.totalorder %v667, 0
      %v792 = vsub.s32 0, %v667
      %v793 = vsel %vm791, %v792, %v667
      %v794 = vmul.u32.u64.compose %v793, 3817748708
      %v795 = vextract.low.u32 %v794
      %v796 = vextract.high.u32 %v794
      %v797 = vshrl.u32 %v796, 4
      %v798 = vmul.u32 %v797, 18
      %v799 = vsub.s32 %v793, %v798
      %v800 = vsub.s32 0, %v799
      %v801 = vsel %vm791, %v800, %v799
      %vm802 = vcmp.lt.s32.totalorder %v668, 0
      %v803 = vsub.s32 0, %v668
      %v804 = vsel %vm802, %v803, %v668
      %v805 = vmul.u32.u64.compose %v804, 3817748708
      %v806 = vextract.low.u32 %v805
      %v807 = vextract.high.u32 %v805
      %v808 = vshrl.u32 %v807, 4
      %v809 = vmul.u32 %v808, 18
      %v810 = vsub.s32 %v804, %v809
      %v811 = vsub.s32 0, %v810
      %v812 = vsel %vm802, %v811, %v810
      %vm813 = vcmp.lt.s32.totalorder %v669, 0
      %v814 = vsub.s32 0, %v669
      %v815 = vsel %vm813, %v814, %v669
      %v816 = vmul.u32.u64.compose %v815, 3817748708
      %v817 = vextract.low.u32 %v816
      %v818 = vextract.high.u32 %v816
      %v819 = vshrl.u32 %v818, 4
      %v820 = vmul.u32 %v819, 18
      %v821 = vsub.s32 %v815, %v820
      %v822 = vsub.s32 0, %v821
      %v823 = vsel %vm813, %v822, %v821
      %vm824 = vcmp.lt.s32.totalorder %v670, 0
      %v825 = vsub.s32 0, %v670
      %v826 = vsel %vm824, %v825, %v670
      %v827 = vmul.u32.u64.compose %v826, 3817748708
      %v828 = vextract.low.u32 %v827
      %v829 = vextract.high.u32 %v827
      %v830 = vshrl.u32 %v829, 4
      %v831 = vmul.u32 %v830, 18
      %v832 = vsub.s32 %v826, %v831
      %v833 = vsub.s32 0, %v832
      %v834 = vsel %vm824, %v833, %v832
      %vm835 = vcmp.lt.s32.totalorder %v671, 0
      %v836 = vsub.s32 0, %v671
      %v837 = vsel %vm835, %v836, %v671
      %v838 = vmul.u32.u64.compose %v837, 3817748708
      %v839 = vextract.low.u32 %v838
      %v840 = vextract.high.u32 %v838
      %v841 = vshrl.u32 %v840, 4
      %v842 = vmul.u32 %v841, 18
      %v843 = vsub.s32 %v837, %v842
      %v844 = vsub.s32 0, %v843
      %v845 = vsel %vm835, %v844, %v843
      %vm846 = vcmp.lt.s32.totalorder %v672, 0
      %v847 = vsub.s32 0, %v672
      %v848 = vsel %vm846, %v847, %v672
      %v849 = vmul.u32.u64.compose %v848, 3817748708
      %v850 = vextract.low.u32 %v849
      %v851 = vextract.high.u32 %v849
      %v852 = vshrl.u32 %v851, 4
      %v853 = vmul.u32 %v852, 18
      %v854 = vsub.s32 %v848, %v853
      %v855 = vsub.s32 0, %v854
      %v856 = vsel %vm846, %v855, %v854
      %vm857 = vcmp.lt.s32.totalorder %v673, 0
      %v858 = vsub.s32 0, %v673
      %v859 = vsel %vm857, %v858, %v673
      %v860 = vmul.u32.u64.compose %v859, 3817748708
      %v861 = vextract.low.u32 %v860
      %v862 = vextract.high.u32 %v860
      %v863 = vshrl.u32 %v862, 4
      %v864 = vmul.u32 %v863, 18
      %v865 = vsub.s32 %v859, %v864
      %v866 = vsub.s32 0, %v865
      %v867 = vsel %vm857, %v866, %v865
      %vm868 = vcmp.lt.s32.totalorder %v674, 0
      %v869 = vsub.s32 0, %v674
      %v870 = vsel %vm868, %v869, %v674
      %v871 = vmul.u32.u64.compose %v870, 3817748708
      %v872 = vextract.low.u32 %v871
      %v873 = vextract.high.u32 %v871
      %v874 = vshrl.u32 %v873, 4
      %v875 = vmul.u32 %v874, 18
      %v876 = vsub.s32 %v870, %v875
      %v877 = vsub.s32 0, %v876
      %v878 = vsel %vm868, %v877, %v876
      %vm879 = vcmp.lt.s32.totalorder %v675, 0
      %v880 = vsub.s32 0, %v675
      %v881 = vsel %vm879, %v880, %v675
      %v882 = vmul.u32.u64.compose %v881, 3817748708
      %v883 = vextract.low.u32 %v882
      %v884 = vextract.high.u32 %v882
      %v885 = vshrl.u32 %v884, 4
      %v886 = vmul.u32 %v885, 18
      %v887 = vsub.s32 %v881, %v886
      %v888 = vsub.s32 0, %v887
      %v889 = vsel %vm879, %v888, %v887
      %vm890 = vcmp.lt.s32.totalorder %v676, 0
      %v891 = vsub.s32 0, %v676
      %v892 = vsel %vm890, %v891, %v676
      %v893 = vmul.u32.u64.compose %v892, 3817748708
      %v894 = vextract.low.u32 %v893
      %v895 = vextract.high.u32 %v893
      %v896 = vshrl.u32 %v895, 4
      %v897 = vmul.u32 %v896, 18
      %v898 = vsub.s32 %v892, %v897
      %v899 = vsub.s32 0, %v898
      %v900 = vsel %vm890, %v899, %v898
      %vm901 = vcmp.lt.s32.totalorder %v677, 0
      %v902 = vsub.s32 0, %v677
      %v903 = vsel %vm901, %v902, %v677
      %v904 = vmul.u32.u64.compose %v903, 3817748708
      %v905 = vextract.low.u32 %v904
      %v906 = vextract.high.u32 %v904
      %v907 = vshrl.u32 %v906, 4
      %v908 = vmul.u32 %v907, 18
      %v909 = vsub.s32 %v903, %v908
      %v910 = vsub.s32 0, %v909
      %v911 = vsel %vm901, %v910, %v909
      %vm912 = vcmp.lt.s32.totalorder %v678, 0
      %v913 = vsub.s32 0, %v678
      %v914 = vsel %vm912, %v913, %v678
      %v915 = vmul.u32.u64.compose %v914, 3817748708
      %v916 = vextract.low.u32 %v915
      %v917 = vextract.high.u32 %v915
      %v918 = vshrl.u32 %v917, 4
      %v919 = vmul.u32 %v918, 18
      %v920 = vsub.s32 %v914, %v919
      %v921 = vsub.s32 0, %v920
      %v922 = vsel %vm912, %v921, %v920
      %vm923 = vcmp.lt.s32.totalorder %v679, 0
      %v924 = vsub.s32 0, %v679
      %v925 = vsel %vm923, %v924, %v679
      %v926 = vmul.u32.u64.compose %v925, 3817748708
      %v927 = vextract.low.u32 %v926
      %v928 = vextract.high.u32 %v926
      %v929 = vshrl.u32 %v928, 4
      %v930 = vmul.u32 %v929, 18
      %v931 = vsub.s32 %v925, %v930
      %v932 = vsub.s32 0, %v931
      %v933 = vsel %vm923, %v932, %v931
      %vm934 = vcmp.lt.s32.totalorder %v680, 0
      %v935 = vsub.s32 0, %v680
      %v936 = vsel %vm934, %v935, %v680
      %v937 = vmul.u32.u64.compose %v936, 3817748708
      %v938 = vextract.low.u32 %v937
      %v939 = vextract.high.u32 %v937
      %v940 = vshrl.u32 %v939, 4
      %v941 = vmul.u32 %v940, 18
      %v942 = vsub.s32 %v936, %v941
      %v943 = vsub.s32 0, %v942
      %v944 = vsel %vm934, %v943, %v942
      %vm945 = vcmp.ne.s32.totalorder %v691, 0
      %vm946 = vcmp.ne.s32.totalorder %v702, 0
      %vm947 = vcmp.ne.s32.totalorder %v713, 0
      %vm948 = vcmp.ne.s32.totalorder %v724, 0
      %vm949 = vcmp.ne.s32.totalorder %v735, 0
      %vm950 = vcmp.ne.s32.totalorder %v746, 0
      %vm951 = vcmp.ne.s32.totalorder %v757, 0
      %vm952 = vcmp.ne.s32.totalorder %v768, 0
      %vm953 = vcmp.ne.s32.totalorder %v779, 0
      %vm954 = vcmp.ne.s32.totalorder %v790, 0
      %vm955 = vcmp.ne.s32.totalorder %v801, 0
      %vm956 = vcmp.ne.s32.totalorder %v812, 0
      %vm957 = vcmp.ne.s32.totalorder %v823, 0
      %vm958 = vcmp.ne.s32.totalorder %v834, 0
      %vm959 = vcmp.ne.s32.totalorder %v845, 0
      %vm960 = vcmp.ne.s32.totalorder %v856, 0
      %vm961 = vcmp.ne.s32.totalorder %v867, 0
      %vm962 = vcmp.ne.s32.totalorder %v878, 0
      %vm963 = vcmp.ne.s32.totalorder %v889, 0
      %vm964 = vcmp.ne.s32.totalorder %v900, 0
      %vm965 = vcmp.ne.s32.totalorder %v911, 0
      %vm966 = vcmp.ne.s32.totalorder %v922, 0
      %vm967 = vcmp.ne.s32.totalorder %v933, 0
      %vm968 = vcmp.ne.s32.totalorder %v944, 0
      %vm969 = vcmp.lt.s32.totalorder %v691, 0
      %vm970 = vcmp.lt.s32.totalorder %v702, 0
      %vm971 = vcmp.lt.s32.totalorder %v713, 0
      %vm972 = vcmp.lt.s32.totalorder %v724, 0
      %vm973 = vcmp.lt.s32.totalorder %v735, 0
      %vm974 = vcmp.lt.s32.totalorder %v746, 0
      %vm975 = vcmp.lt.s32.totalorder %v757, 0
      %vm976 = vcmp.lt.s32.totalorder %v768, 0
      %vm977 = vcmp.lt.s32.totalorder %v779, 0
      %vm978 = vcmp.lt.s32.totalorder %v790, 0
      %vm979 = vcmp.lt.s32.totalorder %v801, 0
      %vm980 = vcmp.lt.s32.totalorder %v812, 0
      %vm981 = vcmp.lt.s32.totalorder %v823, 0
      %vm982 = vcmp.lt.s32.totalorder %v834, 0
      %vm983 = vcmp.lt.s32.totalorder %v845, 0
      %vm984 = vcmp.lt.s32.totalorder %v856, 0
      %vm985 = vcmp.lt.s32.totalorder %v867, 0
      %vm986 = vcmp.lt.s32.totalorder %v878, 0
      %vm987 = vcmp.lt.s32.totalorder %v889, 0
      %vm988 = vcmp.lt.s32.totalorder %v900, 0
      %vm989 = vcmp.lt.s32.totalorder %v911, 0
      %vm990 = vcmp.lt.s32.totalorder %v922, 0
      %vm991 = vcmp.lt.s32.totalorder %v933, 0
      %vm992 = vcmp.lt.s32.totalorder %v944, 0
      %vm993 = vmand %vm969, %vm945
      %vm994 = vmand %vm970, %vm946
      %vm995 = vmand %vm971, %vm947
      %vm996 = vmand %vm972, %vm948
      %vm997 = vmand %vm973, %vm949
      %vm998 = vmand %vm974, %vm950
      %vm999 = vmand %vm975, %vm951
      %vm1000 = vmand %vm976, %vm952
      %vm1001 = vmand %vm977, %vm953
      %vm1002 = vmand %vm978, %vm954
      %vm1003 = vmand %vm979, %vm955
      %vm1004 = vmand %vm980, %vm956
      %vm1005 = vmand %vm981, %vm957
      %vm1006 = vmand %vm982, %vm958
      %vm1007 = vmand %vm983, %vm959
      %vm1008 = vmand %vm984, %vm960
      %vm1009 = vmand %vm985, %vm961
      %vm1010 = vmand %vm986, %vm962
      %vm1011 = vmand %vm987, %vm963
      %vm1012 = vmand %vm988, %vm964
      %vm1013 = vmand %vm989, %vm965
      %vm1014 = vmand %vm990, %vm966
      %vm1015 = vmand %vm991, %vm967
      %vm1016 = vmand %vm992, %vm968
      %v1017 = vadd.s32 %v691, 18
      %v1018 = vadd.s32 %v702, 18
      %v1019 = vadd.s32 %v713, 18
      %v1020 = vadd.s32 %v724, 18
      %v1021 = vadd.s32 %v735, 18
      %v1022 = vadd.s32 %v746, 18
      %v1023 = vadd.s32 %v757, 18
      %v1024 = vadd.s32 %v768, 18
      %v1025 = vadd.s32 %v779, 18
      %v1026 = vadd.s32 %v790, 18
      %v1027 = vadd.s32 %v801, 18
      %v1028 = vadd.s32 %v812, 18
      %v1029 = vadd.s32 %v823, 18
      %v1030 = vadd.s32 %v834, 18
      %v1031 = vadd.s32 %v845, 18
      %v1032 = vadd.s32 %v856, 18
      %v1033 = vadd.s32 %v867, 18
      %v1034 = vadd.s32 %v878, 18
      %v1035 = vadd.s32 %v889, 18
      %v1036 = vadd.s32 %v900, 18
      %v1037 = vadd.s32 %v911, 18
      %v1038 = vadd.s32 %v922, 18
      %v1039 = vadd.s32 %v933, 18
      %v1040 = vadd.s32 %v944, 18
      %v1041 = vsel %vm993, %v1017, %v691
      %v1042 = vsel %vm994, %v1018, %v702
      %v1043 = vsel %vm995, %v1019, %v713
      %v1044 = vsel %vm996, %v1020, %v724
      %v1045 = vsel %vm997, %v1021, %v735
      %v1046 = vsel %vm998, %v1022, %v746
      %v1047 = vsel %vm999, %v1023, %v757
      %v1048 = vsel %vm1000, %v1024, %v768
      %v1049 = vsel %vm1001, %v1025, %v779
      %v1050 = vsel %vm1002, %v1026, %v790
      %v1051 = vsel %vm1003, %v1027, %v801
      %v1052 = vsel %vm1004, %v1028, %v812
      %v1053 = vsel %vm1005, %v1029, %v823
      %v1054 = vsel %vm1006, %v1030, %v834
      %v1055 = vsel %vm1007, %v1031, %v845
      %v1056 = vsel %vm1008, %v1032, %v856
      %v1057 = vsel %vm1009, %v1033, %v867
      %v1058 = vsel %vm1010, %v1034, %v878
      %v1059 = vsel %vm1011, %v1035, %v889
      %v1060 = vsel %vm1012, %v1036, %v900
      %v1061 = vsel %vm1013, %v1037, %v911
      %v1062 = vsel %vm1014, %v1038, %v922
      %v1063 = vsel %vm1015, %v1039, %v933
      %v1064 = vsel %vm1016, %v1040, %v944
      %vm1065 = vcmp.eq.s32.totalorder %v1041, 0
      %vm1066 = vcmp.eq.s32.totalorder %v1042, 0
      %vm1067 = vcmp.eq.s32.totalorder %v1043, 0
      %vm1068 = vcmp.eq.s32.totalorder %v1044, 0
      %vm1069 = vcmp.eq.s32.totalorder %v1045, 0
      %vm1070 = vcmp.eq.s32.totalorder %v1046, 0
      %vm1071 = vcmp.eq.s32.totalorder %v1047, 0
      %vm1072 = vcmp.eq.s32.totalorder %v1048, 0
      %vm1073 = vcmp.eq.s32.totalorder %v1049, 0
      %vm1074 = vcmp.eq.s32.totalorder %v1050, 0
      %vm1075 = vcmp.eq.s32.totalorder %v1051, 0
      %vm1076 = vcmp.eq.s32.totalorder %v1052, 0
      %vm1077 = vcmp.eq.s32.totalorder %v1053, 0
      %vm1078 = vcmp.eq.s32.totalorder %v1054, 0
      %vm1079 = vcmp.eq.s32.totalorder %v1055, 0
      %vm1080 = vcmp.eq.s32.totalorder %v1056, 0
      %vm1081 = vcmp.eq.s32.totalorder %v1057, 0
      %vm1082 = vcmp.eq.s32.totalorder %v1058, 0
      %vm1083 = vcmp.eq.s32.totalorder %v1059, 0
      %vm1084 = vcmp.eq.s32.totalorder %v1060, 0
      %vm1085 = vcmp.eq.s32.totalorder %v1061, 0
      %vm1086 = vcmp.eq.s32.totalorder %v1062, 0
      %vm1087 = vcmp.eq.s32.totalorder %v1063, 0
      %vm1088 = vcmp.eq.s32.totalorder %v1064, 0
      %vm1089 = vcmp.eq.s32.totalorder %v1041, 17
      %vm1090 = vcmp.eq.s32.totalorder %v1042, 17
      %vm1091 = vcmp.eq.s32.totalorder %v1043, 17
      %vm1092 = vcmp.eq.s32.totalorder %v1044, 17
      %vm1093 = vcmp.eq.s32.totalorder %v1045, 17
      %vm1094 = vcmp.eq.s32.totalorder %v1046, 17
      %vm1095 = vcmp.eq.s32.totalorder %v1047, 17
      %vm1096 = vcmp.eq.s32.totalorder %v1048, 17
      %vm1097 = vcmp.eq.s32.totalorder %v1049, 17
      %vm1098 = vcmp.eq.s32.totalorder %v1050, 17
      %vm1099 = vcmp.eq.s32.totalorder %v1051, 17
      %vm1100 = vcmp.eq.s32.totalorder %v1052, 17
      %vm1101 = vcmp.eq.s32.totalorder %v1053, 17
      %vm1102 = vcmp.eq.s32.totalorder %v1054, 17
      %vm1103 = vcmp.eq.s32.totalorder %v1055, 17
      %vm1104 = vcmp.eq.s32.totalorder %v1056, 17
      %vm1105 = vcmp.eq.s32.totalorder %v1057, 17
      %vm1106 = vcmp.eq.s32.totalorder %v1058, 17
      %vm1107 = vcmp.eq.s32.totalorder %v1059, 17
      %vm1108 = vcmp.eq.s32.totalorder %v1060, 17
      %vm1109 = vcmp.eq.s32.totalorder %v1061, 17
      %vm1110 = vcmp.eq.s32.totalorder %v1062, 17
      %vm1111 = vcmp.eq.s32.totalorder %v1063, 17
      %vm1112 = vcmp.eq.s32.totalorder %v1064, 17
      %vm1113 = vmor %vm1065, %vm1089
      %vm1114 = vmor %vm1066, %vm1090
      %vm1115 = vmor %vm1067, %vm1091
      %vm1116 = vmor %vm1068, %vm1092
      %vm1117 = vmor %vm1069, %vm1093
      %vm1118 = vmor %vm1070, %vm1094
      %vm1119 = vmor %vm1071, %vm1095
      %vm1120 = vmor %vm1072, %vm1096
      %vm1121 = vmor %vm1073, %vm1097
      %vm1122 = vmor %vm1074, %vm1098
      %vm1123 = vmor %vm1075, %vm1099
      %vm1124 = vmor %vm1076, %vm1100
      %vm1125 = vmor %vm1077, %vm1101
      %vm1126 = vmor %vm1078, %vm1102
      %vm1127 = vmor %vm1079, %vm1103
      %vm1128 = vmor %vm1080, %vm1104
      %vm1129 = vmor %vm1081, %vm1105
      %vm1130 = vmor %vm1082, %vm1106
      %vm1131 = vmor %vm1083, %vm1107
      %vm1132 = vmor %vm1084, %vm1108
      %vm1133 = vmor %vm1085, %vm1109
      %vm1134 = vmor %vm1086, %vm1110
      %vm1135 = vmor %vm1087, %vm1111
      %vm1136 = vmor %vm1088, %vm1112
      %vm1137 = vcmp.lt.s32.totalorder %v657, 18
      %vm1138 = vcmp.lt.s32.totalorder %v658, 18
      %vm1139 = vcmp.lt.s32.totalorder %v659, 18
      %vm1140 = vcmp.lt.s32.totalorder %v660, 18
      %vm1141 = vcmp.lt.s32.totalorder %v661, 18
      %vm1142 = vcmp.lt.s32.totalorder %v662, 18
      %vm1143 = vcmp.lt.s32.totalorder %v663, 18
      %vm1144 = vcmp.lt.s32.totalorder %v664, 18
      %vm1145 = vcmp.lt.s32.totalorder %v665, 18
      %vm1146 = vcmp.lt.s32.totalorder %v666, 18
      %vm1147 = vcmp.lt.s32.totalorder %v667, 18
      %vm1148 = vcmp.lt.s32.totalorder %v668, 18
      %vm1149 = vcmp.lt.s32.totalorder %v669, 18
      %vm1150 = vcmp.lt.s32.totalorder %v670, 18
      %vm1151 = vcmp.lt.s32.totalorder %v671, 18
      %vm1152 = vcmp.lt.s32.totalorder %v672, 18
      %vm1153 = vcmp.lt.s32.totalorder %v673, 18
      %vm1154 = vcmp.lt.s32.totalorder %v674, 18
      %vm1155 = vcmp.lt.s32.totalorder %v675, 18
      %vm1156 = vcmp.lt.s32.totalorder %v676, 18
      %vm1157 = vcmp.lt.s32.totalorder %v677, 18
      %vm1158 = vcmp.lt.s32.totalorder %v678, 18
      %vm1159 = vcmp.lt.s32.totalorder %v679, 18
      %vm1160 = vcmp.lt.s32.totalorder %v680, 18
      %vm1161 = vmor %vm1113, %vm1137
      %vm1162 = vmor %vm1114, %vm1138
      %vm1163 = vmor %vm1115, %vm1139
      %vm1164 = vmor %vm1116, %vm1140
      %vm1165 = vmor %vm1117, %vm1141
      %vm1166 = vmor %vm1118, %vm1142
      %vm1167 = vmor %vm1119, %vm1143
      %vm1168 = vmor %vm1120, %vm1144
      %vm1169 = vmor %vm1121, %vm1145
      %vm1170 = vmor %vm1122, %vm1146
      %vm1171 = vmor %vm1123, %vm1147
      %vm1172 = vmor %vm1124, %vm1148
      %vm1173 = vmor %vm1125, %vm1149
      %vm1174 = vmor %vm1126, %vm1150
      %vm1175 = vmor %vm1127, %vm1151
      %vm1176 = vmor %vm1128, %vm1152
      %vm1177 = vmor %vm1129, %vm1153
      %vm1178 = vmor %vm1130, %vm1154
      %vm1179 = vmor %vm1131, %vm1155
      %vm1180 = vmor %vm1132, %vm1156
      %vm1181 = vmor %vm1133, %vm1157
      %vm1182 = vmor %vm1134, %vm1158
      %vm1183 = vmor %vm1135, %vm1159
      %vm1184 = vmor %vm1136, %vm1160
      %vm1185 = vcmp.ge.s32.totalorder %v657, 306
      %vm1186 = vcmp.ge.s32.totalorder %v658, 306
      %vm1187 = vcmp.ge.s32.totalorder %v659, 306
      %vm1188 = vcmp.ge.s32.totalorder %v660, 306
      %vm1189 = vcmp.ge.s32.totalorder %v661, 306
      %vm1190 = vcmp.ge.s32.totalorder %v662, 306
      %vm1191 = vcmp.ge.s32.totalorder %v663, 306
      %vm1192 = vcmp.ge.s32.totalorder %v664, 306
      %vm1193 = vcmp.ge.s32.totalorder %v665, 306
      %vm1194 = vcmp.ge.s32.totalorder %v666, 306
      %vm1195 = vcmp.ge.s32.totalorder %v667, 306
      %vm1196 = vcmp.ge.s32.totalorder %v668, 306
      %vm1197 = vcmp.ge.s32.totalorder %v669, 306
      %vm1198 = vcmp.ge.s32.totalorder %v670, 306
      %vm1199 = vcmp.ge.s32.totalorder %v671, 306
      %vm1200 = vcmp.ge.s32.totalorder %v672, 306
      %vm1201 = vcmp.ge.s32.totalorder %v673, 306
      %vm1202 = vcmp.ge.s32.totalorder %v674, 306
      %vm1203 = vcmp.ge.s32.totalorder %v675, 306
      %vm1204 = vcmp.ge.s32.totalorder %v676, 306
      %vm1205 = vcmp.ge.s32.totalorder %v677, 306
      %vm1206 = vcmp.ge.s32.totalorder %v678, 306
      %vm1207 = vcmp.ge.s32.totalorder %v679, 306
      %vm1208 = vcmp.ge.s32.totalorder %v680, 306
      %vm1209 = vmor %vm1161, %vm1185
      %vm1210 = vmor %vm1162, %vm1186
      %vm1211 = vmor %vm1163, %vm1187
      %vm1212 = vmor %vm1164, %vm1188
      %vm1213 = vmor %vm1165, %vm1189
      %vm1214 = vmor %vm1166, %vm1190
      %vm1215 = vmor %vm1167, %vm1191
      %vm1216 = vmor %vm1168, %vm1192
      %vm1217 = vmor %vm1169, %vm1193
      %vm1218 = vmor %vm1170, %vm1194
      %vm1219 = vmor %vm1171, %vm1195
      %vm1220 = vmor %vm1172, %vm1196
      %vm1221 = vmor %vm1173, %vm1197
      %vm1222 = vmor %vm1174, %vm1198
      %vm1223 = vmor %vm1175, %vm1199
      %vm1224 = vmor %vm1176, %vm1200
      %vm1225 = vmor %vm1177, %vm1201
      %vm1226 = vmor %vm1178, %vm1202
      %vm1227 = vmor %vm1179, %vm1203
      %vm1228 = vmor %vm1180, %vm1204
      %vm1229 = vmor %vm1181, %vm1205
      %vm1230 = vmor %vm1182, %vm1206
      %vm1231 = vmor %vm1183, %vm1207
      %vm1232 = vmor %vm1184, %vm1208
      %v1233 = vunpack.c.l.bf16 %v604
      %v1234 = vunpack.c.h.bf16 %v604
      %v1235 = vunpack.c.l.bf16 %v494
      %v1236 = vunpack.c.h.bf16 %v494
      %v1237 = vunpack.c.l.bf16 %v502
      %v1238 = vunpack.c.h.bf16 %v502
      %v1239 = vunpack.c.l.bf16 %v510
      %v1240 = vunpack.c.h.bf16 %v510
      %v1241 = vunpack.c.l.bf16 %v518
      %v1242 = vunpack.c.h.bf16 %v518
      %v1243 = vunpack.c.l.bf16 %v526
      %v1244 = vunpack.c.h.bf16 %v526
      %v1245 = vunpack.c.l.bf16 %v534
      %v1246 = vunpack.c.h.bf16 %v534
      %v1247 = vunpack.c.l.bf16 %v542
      %v1248 = vunpack.c.h.bf16 %v542
      %v1249 = vunpack.c.l.bf16 %v550
      %v1250 = vunpack.c.h.bf16 %v550
      %v1251 = vunpack.c.l.bf16 %v605
      %v1252 = vunpack.c.h.bf16 %v605
      %v1253 = vunpack.c.l.bf16 %v590
      %v1254 = vunpack.c.h.bf16 %v590
      %v1255 = vunpack.c.l.bf16 %v598
      %v1256 = vunpack.c.h.bf16 %v598
      %v1257 = vld [vmem:[%s4] sm:$0x1]
      %v1259 = vlaneseq
      %v1260 = vshrl.u32 %v1259, 7
      %v1261 = vsub.s32 0, %v1260
      %v1262 = vrot.slane %v1257, %v1261
      %v1264 = vmul.f32 %v1233, %v1262
      %v1265 = vmul.f32 %v1234, %v1262
      %v1266 = vmul.f32 %v1235, %v1262
      %v1267 = vmul.f32 %v1236, %v1262
      %v1268 = vmul.f32 %v1237, %v1262
      %v1269 = vmul.f32 %v1238, %v1262
      %v1270 = vmul.f32 %v1239, %v1262
      %v1271 = vmul.f32 %v1240, %v1262
      %v1272 = vmul.f32 %v1241, %v1262
      %v1273 = vmul.f32 %v1242, %v1262
      %v1274 = vmul.f32 %v1243, %v1262
      %v1275 = vmul.f32 %v1244, %v1262
      %v1276 = vmul.f32 %v1245, %v1262
      %v1277 = vmul.f32 %v1246, %v1262
      %v1278 = vmul.f32 %v1247, %v1262
      %v1279 = vmul.f32 %v1248, %v1262
      %v1280 = vmul.f32 %v1249, %v1262
      %v1281 = vmul.f32 %v1250, %v1262
      %v1282 = vmul.f32 %v1251, %v1262
      %v1283 = vmul.f32 %v1252, %v1262
      %v1284 = vmul.f32 %v1253, %v1262
      %v1285 = vmul.f32 %v1254, %v1262
      %v1286 = vmul.f32 %v1255, %v1262
      %v1287 = vmul.f32 %v1256, %v1262
      %v1288 = vld [vmem:[%s5] sm:$0x1]
      %v1290 = vlaneseq
      %v1291 = vshrl.u32 %v1290, 7
      %v1292 = vsub.s32 0, %v1291
      %v1293 = vrot.slane %v1288, %v1292
      %v1295 = vadd.f32 %v1264, %v1293
      %v1296 = vadd.f32 %v1265, %v1293
      %v1297 = vadd.f32 %v1266, %v1293
      %v1298 = vadd.f32 %v1267, %v1293
      %v1299 = vadd.f32 %v1268, %v1293
      %v1300 = vadd.f32 %v1269, %v1293
      %v1301 = vadd.f32 %v1270, %v1293
      %v1302 = vadd.f32 %v1271, %v1293
      %v1303 = vadd.f32 %v1272, %v1293
      %v1304 = vadd.f32 %v1273, %v1293
      %v1305 = vadd.f32 %v1274, %v1293
      %v1306 = vadd.f32 %v1275, %v1293
      %v1307 = vadd.f32 %v1276, %v1293
      %v1308 = vadd.f32 %v1277, %v1293
      %v1309 = vadd.f32 %v1278, %v1293
      %v1310 = vadd.f32 %v1279, %v1293
      %v1311 = vadd.f32 %v1280, %v1293
      %v1312 = vadd.f32 %v1281, %v1293
      %v1313 = vadd.f32 %v1282, %v1293
      %v1314 = vadd.f32 %v1283, %v1293
      %v1315 = vadd.f32 %v1284, %v1293
      %v1316 = vadd.f32 %v1285, %v1293
      %v1317 = vadd.f32 %v1286, %v1293
      %v1318 = vadd.f32 %v1287, %v1293
      %v1319 = vmax.f32 %v1295, 0.0
      %v1320 = vmax.f32 %v1296, 0.0
      %v1321 = vmax.f32 %v1297, 0.0
      %v1322 = vmax.f32 %v1298, 0.0
      %v1323 = vmax.f32 %v1299, 0.0
      %v1324 = vmax.f32 %v1300, 0.0
      %v1325 = vmax.f32 %v1301, 0.0
      %v1326 = vmax.f32 %v1302, 0.0
      %v1327 = vmax.f32 %v1303, 0.0
      %v1328 = vmax.f32 %v1304, 0.0
      %v1329 = vmax.f32 %v1305, 0.0
      %v1330 = vmax.f32 %v1306, 0.0
      %v1331 = vmax.f32 %v1307, 0.0
      %v1332 = vmax.f32 %v1308, 0.0
      %v1333 = vmax.f32 %v1309, 0.0
      %v1334 = vmax.f32 %v1310, 0.0
      %v1335 = vmax.f32 %v1311, 0.0
      %v1336 = vmax.f32 %v1312, 0.0
      %v1337 = vmax.f32 %v1313, 0.0
      %v1338 = vmax.f32 %v1314, 0.0
      %v1339 = vmax.f32 %v1315, 0.0
      %v1340 = vmax.f32 %v1316, 0.0
      %v1341 = vmax.f32 %v1317, 0.0
      %v1342 = vmax.f32 %v1318, 0.0
      %v1343 = vsel %vm1209, 1, 0
      %v1344 = vsel %vm1210, 1, 0
      %v1345 = vsel %vm1211, 1, 0
      %v1346 = vsel %vm1212, 1, 0
      %v1347 = vsel %vm1213, 1, 0
      %v1348 = vsel %vm1214, 1, 0
      %v1349 = vsel %vm1215, 1, 0
      %v1350 = vsel %vm1216, 1, 0
      %v1351 = vsel %vm1217, 1, 0
      %v1352 = vsel %vm1218, 1, 0
      %v1353 = vsel %vm1219, 1, 0
      %v1354 = vsel %vm1220, 1, 0
      %v1355 = vsel %vm1221, 1, 0
      %v1356 = vsel %vm1222, 1, 0
      %v1357 = vsel %vm1223, 1, 0
      %v1358 = vsel %vm1224, 1, 0
      %v1359 = vsel %vm1225, 1, 0
      %v1360 = vsel %vm1226, 1, 0
      %v1361 = vsel %vm1227, 1, 0
      %v1362 = vsel %vm1228, 1, 0
      %v1363 = vsel %vm1229, 1, 0
      %v1364 = vsel %vm1230, 1, 0
      %v1365 = vsel %vm1231, 1, 0
      %v1366 = vsel %vm1232, 1, 0
      %vm1367 = vcmp.eq.s32.totalorder %v1343, 1
      %vm1368 = vcmp.eq.s32.totalorder %v1344, 1
      %vm1369 = vcmp.eq.s32.totalorder %v1345, 1
      %vm1370 = vcmp.eq.s32.totalorder %v1346, 1
      %vm1371 = vcmp.eq.s32.totalorder %v1347, 1
      %vm1372 = vcmp.eq.s32.totalorder %v1348, 1
      %vm1373 = vcmp.eq.s32.totalorder %v1349, 1
      %vm1374 = vcmp.eq.s32.totalorder %v1350, 1
      %vm1375 = vcmp.eq.s32.totalorder %v1351, 1
      %vm1376 = vcmp.eq.s32.totalorder %v1352, 1
      %vm1377 = vcmp.eq.s32.totalorder %v1353, 1
      %vm1378 = vcmp.eq.s32.totalorder %v1354, 1
      %vm1379 = vcmp.eq.s32.totalorder %v1355, 1
      %vm1380 = vcmp.eq.s32.totalorder %v1356, 1
      %vm1381 = vcmp.eq.s32.totalorder %v1357, 1
      %vm1382 = vcmp.eq.s32.totalorder %v1358, 1
      %vm1383 = vcmp.eq.s32.totalorder %v1359, 1
      %vm1384 = vcmp.eq.s32.totalorder %v1360, 1
      %vm1385 = vcmp.eq.s32.totalorder %v1361, 1
      %vm1386 = vcmp.eq.s32.totalorder %v1362, 1
      %vm1387 = vcmp.eq.s32.totalorder %v1363, 1
      %vm1388 = vcmp.eq.s32.totalorder %v1364, 1
      %vm1389 = vcmp.eq.s32.totalorder %v1365, 1
      %vm1390 = vcmp.eq.s32.totalorder %v1366, 1
      %v1391 = vsel %vm1367, 0.0, %v1319
      %v1392 = vsel %vm1368, 0.0, %v1320
      %v1393 = vsel %vm1369, 0.0, %v1321
      %v1394 = vsel %vm1370, 0.0, %v1322
      %v1395 = vsel %vm1371, 0.0, %v1323
      %v1396 = vsel %vm1372, 0.0, %v1324
      %v1397 = vsel %vm1373, 0.0, %v1325
      %v1398 = vsel %vm1374, 0.0, %v1326
      %v1399 = vsel %vm1375, 0.0, %v1327
      %v1400 = vsel %vm1376, 0.0, %v1328
      %v1401 = vsel %vm1377, 0.0, %v1329
      %v1402 = vsel %vm1378, 0.0, %v1330
      %v1403 = vsel %vm1379, 0.0, %v1331
      %v1404 = vsel %vm1380, 0.0, %v1332
      %v1405 = vsel %vm1381, 0.0, %v1333
      %v1406 = vsel %vm1382, 0.0, %v1334
      %v1407 = vsel %vm1383, 0.0, %v1335
      %v1408 = vsel %vm1384, 0.0, %v1336
      %v1409 = vsel %vm1385, 0.0, %v1337
      %v1410 = vsel %vm1386, 0.0, %v1338
      %v1411 = vsel %vm1387, 0.0, %v1339
      %v1412 = vsel %vm1388, 0.0, %v1340
      %v1413 = vsel %vm1389, 0.0, %v1341
      %v1414 = vsel %vm1390, 0.0, %v1342
      %v1415 = vpack.c.bf16 %v1392, %v1391
      %v1416 = vpack.c.bf16 %v1394, %v1393
      %v1417 = vpack.c.bf16 %v1396, %v1395
      %v1418 = vpack.c.bf16 %v1398, %v1397
      %v1419 = vpack.c.bf16 %v1400, %v1399
      %v1420 = vpack.c.bf16 %v1402, %v1401
      %v1421 = vpack.c.bf16 %v1404, %v1403
      %v1422 = vpack.c.bf16 %v1406, %v1405
      %v1423 = vpack.c.bf16 %v1408, %v1407
      %v1424 = vpack.c.bf16 %v1410, %v1409
      %v1425 = vpack.c.bf16 %v1412, %v1411
      %v1426 = vpack.c.bf16 %v1414, %v1413
      %vm1427 = vsmask.f32 7424
      %v1429 = vshrl.u32 %v1415, 16
      %v1431 = vshll.u32 %v1415, 16
      %v1433 = vrot.slane %v1431, 1
      %v1434 = vor.u32 %v1429, %v1433
      %v1436 = vshll.u32 %v1416, 16
      %v1438 = vrot.slane %v1436, 1
      %v1439 = vsel %vm1427, %v1434, %v1438
      %v1440 = vshrl.u32 %v1416, 16
      %v1442 = vor.u32 %v1440, %v1438
      %v1444 = vshll.u32 %v1417, 16
      %v1446 = vrot.slane %v1444, 1
      %v1447 = vsel %vm1427, %v1442, %v1446
      %v1448 = vshrl.u32 %v1417, 16
      %v1450 = vor.u32 %v1448, %v1446
      %v1452 = vshll.u32 %v1418, 16
      %v1454 = vrot.slane %v1452, 1
      %v1455 = vsel %vm1427, %v1450, %v1454
      %v1456 = vshrl.u32 %v1418, 16
      %v1458 = vor.u32 %v1456, %v1454
      %v1460 = vshll.u32 %v1419, 16
      %v1462 = vrot.slane %v1460, 1
      %v1463 = vsel %vm1427, %v1458, %v1462
      %v1464 = vshrl.u32 %v1419, 16
      %v1466 = vor.u32 %v1464, %v1462
      %v1468 = vshll.u32 %v1420, 16
      %v1470 = vrot.slane %v1468, 1
      %v1471 = vsel %vm1427, %v1466, %v1470
      %v1472 = vshrl.u32 %v1420, 16
      %v1474 = vor.u32 %v1472, %v1470
      %v1476 = vshll.u32 %v1421, 16
      %v1478 = vrot.slane %v1476, 1
      %v1479 = vsel %vm1427, %v1474, %v1478
      %v1480 = vshrl.u32 %v1421, 16
      %v1482 = vor.u32 %v1480, %v1478
      %v1484 = vshll.u32 %v1422, 16
      %v1486 = vrot.slane %v1484, 1
      %v1487 = vsel %vm1427, %v1482, %v1486
      %v1488 = vshrl.u32 %v1422, 16
      %v1490 = vor.u32 %v1488, %v1486
      %v1492 = vshll.u32 %v1423, 16
      %v1494 = vrot.slane %v1492, 1
      %v1495 = vsel %vm1427, %v1490, %v1494
      %v1496 = vshrl.u32 %v1423, 16
      %v1498 = vor.u32 %v1496, %v1494
      %v1500 = vshll.u32 %v1424, 16
      %v1502 = vrot.slane %v1500, 1
      %v1503 = vsel %vm1427, %v1498, %v1502
      %vm1523 = vcmask 1046528
      %v1524 = vrot.slane %v1415, 1
      %v1525 = vrot.slane %v1416, 1
      %v1526 = vsel %vm1523, %v1524, %v1525
      %v1527 = vrot.slane %v1417, 1
      %v1528 = vsel %vm1523, %v1525, %v1527
      %v1529 = vrot.slane %v1418, 1
      %v1530 = vsel %vm1523, %v1527, %v1529
      %v1531 = vrot.slane %v1419, 1
      %v1532 = vsel %vm1523, %v1529, %v1531
      %v1533 = vrot.slane %v1420, 1
      %v1534 = vsel %vm1523, %v1531, %v1533
      %v1535 = vrot.slane %v1421, 1
      %v1536 = vsel %vm1523, %v1533, %v1535
      %v1537 = vrot.slane %v1422, 1
      %v1538 = vsel %vm1523, %v1535, %v1537
      %v1539 = vrot.slane %v1423, 1
      %v1540 = vsel %vm1523, %v1537, %v1539
      %v1541 = vrot.slane %v1424, 1
      %v1542 = vsel %vm1523, %v1539, %v1541
      %v1553 = vrot.slane %v1425, 1
      %v1554 = vsel %vm1523, %v1541, %v1553
      %vm1556 = vsmask.f32 6400
      %v1557 = vrot.slane %v1440, 1
      %v1558 = vrot.slane %v1436, 2
      %v1559 = vor.u32 %v1557, %v1558
      %v1560 = vrot.slane %v1448, 1
      %v1561 = vrot.slane %v1444, 2
      %v1562 = vor.u32 %v1560, %v1561
      %v1563 = vsel %vm1556, %v1559, %v1562
      %v1564 = vrot.slane %v1456, 1
      %v1565 = vrot.slane %v1452, 2
      %v1566 = vor.u32 %v1564, %v1565
      %v1567 = vsel %vm1556, %v1562, %v1566
      %v1568 = vrot.slane %v1464, 1
      %v1569 = vrot.slane %v1460, 2
      %v1570 = vor.u32 %v1568, %v1569
      %v1571 = vsel %vm1556, %v1566, %v1570
      %v1572 = vrot.slane %v1472, 1
      %v1573 = vrot.slane %v1468, 2
      %v1574 = vor.u32 %v1572, %v1573
      %v1575 = vsel %vm1556, %v1570, %v1574
      %v1576 = vrot.slane %v1480, 1
      %v1577 = vrot.slane %v1476, 2
      %v1578 = vor.u32 %v1576, %v1577
      %v1579 = vsel %vm1556, %v1574, %v1578
      %v1580 = vrot.slane %v1488, 1
      %v1581 = vrot.slane %v1484, 2
      %v1582 = vor.u32 %v1580, %v1581
      %v1583 = vsel %vm1556, %v1578, %v1582
      %v1584 = vrot.slane %v1496, 1
      %v1585 = vrot.slane %v1492, 2
      %v1586 = vor.u32 %v1584, %v1585
      %v1587 = vsel %vm1556, %v1582, %v1586
      %v1588 = vshrl.u32 %v1424, 16
      %v1590 = vrot.slane %v1588, 1
      %v1591 = vrot.slane %v1500, 2
      %v1592 = vor.u32 %v1590, %v1591
      %v1593 = vsel %vm1556, %v1586, %v1592
      %v1595 = vshrl.u32 %v1425, 16
      %v1597 = vrot.slane %v1595, 1
      %v1598 = vshll.u32 %v1425, 16
      %v1600 = vrot.slane %v1598, 2
      %v1601 = vor.u32 %v1597, %v1600
      %v1602 = vsel %vm1556, %v1592, %v1601
      %vm1612 = vcmask 1045504
      %v1613 = vrot.slane %v1416, 2
      %v1614 = vrot.slane %v1417, 2
      %v1615 = vsel %vm1612, %v1613, %v1614
      %v1616 = vrot.slane %v1418, 2
      %v1617 = vsel %vm1612, %v1614, %v1616
      %v1618 = vrot.slane %v1419, 2
      %v1619 = vsel %vm1612, %v1616, %v1618
      %v1620 = vrot.slane %v1420, 2
      %v1621 = vsel %vm1612, %v1618, %v1620
      %v1622 = vrot.slane %v1421, 2
      %v1623 = vsel %vm1612, %v1620, %v1622
      %v1624 = vrot.slane %v1422, 2
      %v1625 = vsel %vm1612, %v1622, %v1624
      %v1626 = vrot.slane %v1423, 2
      %v1627 = vsel %vm1612, %v1624, %v1626
      %v1628 = vrot.slane %v1424, 2
      %v1629 = vsel %vm1612, %v1626, %v1628
      %v1630 = vrot.slane %v1425, 2
      %v1631 = vsel %vm1612, %v1628, %v1630
      %v1642 = vrot.slane %v1426, 2
      %v1643 = vsel %vm1612, %v1630, %v1642
      %vm1645 = vsmask.f32 5376
      %v1646 = vrot.slane %v1448, 2
      %v1647 = vrot.slane %v1444, 3
      %v1648 = vor.u32 %v1646, %v1647
      %v1649 = vrot.slane %v1456, 2
      %v1650 = vrot.slane %v1452, 3
      %v1651 = vor.u32 %v1649, %v1650
      %v1652 = vsel %vm1645, %v1648, %v1651
      %v1653 = vrot.slane %v1464, 2
      %v1654 = vrot.slane %v1460, 3
      %v1655 = vor.u32 %v1653, %v1654
      %v1656 = vsel %vm1645, %v1651, %v1655
      %v1657 = vrot.slane %v1472, 2
      %v1658 = vrot.slane %v1468, 3
      %v1659 = vor.u32 %v1657, %v1658
      %v1660 = vsel %vm1645, %v1655, %v1659
      %v1661 = vrot.slane %v1480, 2
      %v1662 = vrot.slane %v1476, 3
      %v1663 = vor.u32 %v1661, %v1662
      %v1664 = vsel %vm1645, %v1659, %v1663
      %v1665 = vrot.slane %v1488, 2
      %v1666 = vrot.slane %v1484, 3
      %v1667 = vor.u32 %v1665, %v1666
      %v1668 = vsel %vm1645, %v1663, %v1667
      %v1669 = vrot.slane %v1496, 2
      %v1670 = vrot.slane %v1492, 3
      %v1671 = vor.u32 %v1669, %v1670
      %v1672 = vsel %vm1645, %v1667, %v1671
      %v1673 = vrot.slane %v1588, 2
      %v1674 = vrot.slane %v1500, 3
      %v1675 = vor.u32 %v1673, %v1674
      %v1676 = vsel %vm1645, %v1671, %v1675
      %v1677 = vrot.slane %v1595, 2
      %v1678 = vrot.slane %v1598, 3
      %v1679 = vor.u32 %v1677, %v1678
      %v1680 = vsel %vm1645, %v1675, %v1679
      %v1682 = vshrl.u32 %v1426, 16
      %v1684 = vrot.slane %v1682, 2
      %v1685 = vshll.u32 %v1426, 16
      %v1687 = vrot.slane %v1685, 3
      %v1688 = vor.u32 %v1684, %v1687
      %v1689 = vsel %vm1645, %v1679, %v1688
      %vm1699 = vcmask 1044480
      %v1700 = vrot.slane %v1417, 3
      %v1701 = vrot.slane %v1418, 3
      %v1702 = vsel %vm1699, %v1700, %v1701
      %v1703 = vrot.slane %v1419, 3
      %v1704 = vsel %vm1699, %v1701, %v1703
      %v1705 = vrot.slane %v1420, 3
      %v1706 = vsel %vm1699, %v1703, %v1705
      %v1707 = vrot.slane %v1421, 3
      %v1708 = vsel %vm1699, %v1705, %v1707
      %v1709 = vrot.slane %v1422, 3
      %v1710 = vsel %vm1699, %v1707, %v1709
      %v1711 = vrot.slane %v1423, 3
      %v1712 = vsel %vm1699, %v1709, %v1711
      %v1713 = vrot.slane %v1424, 3
      %v1714 = vsel %vm1699, %v1711, %v1713
      %v1715 = vrot.slane %v1425, 3
      %v1716 = vsel %vm1699, %v1713, %v1715
      %v1717 = vrot.slane %v1426, 3
      %v1718 = vsel %vm1699, %v1715, %v1717
      %v1728 = vld [vmem:[%s2] sm:$0xf]
      %v1729 = vld [vmem:[%s2 + $0x4] sm:$0xf]
      %v1730 = vld [vmem:[%s2 + $0x8] sm:$0xf]
      %v1731 = vld [vmem:[%s2 + $0xc] sm:$0xf]
      %v1732 = vld [vmem:[%s2 + $0x10] sm:$0xf]
      %v1733 = vld [vmem:[%s2 + $0x14] sm:$0xf]
      %v1734 = vld [vmem:[%s2 + $0x18] sm:$0xf]
      %v1735 = vld [vmem:[%s2 + $0x1c] sm:$0xf]
      %v1736 = vld [vmem:[%s2 + $0x20] sm:$0xf]
      %v1737 = vld [vmem:[%s2 + $0x24] sm:$0xf]
      %v1738 = vld [vmem:[%s2 + $0x28] sm:$0xf]
      %v1739 = vld [vmem:[%s2 + $0x2c] sm:$0xf]
      %v1740 = vld [vmem:[%s2 + $0x30] sm:$0xf]
      %v1741 = vld [vmem:[%s2 + $0x34] sm:$0xf]
      %v1742 = vld [vmem:[%s2 + $0x38] sm:$0xf]
      %v1743 = vld [vmem:[%s2 + $0x3c] sm:$0xf]
      %v1744 = vld [vmem:[%s2 + $0x40] sm:$0xf]
      %v1745 = vld [vmem:[%s2 + $0x44] sm:$0xf]
      %v1746 = vld [vmem:[%s2 + $0x48] sm:$0xf]
      %v1747 = vld [vmem:[%s2 + $0x4c] sm:$0xf]
      %v1748 = vld [vmem:[%s2 + $0x50] sm:$0xf]
      %v1749 = vld [vmem:[%s2 + $0x54] sm:$0xf]
      %v1750 = vld [vmem:[%s2 + $0x58] sm:$0xf]
      %v1751 = vld [vmem:[%s2 + $0x5c] sm:$0xf]
      %v1752 = vld [vmem:[%s2 + $0x60] sm:$0xf]
      %v1753 = vld [vmem:[%s2 + $0x64] sm:$0xf]
      %v1754 = vld [vmem:[%s2 + $0x68] sm:$0xf]
      %v1755 = vld [vmem:[%s2 + $0x6c] sm:$0xf]
      %v1756 = vld [vmem:[%s2 + $0x70] sm:$0xf]
      %v1757 = vld [vmem:[%s2 + $0x74] sm:$0xf]
      %v1758 = vld [vmem:[%s2 + $0x78] sm:$0xf]
      %v1759 = vld [vmem:[%s2 + $0x7c] sm:$0xf]
      %v1760 = vld [vmem:[%s2 + $0x80] sm:$0xf]
      %v1761 = vld [vmem:[%s2 + $0x84] sm:$0xf]
      %v1762 = vld [vmem:[%s2 + $0x88] sm:$0xf]
      %v1763 = vld [vmem:[%s2 + $0x8c] sm:$0xf]
      %v1764 = vld [vmem:[%s2 + $0x90] sm:$0xf]
      %v1765 = vld [vmem:[%s2 + $0x94] sm:$0xf]
      %v1766 = vld [vmem:[%s2 + $0x98] sm:$0xf]
      %v1767 = vld [vmem:[%s2 + $0x9c] sm:$0xf]
      %v1768 = vld [vmem:[%s2 + $0xa0] sm:$0xf]
      %v1769 = vld [vmem:[%s2 + $0xa4] sm:$0xf]
      %v1770 = vld [vmem:[%s2 + $0xa8] sm:$0xf]
      %v1771 = vld [vmem:[%s2 + $0xac] sm:$0xf]
      %v1772 = vld [vmem:[%s2 + $0xb0] sm:$0xf]
      %v1773 = vld [vmem:[%s2 + $0xb4] sm:$0xf]
      %v1774 = vld [vmem:[%s2 + $0xb8] sm:$0xf]
      %v1775 = vld [vmem:[%s2 + $0xbc] sm:$0xf]
      %v1776 = vld [vmem:[%s2 + $0xc0] sm:$0xf]
      %v1777 = vld [vmem:[%s2 + $0xc4] sm:$0xf]
      %v1778 = vld [vmem:[%s2 + $0xc8] sm:$0xf]
      %v1779 = vld [vmem:[%s2 + $0xcc] sm:$0xf]
      %v1780 = vld [vmem:[%s2 + $0xd0] sm:$0xf]
      %v1781 = vld [vmem:[%s2 + $0xd4] sm:$0xf]
      %v1782 = vld [vmem:[%s2 + $0xd8] sm:$0xf]
      %v1783 = vld [vmem:[%s2 + $0xdc] sm:$0xf]
      %v1784 = vld [vmem:[%s2 + $0xe0] sm:$0xf]
      %v1785 = vld [vmem:[%s2 + $0xe4] sm:$0xf]
      %v1786 = vld [vmem:[%s2 + $0xe8] sm:$0xf]
      %v1787 = vld [vmem:[%s2 + $0xec] sm:$0xf]
      %v1788 = vld [vmem:[%s2 + $0xf0] sm:$0xf]
      %v1789 = vld [vmem:[%s2 + $0xf4] sm:$0xf]
      %v1790 = vld [vmem:[%s2 + $0xf8] sm:$0xf]
      %v1791 = vld [vmem:[%s2 + $0xfc] sm:$0xf]
      %v1792 = vld [vmem:[%s2 + $0x100] sm:$0xf]
      %v1793 = vld [vmem:[%s2 + $0x104] sm:$0xf]
      %v1794 = vld [vmem:[%s2 + $0x108] sm:$0xf]
      %v1795 = vld [vmem:[%s2 + $0x10c] sm:$0xf]
      %v1796 = vld [vmem:[%s2 + $0x110] sm:$0xf]
      %v1797 = vld [vmem:[%s2 + $0x114] sm:$0xf]
      %v1798 = vld [vmem:[%s2 + $0x118] sm:$0xf]
      %v1799 = vld [vmem:[%s2 + $0x11c] sm:$0xf]
      %v1800 = vld [vmem:[%s2 + $0x120] sm:$0xf]
      %v1801 = vld [vmem:[%s2 + $0x124] sm:$0xf]
      %v1802 = vld [vmem:[%s2 + $0x128] sm:$0xf]
      %v1803 = vld [vmem:[%s2 + $0x12c] sm:$0xf]
      %v1804 = vld [vmem:[%s2 + $0x130] sm:$0xf]
      %v1805 = vld [vmem:[%s2 + $0x134] sm:$0xf]
      %v1806 = vld [vmem:[%s2 + $0x138] sm:$0xf]
      %v1807 = vld [vmem:[%s2 + $0x13c] sm:$0xf]
      %v1808 = vld [vmem:[%s2 + $0x140] sm:$0xf]
      %v1809 = vld [vmem:[%s2 + $0x144] sm:$0xf]
      %v1810 = vld [vmem:[%s2 + $0x148] sm:$0xf]
      %v1811 = vld [vmem:[%s2 + $0x14c] sm:$0xf]
      %v1812 = vld [vmem:[%s2 + $0x150] sm:$0xf]
      %v1813 = vld [vmem:[%s2 + $0x154] sm:$0xf]
      %v1814 = vld [vmem:[%s2 + $0x158] sm:$0xf]
      %v1815 = vld [vmem:[%s2 + $0x15c] sm:$0xf]
      %v1816 = vld [vmem:[%s2 + $0x160] sm:$0xf]
      %v1817 = vld [vmem:[%s2 + $0x164] sm:$0xf]
      %v1818 = vld [vmem:[%s2 + $0x168] sm:$0xf]
      %v1819 = vld [vmem:[%s2 + $0x16c] sm:$0xf]
      %v1820 = vld [vmem:[%s2 + $0x170] sm:$0xf]
      %v1821 = vld [vmem:[%s2 + $0x174] sm:$0xf]
      %v1822 = vld [vmem:[%s2 + $0x178] sm:$0xf]
      %v1823 = vld [vmem:[%s2 + $0x17c] sm:$0xf]
      %v1824 = vld [vmem:[%s2 + $0x180] sm:$0xf]
      %v1825 = vld [vmem:[%s2 + $0x184] sm:$0xf]
      %v1826 = vld [vmem:[%s2 + $0x188] sm:$0xf]
      %v1827 = vld [vmem:[%s2 + $0x18c] sm:$0xf]
      %v1828 = vld [vmem:[%s2 + $0x190] sm:$0xf]
      %v1829 = vld [vmem:[%s2 + $0x194] sm:$0xf]
      %v1830 = vld [vmem:[%s2 + $0x198] sm:$0xf]
      %v1831 = vld [vmem:[%s2 + $0x19c] sm:$0xf]
      %v1832 = vld [vmem:[%s2 + $0x1a0] sm:$0xf]
      %v1833 = vld [vmem:[%s2 + $0x1a4] sm:$0xf]
      %v1834 = vld [vmem:[%s2 + $0x1a8] sm:$0xf]
      %v1835 = vld [vmem:[%s2 + $0x1ac] sm:$0xf]
      %v1836 = vld [vmem:[%s2 + $0x1b0] sm:$0xf]
      %v1837 = vld [vmem:[%s2 + $0x1b4] sm:$0xf]
      %v1838 = vld [vmem:[%s2 + $0x1b8] sm:$0xf]
      %v1839 = vld [vmem:[%s2 + $0x1bc] sm:$0xf]
      %v1840 = vld [vmem:[%s2 + $0x1c0] sm:$0xf]
      %v1841 = vld [vmem:[%s2 + $0x1c4] sm:$0xf]
      %v1842 = vld [vmem:[%s2 + $0x1c8] sm:$0xf]
      %v1843 = vld [vmem:[%s2 + $0x1cc] sm:$0xf]
      %v1844 = vld [vmem:[%s2 + $0x1d0] sm:$0xf]
      %v1845 = vld [vmem:[%s2 + $0x1d4] sm:$0xf]
      %v1846 = vld [vmem:[%s2 + $0x1d8] sm:$0xf]
      %v1847 = vld [vmem:[%s2 + $0x1dc] sm:$0xf]
      %v1848 = vld [vmem:[%s2 + $0x1e0] sm:$0xf]
      %v1849 = vld [vmem:[%s2 + $0x1e4] sm:$0xf]
      %v1850 = vld [vmem:[%s2 + $0x1e8] sm:$0xf]
      %v1851 = vld [vmem:[%s2 + $0x1ec] sm:$0xf]
      %v1852 = vld [vmem:[%s2 + $0x1f0] sm:$0xf]
      %v1853 = vld [vmem:[%s2 + $0x1f4] sm:$0xf]
      %v1854 = vld [vmem:[%s2 + $0x1f8] sm:$0xf]
      %v1855 = vld [vmem:[%s2 + $0x1fc] sm:$0xf]
      %v1856 = vld [vmem:[%s2 + $0x200] sm:$0xf]
      %v1857 = vld [vmem:[%s2 + $0x204] sm:$0xf]
      %v1858 = vld [vmem:[%s2 + $0x208] sm:$0xf]
      %v1859 = vld [vmem:[%s2 + $0x20c] sm:$0xf]
      %v1860 = vld [vmem:[%s2 + $0x210] sm:$0xf]
      %v1861 = vld [vmem:[%s2 + $0x214] sm:$0xf]
      %v1862 = vld [vmem:[%s2 + $0x218] sm:$0xf]
      %v1863 = vld [vmem:[%s2 + $0x21c] sm:$0xf]
      %v1864 = vld [vmem:[%s2 + $0x220] sm:$0xf]
      %v1865 = vld [vmem:[%s2 + $0x224] sm:$0xf]
      %v1866 = vld [vmem:[%s2 + $0x228] sm:$0xf]
      %v1867 = vld [vmem:[%s2 + $0x22c] sm:$0xf]
      %v1868 = vld [vmem:[%s2 + $0x230] sm:$0xf]
      %v1869 = vld [vmem:[%s2 + $0x234] sm:$0xf]
      %v1870 = vld [vmem:[%s2 + $0x238] sm:$0xf]
      %v1871 = vld [vmem:[%s2 + $0x23c] sm:$0xf]
      %v1872 = vld [vmem:[%s3] sm:$0x1]
      %v1874 = vlaneseq
      %v1875 = vshrl.u32 %v1874, 7
      %v1876 = vsub.s32 0, %v1875
      %v1877 = vrot.slane %v1872, %v1876
      %v2023 = vunpack.c.l.b16 %v1728
      %v2024 = vunpack.c.l.b16 %v1729
      %v2025 = vunpack.c.l.b16 %v1730
      %v2026 = vunpack.c.l.b16 %v1731
      %v2027 = vunpack.c.l.b16 %v1732
      %v2028 = vunpack.c.l.b16 %v1733
      %v2029 = vunpack.c.l.b16 %v1734
      %v2030 = vunpack.c.l.b16 %v1735
      %v2031 = vunpack.c.l.b16 %v1736
      %v2032 = vunpack.c.l.b16 %v1737
      %v2033 = vunpack.c.l.b16 %v1738
      %v2034 = vunpack.c.l.b16 %v1739
      %v2035 = vunpack.c.l.b16 %v1740
      %v2036 = vunpack.c.l.b16 %v1741
      %v2037 = vunpack.c.l.b16 %v1742
      %v2038 = vunpack.c.l.b16 %v1743
      %v2039 = vunpack.c.l.b16 %v1744
      %v2040 = vunpack.c.l.b16 %v1745
      %v2041 = vunpack.c.l.b16 %v1746
      %v2042 = vunpack.c.l.b16 %v1747
      %v2043 = vunpack.c.l.b16 %v1748
      %v2044 = vunpack.c.l.b16 %v1749
      %v2045 = vunpack.c.l.b16 %v1750
      %v2046 = vunpack.c.l.b16 %v1751
      %v2047 = vunpack.c.l.b16 %v1752
      %v2048 = vunpack.c.l.b16 %v1753
      %v2049 = vunpack.c.l.b16 %v1754
      %v2050 = vunpack.c.l.b16 %v1755
      %v2051 = vunpack.c.l.b16 %v1756
      %v2052 = vunpack.c.l.b16 %v1757
      %v2053 = vunpack.c.l.b16 %v1758
      %v2054 = vunpack.c.l.b16 %v1759
      %v2055 = vunpack.c.l.b16 %v1760
      %v2056 = vunpack.c.l.b16 %v1761
      %v2057 = vunpack.c.l.b16 %v1762
      %v2058 = vunpack.c.l.b16 %v1763
      %v2059 = vunpack.c.l.b16 %v1764
      %v2060 = vunpack.c.l.b16 %v1765
      %v2061 = vunpack.c.l.b16 %v1766
      %v2062 = vunpack.c.l.b16 %v1767
      %v2063 = vunpack.c.l.b16 %v1768
      %v2064 = vunpack.c.l.b16 %v1769
      %v2065 = vunpack.c.l.b16 %v1770
      %v2066 = vunpack.c.l.b16 %v1771
      %v2067 = vunpack.c.l.b16 %v1772
      %v2068 = vunpack.c.l.b16 %v1773
      %v2069 = vunpack.c.l.b16 %v1774
      %v2070 = vunpack.c.l.b16 %v1775
      %v2071 = vunpack.c.l.b16 %v1776
      %v2072 = vunpack.c.l.b16 %v1777
      %v2073 = vunpack.c.l.b16 %v1778
      %v2074 = vunpack.c.l.b16 %v1779
      %v2075 = vunpack.c.l.b16 %v1780
      %v2076 = vunpack.c.l.b16 %v1781
      %v2077 = vunpack.c.l.b16 %v1782
      %v2078 = vunpack.c.l.b16 %v1783
      %v2079 = vunpack.c.l.b16 %v1784
      %v2080 = vunpack.c.l.b16 %v1785
      %v2081 = vunpack.c.l.b16 %v1786
      %v2082 = vunpack.c.l.b16 %v1787
      %v2083 = vunpack.c.l.b16 %v1788
      %v2084 = vunpack.c.l.b16 %v1789
      %v2085 = vunpack.c.l.b16 %v1790
      %v2086 = vunpack.c.l.b16 %v1791
      %v2087 = vunpack.c.l.b16 %v1792
      %v2088 = vunpack.c.l.b16 %v1793
      %v2089 = vunpack.c.l.b16 %v1794
      %v2090 = vunpack.c.l.b16 %v1795
      %v2091 = vunpack.c.l.b16 %v1796
      %v2092 = vunpack.c.l.b16 %v1797
      %v2093 = vunpack.c.l.b16 %v1798
      %v2094 = vunpack.c.l.b16 %v1799
      %v2095 = vunpack.c.l.b16 %v1800
      %v2096 = vunpack.c.l.b16 %v1801
      %v2097 = vunpack.c.l.b16 %v1802
      %v2098 = vunpack.c.l.b16 %v1803
      %v2099 = vunpack.c.l.b16 %v1804
      %v2100 = vunpack.c.l.b16 %v1805
      %v2101 = vunpack.c.l.b16 %v1806
      %v2102 = vunpack.c.l.b16 %v1807
      %v2103 = vunpack.c.l.b16 %v1808
      %v2104 = vunpack.c.l.b16 %v1809
      %v2105 = vunpack.c.l.b16 %v1810
      %v2106 = vunpack.c.l.b16 %v1811
      %v2107 = vunpack.c.l.b16 %v1812
      %v2108 = vunpack.c.l.b16 %v1813
      %v2109 = vunpack.c.l.b16 %v1814
      %v2110 = vunpack.c.l.b16 %v1815
      %v2111 = vunpack.c.l.b16 %v1816
      %v2112 = vunpack.c.l.b16 %v1817
      %v2113 = vunpack.c.l.b16 %v1818
      %v2114 = vunpack.c.l.b16 %v1819
      %v2115 = vunpack.c.l.b16 %v1820
      %v2116 = vunpack.c.l.b16 %v1821
      %v2117 = vunpack.c.l.b16 %v1822
      %v2118 = vunpack.c.l.b16 %v1823
      %v2119 = vunpack.c.l.b16 %v1824
      %v2120 = vunpack.c.l.b16 %v1825
      %v2121 = vunpack.c.l.b16 %v1826
      %v2122 = vunpack.c.l.b16 %v1827
      %v2123 = vunpack.c.l.b16 %v1828
      %v2124 = vunpack.c.l.b16 %v1829
      %v2125 = vunpack.c.l.b16 %v1830
      %v2126 = vunpack.c.l.b16 %v1831
      %v2127 = vunpack.c.l.b16 %v1832
      %v2128 = vunpack.c.l.b16 %v1833
      %v2129 = vunpack.c.l.b16 %v1834
      %v2130 = vunpack.c.l.b16 %v1835
      %v2131 = vunpack.c.l.b16 %v1836
      %v2132 = vunpack.c.l.b16 %v1837
      %v2133 = vunpack.c.l.b16 %v1838
      %v2134 = vunpack.c.l.b16 %v1839
      %v2135 = vunpack.c.l.b16 %v1840
      %v2136 = vunpack.c.l.b16 %v1841
      %v2137 = vunpack.c.l.b16 %v1842
      %v2138 = vunpack.c.l.b16 %v1843
      %v2139 = vunpack.c.l.b16 %v1844
      %v2140 = vunpack.c.l.b16 %v1845
      %v2141 = vunpack.c.l.b16 %v1846
      %v2142 = vunpack.c.l.b16 %v1847
      %v2143 = vunpack.c.l.b16 %v1848
      %v2144 = vunpack.c.l.b16 %v1849
      %v2145 = vunpack.c.l.b16 %v1850
      %v2146 = vunpack.c.l.b16 %v1851
      %v2147 = vunpack.c.l.b16 %v1852
      %v2148 = vunpack.c.l.b16 %v1853
      %v2149 = vunpack.c.l.b16 %v1854
      %v2150 = vunpack.c.l.b16 %v1855
      %v2151 = vunpack.c.l.b16 %v1856
      %v2152 = vunpack.c.l.b16 %v1857
      %v2153 = vunpack.c.l.b16 %v1858
      %v2154 = vunpack.c.l.b16 %v1859
      %v2155 = vunpack.c.l.b16 %v1860
      %v2156 = vunpack.c.l.b16 %v1861
      %v2157 = vunpack.c.l.b16 %v1862
      %v2158 = vunpack.c.l.b16 %v1863
      %v2159 = vunpack.c.l.b16 %v1864
      %v2160 = vunpack.c.l.b16 %v1865
      %v2161 = vunpack.c.l.b16 %v1866
      %v2162 = vunpack.c.l.b16 %v1867
      %v2163 = vunpack.c.l.b16 %v1868
      %v2164 = vunpack.c.l.b16 %v1869
      %v2165 = vunpack.c.l.b16 %v1870
      %v2166 = vunpack.c.l.b16 %v1871
      %v2167 = vpack.c.b16 %v2024, %v2023
      %v2168 = vpack.c.b16 %v2026, %v2025
      %v2169 = vpack.c.b16 %v2028, %v2027
      %v2170 = vpack.c.b16 %v2030, %v2029
      %v2171 = vpack.c.b16 %v2032, %v2031
      %v2172 = vpack.c.b16 %v2034, %v2033
      %v2173 = vpack.c.b16 %v2036, %v2035
      %v2174 = vpack.c.b16 %v2038, %v2037
      %v2175 = vpack.c.b16 %v2040, %v2039
      %v2176 = vpack.c.b16 %v2042, %v2041
      %v2177 = vpack.c.b16 %v2044, %v2043
      %v2178 = vpack.c.b16 %v2046, %v2045
      %v2179 = vpack.c.b16 %v2048, %v2047
      %v2180 = vpack.c.b16 %v2050, %v2049
      %v2181 = vpack.c.b16 %v2052, %v2051
      %v2182 = vpack.c.b16 %v2054, %v2053
      %v2183 = vpack.c.b16 %v2056, %v2055
      %v2184 = vpack.c.b16 %v2058, %v2057
      %v2185 = vpack.c.b16 %v2060, %v2059
      %v2186 = vpack.c.b16 %v2062, %v2061
      %v2187 = vpack.c.b16 %v2064, %v2063
      %v2188 = vpack.c.b16 %v2066, %v2065
      %v2189 = vpack.c.b16 %v2068, %v2067
      %v2190 = vpack.c.b16 %v2070, %v2069
      %v2191 = vpack.c.b16 %v2072, %v2071
      %v2192 = vpack.c.b16 %v2074, %v2073
      %v2193 = vpack.c.b16 %v2076, %v2075
      %v2194 = vpack.c.b16 %v2078, %v2077
      %v2195 = vpack.c.b16 %v2080, %v2079
      %v2196 = vpack.c.b16 %v2082, %v2081
      %v2197 = vpack.c.b16 %v2084, %v2083
      %v2198 = vpack.c.b16 %v2086, %v2085
      %v2199 = vpack.c.b16 %v2088, %v2087
      %v2200 = vpack.c.b16 %v2090, %v2089
      %v2201 = vpack.c.b16 %v2092, %v2091
      %v2202 = vpack.c.b16 %v2094, %v2093
      %v2203 = vpack.c.b16 %v2096, %v2095
      %v2204 = vpack.c.b16 %v2098, %v2097
      %v2205 = vpack.c.b16 %v2100, %v2099
      %v2206 = vpack.c.b16 %v2102, %v2101
      %v2207 = vpack.c.b16 %v2104, %v2103
      %v2208 = vpack.c.b16 %v2106, %v2105
      %v2209 = vpack.c.b16 %v2108, %v2107
      %v2210 = vpack.c.b16 %v2110, %v2109
      %v2211 = vpack.c.b16 %v2112, %v2111
      %v2212 = vpack.c.b16 %v2114, %v2113
      %v2213 = vpack.c.b16 %v2116, %v2115
      %v2214 = vpack.c.b16 %v2118, %v2117
      %v2215 = vpack.c.b16 %v2120, %v2119
      %v2216 = vpack.c.b16 %v2122, %v2121
      %v2217 = vpack.c.b16 %v2124, %v2123
      %v2218 = vpack.c.b16 %v2126, %v2125
      %v2219 = vpack.c.b16 %v2128, %v2127
      %v2220 = vpack.c.b16 %v2130, %v2129
      %v2221 = vpack.c.b16 %v2132, %v2131
      %v2222 = vpack.c.b16 %v2134, %v2133
      %v2223 = vpack.c.b16 %v2136, %v2135
      %v2224 = vpack.c.b16 %v2138, %v2137
      %v2225 = vpack.c.b16 %v2140, %v2139
      %v2226 = vpack.c.b16 %v2142, %v2141
      %v2227 = vpack.c.b16 %v2144, %v2143
      %v2228 = vpack.c.b16 %v2146, %v2145
      %v2229 = vpack.c.b16 %v2148, %v2147
      %v2230 = vpack.c.b16 %v2150, %v2149
      %v2231 = vpack.c.b16 %v2152, %v2151
      %v2232 = vpack.c.b16 %v2154, %v2153
      %v2233 = vpack.c.b16 %v2156, %v2155
      %v2234 = vpack.c.b16 %v2158, %v2157
      %v2235 = vpack.c.b16 %v2160, %v2159
      %v2236 = vpack.c.b16 %v2162, %v2161
      %v2237 = vpack.c.b16 %v2164, %v2163
      %v2238 = vpack.c.b16 %v2166, %v2165
      %2311 = vmatprep.subr.bf16.mxu0 0
      %2312 = vmatpush1.bf16.msra.mxu0 %v2174
      %2313 = vmatprep.subr.bf16.mxu0 0
      %2314 = vmatpush1.bf16.msra.mxu0 %v2173
      %2315 = vmatprep.subr.bf16.mxu0 0
      %2316 = vmatpush1.bf16.msra.mxu0 %v2172
      %2317 = vmatprep.subr.bf16.mxu0 0
      %2318 = vmatpush1.bf16.msra.mxu0 %v2171
      %2319 = vmatprep.subr.bf16.mxu0 0
      %2320 = vmatpush1.bf16.msra.mxu0 %v2170
      %2321 = vmatprep.subr.bf16.mxu0 0
      %2322 = vmatpush1.bf16.msra.mxu0 %v2169
      %2323 = vmatprep.subr.bf16.mxu0 0
      %2324 = vmatpush1.bf16.msra.mxu0 %v2168
      %2325 = vmatprep.subr.bf16.mxu0 0
      %2326 = vmatpush1.bf16.msra.mxu0 %v2167
      %2327 = vmatprep.subr.bf16.mxu0 0
      %2328 = vmatpush2.bf16.msra.mxu0 %v2182
      %2329 = vmatprep.subr.bf16.mxu0 0
      %2330 = vmatpush2.bf16.msra.mxu0 %v2181
      %2331 = vmatprep.subr.bf16.mxu0 0
      %2332 = vmatpush2.bf16.msra.mxu0 %v2180
      %2333 = vmatprep.subr.bf16.mxu0 0
      %2334 = vmatpush2.bf16.msra.mxu0 %v2179
      %2335 = vmatprep.subr.bf16.mxu0 0
      %2336 = vmatpush2.bf16.msra.mxu0 %v2178
      %2337 = vmatprep.subr.bf16.mxu0 0
      %2338 = vmatpush2.bf16.msra.mxu0 %v2177
      %2339 = vmatprep.subr.bf16.mxu0 0
      %2340 = vmatpush2.bf16.msra.mxu0 %v2176
      %2341 = vmatprep.subr.bf16.mxu0 0
      %2342 = vmatpush2.bf16.msra.mxu0 %v2175
      %2343 = vmatprep.mubr.bf16.mxu0 %v1439
      %2344 = vmatmul.mubr.bf16.gmra.mxu0 %v1415
      %v2345 = vpop.f32.mrf.mxu0
      %v2346 = vadd.f32 %v1877, %v2345
      %v2347 = vpop.f32.mrf.mxu0
      %v2348 = vpop.f32.mrf.mxu0
      %v2349 = vadd.f32 %v1877, %v2348
      %v2350 = vpop.f32.mrf.mxu0
      %2351 = vmatprep.mubr.bf16.mxu0 %v1447
      %2352 = vmatmul.mubr.bf16.gmra.mxu0 %v1416
      %v2353 = vpop.f32.mrf.mxu0
      %v2354 = vadd.f32 %v1877, %v2353
      %v2355 = vpop.f32.mrf.mxu0
      %v2356 = vpop.f32.mrf.mxu0
      %v2357 = vadd.f32 %v1877, %v2356
      %v2358 = vpop.f32.mrf.mxu0
      %2359 = vmatprep.mubr.bf16.mxu0 %v1455
      %2360 = vmatmul.mubr.bf16.gmra.mxu0 %v1417
      %v2361 = vpop.f32.mrf.mxu0
      %v2362 = vadd.f32 %v1877, %v2361
      %v2363 = vpop.f32.mrf.mxu0
      %v2364 = vpop.f32.mrf.mxu0
      %v2365 = vadd.f32 %v1877, %v2364
      %v2366 = vpop.f32.mrf.mxu0
      %2367 = vmatprep.mubr.bf16.mxu0 %v1463
      %2368 = vmatmul.mubr.bf16.gmra.mxu0 %v1418
      %v2369 = vpop.f32.mrf.mxu0
      %v2370 = vadd.f32 %v1877, %v2369
      %v2371 = vpop.f32.mrf.mxu0
      %v2372 = vpop.f32.mrf.mxu0
      %v2373 = vadd.f32 %v1877, %v2372
      %v2374 = vpop.f32.mrf.mxu0
      %2375 = vmatprep.mubr.bf16.mxu0 %v1471
      %2376 = vmatmul.mubr.bf16.gmra.mxu0 %v1419
      %v2377 = vpop.f32.mrf.mxu0
      %v2378 = vadd.f32 %v1877, %v2377
      %v2379 = vpop.f32.mrf.mxu0
      %v2380 = vpop.f32.mrf.mxu0
      %v2381 = vadd.f32 %v1877, %v2380
      %v2382 = vpop.f32.mrf.mxu0
      %2383 = vmatprep.mubr.bf16.mxu0 %v1479
      %2384 = vmatmul.mubr.bf16.gmra.mxu0 %v1420
      %v2385 = vpop.f32.mrf.mxu0
      %v2386 = vadd.f32 %v1877, %v2385
      %v2387 = vpop.f32.mrf.mxu0
      %v2388 = vpop.f32.mrf.mxu0
      %v2389 = vadd.f32 %v1877, %v2388
      %v2390 = vpop.f32.mrf.mxu0
      %2391 = vmatprep.mubr.bf16.mxu0 %v1487
      %2392 = vmatmul.mubr.bf16.gmra.mxu0 %v1421
      %v2393 = vpop.f32.mrf.mxu0
      %v2394 = vadd.f32 %v1877, %v2393
      %v2395 = vpop.f32.mrf.mxu0
      %v2396 = vpop.f32.mrf.mxu0
      %v2397 = vadd.f32 %v1877, %v2396
      %v2398 = vpop.f32.mrf.mxu0
      %2399 = vmatprep.mubr.bf16.mxu0 %v1495
      %2400 = vmatmul.mubr.bf16.gmra.mxu0 %v1422
      %v2401 = vpop.f32.mrf.mxu0
      %v2402 = vadd.f32 %v1877, %v2401
      %v2403 = vpop.f32.mrf.mxu0
      %v2404 = vpop.f32.mrf.mxu0
      %v2405 = vadd.f32 %v1877, %v2404
      %v2406 = vpop.f32.mrf.mxu0
      %2407 = vmatprep.mubr.bf16.mxu0 %v1503
      %2408 = vmatmul.mubr.bf16.gmra.mxu0 %v1423
      %v2409 = vpop.f32.mrf.mxu0
      %v2410 = vadd.f32 %v1877, %v2409
      %v2411 = vpop.f32.mrf.mxu0
      %v2412 = vpop.f32.mrf.mxu0
      %v2413 = vadd.f32 %v1877, %v2412
      %v2414 = vpop.f32.mrf.mxu0
      %2415 = vdwg.mxu0
      %2416 = vmatprep.subr.bf16.mxu0 0
      %2417 = vmatpush1.bf16.msra.mxu0 %v2190
      %2418 = vmatprep.subr.bf16.mxu0 0
      %2419 = vmatpush1.bf16.msra.mxu0 %v2189
      %2420 = vmatprep.subr.bf16.mxu0 0
      %2421 = vmatpush1.bf16.msra.mxu0 %v2188
      %2422 = vmatprep.subr.bf16.mxu0 0
      %2423 = vmatpush1.bf16.msra.mxu0 %v2187
      %2424 = vmatprep.subr.bf16.mxu0 0
      %2425 = vmatpush1.bf16.msra.mxu0 %v2186
      %2426 = vmatprep.subr.bf16.mxu0 0
      %2427 = vmatpush1.bf16.msra.mxu0 %v2185
      %2428 = vmatprep.subr.bf16.mxu0 0
      %2429 = vmatpush1.bf16.msra.mxu0 %v2184
      %2430 = vmatprep.subr.bf16.mxu0 0
      %2431 = vmatpush1.bf16.msra.mxu0 %v2183
      %2432 = vmatprep.subr.bf16.mxu0 0
      %2433 = vmatpush2.bf16.msra.mxu0 %v2198
      %2434 = vmatprep.subr.bf16.mxu0 0
      %2435 = vmatpush2.bf16.msra.mxu0 %v2197
      %2436 = vmatprep.subr.bf16.mxu0 0
      %2437 = vmatpush2.bf16.msra.mxu0 %v2196
      %2438 = vmatprep.subr.bf16.mxu0 0
      %2439 = vmatpush2.bf16.msra.mxu0 %v2195
      %2440 = vmatprep.subr.bf16.mxu0 0
      %2441 = vmatpush2.bf16.msra.mxu0 %v2194
      %2442 = vmatprep.subr.bf16.mxu0 0
      %2443 = vmatpush2.bf16.msra.mxu0 %v2193
      %2444 = vmatprep.subr.bf16.mxu0 0
      %2445 = vmatpush2.bf16.msra.mxu0 %v2192
      %2446 = vmatprep.subr.bf16.mxu0 0
      %2447 = vmatpush2.bf16.msra.mxu0 %v2191
      %2448 = vmatprep.mubr.bf16.mxu0 %v1528
      %2449 = vmatmul.mubr.bf16.gmra.mxu0 %v1526
      %v2450 = vpop.f32.mrf.mxu0
      %v2451 = vadd.f32 %v2346, %v2450
      %v2452 = vpop.f32.mrf.mxu0
      %v2453 = vpop.f32.mrf.mxu0
      %v2454 = vadd.f32 %v2349, %v2453
      %v2455 = vpop.f32.mrf.mxu0
      %2456 = vmatprep.mubr.bf16.mxu0 %v1530
      %2457 = vmatmul.mubr.bf16.gmra.mxu0 %v1528
      %v2458 = vpop.f32.mrf.mxu0
      %v2459 = vadd.f32 %v2354, %v2458
      %v2460 = vpop.f32.mrf.mxu0
      %v2461 = vpop.f32.mrf.mxu0
      %v2462 = vadd.f32 %v2357, %v2461
      %v2463 = vpop.f32.mrf.mxu0
      %2464 = vmatprep.mubr.bf16.mxu0 %v1532
      %2465 = vmatmul.mubr.bf16.gmra.mxu0 %v1530
      %v2466 = vpop.f32.mrf.mxu0
      %v2467 = vadd.f32 %v2362, %v2466
      %v2468 = vpop.f32.mrf.mxu0
      %v2469 = vpop.f32.mrf.mxu0
      %v2470 = vadd.f32 %v2365, %v2469
      %v2471 = vpop.f32.mrf.mxu0
      %2472 = vmatprep.mubr.bf16.mxu0 %v1534
      %2473 = vmatmul.mubr.bf16.gmra.mxu0 %v1532
      %v2474 = vpop.f32.mrf.mxu0
      %v2475 = vadd.f32 %v2370, %v2474
      %v2476 = vpop.f32.mrf.mxu0
      %v2477 = vpop.f32.mrf.mxu0
      %v2478 = vadd.f32 %v2373, %v2477
      %v2479 = vpop.f32.mrf.mxu0
      %2480 = vmatprep.mubr.bf16.mxu0 %v1536
      %2481 = vmatmul.mubr.bf16.gmra.mxu0 %v1534
      %v2482 = vpop.f32.mrf.mxu0
      %v2483 = vadd.f32 %v2378, %v2482
      %v2484 = vpop.f32.mrf.mxu0
      %v2485 = vpop.f32.mrf.mxu0
      %v2486 = vadd.f32 %v2381, %v2485
      %v2487 = vpop.f32.mrf.mxu0
      %2488 = vmatprep.mubr.bf16.mxu0 %v1538
      %2489 = vmatmul.mubr.bf16.gmra.mxu0 %v1536
      %v2490 = vpop.f32.mrf.mxu0
      %v2491 = vadd.f32 %v2386, %v2490
      %v2492 = vpop.f32.mrf.mxu0
      %v2493 = vpop.f32.mrf.mxu0
      %v2494 = vadd.f32 %v2389, %v2493
      %v2495 = vpop.f32.mrf.mxu0
      %2496 = vmatprep.mubr.bf16.mxu0 %v1540
      %2497 = vmatmul.mubr.bf16.gmra.mxu0 %v1538
      %v2498 = vpop.f32.mrf.mxu0
      %v2499 = vadd.f32 %v2394, %v2498
      %v2500 = vpop.f32.mrf.mxu0
      %v2501 = vpop.f32.mrf.mxu0
      %v2502 = vadd.f32 %v2397, %v2501
      %v2503 = vpop.f32.mrf.mxu0
      %2504 = vmatprep.mubr.bf16.mxu0 %v1542
      %2505 = vmatmul.mubr.bf16.gmra.mxu0 %v1540
      %v2506 = vpop.f32.mrf.mxu0
      %v2507 = vadd.f32 %v2402, %v2506
      %v2508 = vpop.f32.mrf.mxu0
      %v2509 = vpop.f32.mrf.mxu0
      %v2510 = vadd.f32 %v2405, %v2509
      %v2511 = vpop.f32.mrf.mxu0
      %2512 = vmatprep.mubr.bf16.mxu0 %v1554
      %2513 = vmatmul.mubr.bf16.gmra.mxu0 %v1542
      %v2514 = vpop.f32.mrf.mxu0
      %v2515 = vadd.f32 %v2410, %v2514
      %v2516 = vpop.f32.mrf.mxu0
      %v2517 = vpop.f32.mrf.mxu0
      %v2518 = vadd.f32 %v2413, %v2517
      %v2519 = vpop.f32.mrf.mxu0
      %2520 = vdwg.mxu0
      %2521 = vmatprep.subr.bf16.mxu0 0
      %2522 = vmatpush1.bf16.msra.mxu0 %v2206
      %2523 = vmatprep.subr.bf16.mxu0 0
      %2524 = vmatpush1.bf16.msra.mxu0 %v2205
      %2525 = vmatprep.subr.bf16.mxu0 0
      %2526 = vmatpush1.bf16.msra.mxu0 %v2204
      %2527 = vmatprep.subr.bf16.mxu0 0
      %2528 = vmatpush1.bf16.msra.mxu0 %v2203
      %2529 = vmatprep.subr.bf16.mxu0 0
      %2530 = vmatpush1.bf16.msra.mxu0 %v2202
      %2531 = vmatprep.subr.bf16.mxu0 0
      %2532 = vmatpush1.bf16.msra.mxu0 %v2201
      %2533 = vmatprep.subr.bf16.mxu0 0
      %2534 = vmatpush1.bf16.msra.mxu0 %v2200
      %2535 = vmatprep.subr.bf16.mxu0 0
      %2536 = vmatpush1.bf16.msra.mxu0 %v2199
      %2537 = vmatprep.subr.bf16.mxu0 0
      %2538 = vmatpush2.bf16.msra.mxu0 %v2214
      %2539 = vmatprep.subr.bf16.mxu0 0
      %2540 = vmatpush2.bf16.msra.mxu0 %v2213
      %2541 = vmatprep.subr.bf16.mxu0 0
      %2542 = vmatpush2.bf16.msra.mxu0 %v2212
      %2543 = vmatprep.subr.bf16.mxu0 0
      %2544 = vmatpush2.bf16.msra.mxu0 %v2211
      %2545 = vmatprep.subr.bf16.mxu0 0
      %2546 = vmatpush2.bf16.msra.mxu0 %v2210
      %2547 = vmatprep.subr.bf16.mxu0 0
      %2548 = vmatpush2.bf16.msra.mxu0 %v2209
      %2549 = vmatprep.subr.bf16.mxu0 0
      %2550 = vmatpush2.bf16.msra.mxu0 %v2208
      %2551 = vmatprep.subr.bf16.mxu0 0
      %2552 = vmatpush2.bf16.msra.mxu0 %v2207
      %2553 = vmatprep.mubr.bf16.mxu0 %v1615
      %2554 = vmatmul.mubr.bf16.gmra.mxu0 %v1563
      %v2555 = vpop.f32.mrf.mxu0
      %v2556 = vadd.f32 %v2451, %v2555
      %v2557 = vpop.f32.mrf.mxu0
      %v2558 = vpop.f32.mrf.mxu0
      %v2559 = vadd.f32 %v2454, %v2558
      %v2560 = vpop.f32.mrf.mxu0
      %2561 = vmatprep.mubr.bf16.mxu0 %v1617
      %2562 = vmatmul.mubr.bf16.gmra.mxu0 %v1567
      %v2563 = vpop.f32.mrf.mxu0
      %v2564 = vadd.f32 %v2459, %v2563
      %v2565 = vpop.f32.mrf.mxu0
      %v2566 = vpop.f32.mrf.mxu0
      %v2567 = vadd.f32 %v2462, %v2566
      %v2568 = vpop.f32.mrf.mxu0
      %2569 = vmatprep.mubr.bf16.mxu0 %v1619
      %2570 = vmatmul.mubr.bf16.gmra.mxu0 %v1571
      %v2571 = vpop.f32.mrf.mxu0
      %v2572 = vadd.f32 %v2467, %v2571
      %v2573 = vpop.f32.mrf.mxu0
      %v2574 = vpop.f32.mrf.mxu0
      %v2575 = vadd.f32 %v2470, %v2574
      %v2576 = vpop.f32.mrf.mxu0
      %2577 = vmatprep.mubr.bf16.mxu0 %v1621
      %2578 = vmatmul.mubr.bf16.gmra.mxu0 %v1575
      %v2579 = vpop.f32.mrf.mxu0
      %v2580 = vadd.f32 %v2475, %v2579
      %v2581 = vpop.f32.mrf.mxu0
      %v2582 = vpop.f32.mrf.mxu0
      %v2583 = vadd.f32 %v2478, %v2582
      %v2584 = vpop.f32.mrf.mxu0
      %2585 = vmatprep.mubr.bf16.mxu0 %v1623
      %2586 = vmatmul.mubr.bf16.gmra.mxu0 %v1579
      %v2587 = vpop.f32.mrf.mxu0
      %v2588 = vadd.f32 %v2483, %v2587
      %v2589 = vpop.f32.mrf.mxu0
      %v2590 = vpop.f32.mrf.mxu0
      %v2591 = vadd.f32 %v2486, %v2590
      %v2592 = vpop.f32.mrf.mxu0
      %2593 = vmatprep.mubr.bf16.mxu0 %v1625
      %2594 = vmatmul.mubr.bf16.gmra.mxu0 %v1583
      %v2595 = vpop.f32.mrf.mxu0
      %v2596 = vadd.f32 %v2491, %v2595
      %v2597 = vpop.f32.mrf.mxu0
      %v2598 = vpop.f32.mrf.mxu0
      %v2599 = vadd.f32 %v2494, %v2598
      %v2600 = vpop.f32.mrf.mxu0
      %2601 = vmatprep.mubr.bf16.mxu0 %v1627
      %2602 = vmatmul.mubr.bf16.gmra.mxu0 %v1587
      %v2603 = vpop.f32.mrf.mxu0
      %v2604 = vadd.f32 %v2499, %v2603
      %v2605 = vpop.f32.mrf.mxu0
      %v2606 = vpop.f32.mrf.mxu0
      %v2607 = vadd.f32 %v2502, %v2606
      %v2608 = vpop.f32.mrf.mxu0
      %2609 = vmatprep.mubr.bf16.mxu0 %v1629
      %2610 = vmatmul.mubr.bf16.gmra.mxu0 %v1593
      %v2611 = vpop.f32.mrf.mxu0
      %v2612 = vadd.f32 %v2507, %v2611
      %v2613 = vpop.f32.mrf.mxu0
      %v2614 = vpop.f32.mrf.mxu0
      %v2615 = vadd.f32 %v2510, %v2614
      %v2616 = vpop.f32.mrf.mxu0
      %2617 = vmatprep.mubr.bf16.mxu0 %v1631
      %2618 = vmatmul.mubr.bf16.gmra.mxu0 %v1602
      %v2619 = vpop.f32.mrf.mxu0
      %v2620 = vadd.f32 %v2515, %v2619
      %v2621 = vpop.f32.mrf.mxu0
      %v2622 = vpop.f32.mrf.mxu0
      %v2623 = vadd.f32 %v2518, %v2622
      %v2624 = vpop.f32.mrf.mxu0
      %2625 = vdwg.mxu0
      %2626 = vmatprep.subr.bf16.mxu0 0
      %2627 = vmatpush1.bf16.msra.mxu0 %v2222
      %2628 = vmatprep.subr.bf16.mxu0 0
      %2629 = vmatpush1.bf16.msra.mxu0 %v2221
      %2630 = vmatprep.subr.bf16.mxu0 0
      %2631 = vmatpush1.bf16.msra.mxu0 %v2220
      %2632 = vmatprep.subr.bf16.mxu0 0
      %2633 = vmatpush1.bf16.msra.mxu0 %v2219
      %2634 = vmatprep.subr.bf16.mxu0 0
      %2635 = vmatpush1.bf16.msra.mxu0 %v2218
      %2636 = vmatprep.subr.bf16.mxu0 0
      %2637 = vmatpush1.bf16.msra.mxu0 %v2217
      %2638 = vmatprep.subr.bf16.mxu0 0
      %2639 = vmatpush1.bf16.msra.mxu0 %v2216
      %2640 = vmatprep.subr.bf16.mxu0 0
      %2641 = vmatpush1.bf16.msra.mxu0 %v2215
      %2642 = vmatprep.subr.bf16.mxu0 0
      %2643 = vmatpush2.bf16.msra.mxu0 %v2230
      %2644 = vmatprep.subr.bf16.mxu0 0
      %2645 = vmatpush2.bf16.msra.mxu0 %v2229
      %2646 = vmatprep.subr.bf16.mxu0 0
      %2647 = vmatpush2.bf16.msra.mxu0 %v2228
      %2648 = vmatprep.subr.bf16.mxu0 0
      %2649 = vmatpush2.bf16.msra.mxu0 %v2227
      %2650 = vmatprep.subr.bf16.mxu0 0
      %2651 = vmatpush2.bf16.msra.mxu0 %v2226
      %2652 = vmatprep.subr.bf16.mxu0 0
      %2653 = vmatpush2.bf16.msra.mxu0 %v2225
      %2654 = vmatprep.subr.bf16.mxu0 0
      %2655 = vmatpush2.bf16.msra.mxu0 %v2224
      %2656 = vmatprep.subr.bf16.mxu0 0
      %2657 = vmatpush2.bf16.msra.mxu0 %v2223
      %2658 = vmatprep.mubr.bf16.mxu0 %v1652
      %2659 = vmatmul.mubr.bf16.gmra.mxu0 %v1617
      %v2660 = vpop.f32.mrf.mxu0
      %v2661 = vadd.f32 %v2556, %v2660
      %v2662 = vpop.f32.mrf.mxu0
      %v2663 = vpop.f32.mrf.mxu0
      %v2664 = vadd.f32 %v2559, %v2663
      %v2665 = vpop.f32.mrf.mxu0
      %2666 = vmatprep.mubr.bf16.mxu0 %v1656
      %2667 = vmatmul.mubr.bf16.gmra.mxu0 %v1619
      %v2668 = vpop.f32.mrf.mxu0
      %v2669 = vadd.f32 %v2564, %v2668
      %v2670 = vpop.f32.mrf.mxu0
      %v2671 = vpop.f32.mrf.mxu0
      %v2672 = vadd.f32 %v2567, %v2671
      %v2673 = vpop.f32.mrf.mxu0
      %2674 = vmatprep.mubr.bf16.mxu0 %v1660
      %2675 = vmatmul.mubr.bf16.gmra.mxu0 %v1621
      %v2676 = vpop.f32.mrf.mxu0
      %v2677 = vadd.f32 %v2572, %v2676
      %v2678 = vpop.f32.mrf.mxu0
      %v2679 = vpop.f32.mrf.mxu0
      %v2680 = vadd.f32 %v2575, %v2679
      %v2681 = vpop.f32.mrf.mxu0
      %2682 = vmatprep.mubr.bf16.mxu0 %v1664
      %2683 = vmatmul.mubr.bf16.gmra.mxu0 %v1623
      %v2684 = vpop.f32.mrf.mxu0
      %v2685 = vadd.f32 %v2580, %v2684
      %v2686 = vpop.f32.mrf.mxu0
      %v2687 = vpop.f32.mrf.mxu0
      %v2688 = vadd.f32 %v2583, %v2687
      %v2689 = vpop.f32.mrf.mxu0
      %2690 = vmatprep.mubr.bf16.mxu0 %v1668
      %2691 = vmatmul.mubr.bf16.gmra.mxu0 %v1625
      %v2692 = vpop.f32.mrf.mxu0
      %v2693 = vadd.f32 %v2588, %v2692
      %v2694 = vpop.f32.mrf.mxu0
      %v2695 = vpop.f32.mrf.mxu0
      %v2696 = vadd.f32 %v2591, %v2695
      %v2697 = vpop.f32.mrf.mxu0
      %2698 = vmatprep.mubr.bf16.mxu0 %v1672
      %2699 = vmatmul.mubr.bf16.gmra.mxu0 %v1627
      %v2700 = vpop.f32.mrf.mxu0
      %v2701 = vadd.f32 %v2596, %v2700
      %v2702 = vpop.f32.mrf.mxu0
      %v2703 = vpop.f32.mrf.mxu0
      %v2704 = vadd.f32 %v2599, %v2703
      %v2705 = vpop.f32.mrf.mxu0
      %2706 = vmatprep.mubr.bf16.mxu0 %v1676
      %2707 = vmatmul.mubr.bf16.gmra.mxu0 %v1629
      %v2708 = vpop.f32.mrf.mxu0
      %v2709 = vadd.f32 %v2604, %v2708
      %v2710 = vpop.f32.mrf.mxu0
      %v2711 = vpop.f32.mrf.mxu0
      %v2712 = vadd.f32 %v2607, %v2711
      %v2713 = vpop.f32.mrf.mxu0
      %2714 = vmatprep.mubr.bf16.mxu0 %v1680
      %2715 = vmatmul.mubr.bf16.gmra.mxu0 %v1631
      %v2716 = vpop.f32.mrf.mxu0
      %v2717 = vadd.f32 %v2612, %v2716
      %v2718 = vpop.f32.mrf.mxu0
      %v2719 = vpop.f32.mrf.mxu0
      %v2720 = vadd.f32 %v2615, %v2719
      %v2721 = vpop.f32.mrf.mxu0
      %2722 = vmatprep.mubr.bf16.mxu0 %v1689
      %2723 = vmatmul.mubr.bf16.gmra.mxu0 %v1643
      %v2724 = vpop.f32.mrf.mxu0
      %v2725 = vadd.f32 %v2620, %v2724
      %v2726 = vpop.f32.mrf.mxu0
      %v2727 = vpop.f32.mrf.mxu0
      %v2728 = vadd.f32 %v2623, %v2727
      %v2729 = vpop.f32.mrf.mxu0
      %2730 = vdwg.mxu0
      %2731 = vmatprep.subr.bf16.mxu0 0
      %2732 = vmatpush1.bf16.msra.mxu0 %v2238
      %2733 = vmatprep.subr.bf16.mxu0 0
      %2734 = vmatpush1.bf16.msra.mxu0 %v2237
      %2735 = vmatprep.subr.bf16.mxu0 0
      %2736 = vmatpush1.bf16.msra.mxu0 %v2236
      %2737 = vmatprep.subr.bf16.mxu0 0
      %2738 = vmatpush1.bf16.msra.mxu0 %v2235
      %2739 = vmatprep.subr.bf16.mxu0 0
      %2740 = vmatpush1.bf16.msra.mxu0 %v2234
      %2741 = vmatprep.subr.bf16.mxu0 0
      %2742 = vmatpush1.bf16.msra.mxu0 %v2233
      %2743 = vmatprep.subr.bf16.mxu0 0
      %2744 = vmatpush1.bf16.msra.mxu0 %v2232
      %2745 = vmatprep.subr.bf16.mxu0 0
      %2746 = vmatpush1.bf16.msra.mxu0 %v2231
      %2747 = vmatprep.subr.bf16.mxu0 0
      %2748 = vmatpush2.bf16.msra.mxu0 0
      %2749 = vmatprep.subr.bf16.mxu0 0
      %2750 = vmatpush2.bf16.msra.mxu0 0
      %2751 = vmatprep.subr.bf16.mxu0 0
      %2752 = vmatpush2.bf16.msra.mxu0 0
      %2753 = vmatprep.subr.bf16.mxu0 0
      %2754 = vmatpush2.bf16.msra.mxu0 0
      %2755 = vmatprep.subr.bf16.mxu0 0
      %2756 = vmatpush2.bf16.msra.mxu0 0
      %2757 = vmatprep.subr.bf16.mxu0 0
      %2758 = vmatpush2.bf16.msra.mxu0 0
      %2759 = vmatprep.subr.bf16.mxu0 0
      %2760 = vmatpush2.bf16.msra.mxu0 0
      %2761 = vmatprep.subr.bf16.mxu0 0
      %2762 = vmatpush2.bf16.msra.mxu0 0
      %2763 = vmatprep.mubr.bf16.mxu0 0
      %2764 = vmatmul.mubr.bf16.gmra.mxu0 %v1702
      %v2765 = vpop.f32.mrf.mxu0
      %v2766 = vadd.f32 %v2661, %v2765
      %v2767 = vpop.f32.mrf.mxu0
      %v2768 = vpop.f32.mrf.mxu0
      %v2769 = vadd.f32 %v2664, %v2768
      %v2770 = vpop.f32.mrf.mxu0
      %2771 = vmatprep.mubr.bf16.mxu0 0
      %2772 = vmatmul.mubr.bf16.gmra.mxu0 %v1704
      %v2773 = vpop.f32.mrf.mxu0
      %v2774 = vadd.f32 %v2669, %v2773
      %v2775 = vpop.f32.mrf.mxu0
      %v2776 = vpop.f32.mrf.mxu0
      %v2777 = vadd.f32 %v2672, %v2776
      %v2778 = vpop.f32.mrf.mxu0
      %2779 = vmatprep.mubr.bf16.mxu0 0
      %2780 = vmatmul.mubr.bf16.gmra.mxu0 %v1706
      %v2781 = vpop.f32.mrf.mxu0
      %v2782 = vadd.f32 %v2677, %v2781
      %v2783 = vpop.f32.mrf.mxu0
      %v2784 = vpop.f32.mrf.mxu0
      %v2785 = vadd.f32 %v2680, %v2784
      %v2786 = vpop.f32.mrf.mxu0
      %2787 = vmatprep.mubr.bf16.mxu0 0
      %2788 = vmatmul.mubr.bf16.gmra.mxu0 %v1708
      %v2789 = vpop.f32.mrf.mxu0
      %v2790 = vadd.f32 %v2685, %v2789
      %v2791 = vpop.f32.mrf.mxu0
      %v2792 = vpop.f32.mrf.mxu0
      %v2793 = vadd.f32 %v2688, %v2792
      %v2794 = vpop.f32.mrf.mxu0
      %2795 = vmatprep.mubr.bf16.mxu0 0
      %2796 = vmatmul.mubr.bf16.gmra.mxu0 %v1710
      %v2797 = vpop.f32.mrf.mxu0
      %v2798 = vadd.f32 %v2693, %v2797
      %v2799 = vpop.f32.mrf.mxu0
      %v2800 = vpop.f32.mrf.mxu0
      %v2801 = vadd.f32 %v2696, %v2800
      %v2802 = vpop.f32.mrf.mxu0
      %2803 = vmatprep.mubr.bf16.mxu0 0
      %2804 = vmatmul.mubr.bf16.gmra.mxu0 %v1712
      %v2805 = vpop.f32.mrf.mxu0
      %v2806 = vadd.f32 %v2701, %v2805
      %v2807 = vpop.f32.mrf.mxu0
      %v2808 = vpop.f32.mrf.mxu0
      %v2809 = vadd.f32 %v2704, %v2808
      %v2810 = vpop.f32.mrf.mxu0
      %2811 = vmatprep.mubr.bf16.mxu0 0
      %2812 = vmatmul.mubr.bf16.gmra.mxu0 %v1714
      %v2813 = vpop.f32.mrf.mxu0
      %v2814 = vadd.f32 %v2709, %v2813
      %v2815 = vpop.f32.mrf.mxu0
      %v2816 = vpop.f32.mrf.mxu0
      %v2817 = vadd.f32 %v2712, %v2816
      %v2818 = vpop.f32.mrf.mxu0
      %2819 = vmatprep.mubr.bf16.mxu0 0
      %2820 = vmatmul.mubr.bf16.gmra.mxu0 %v1716
      %v2821 = vpop.f32.mrf.mxu0
      %v2822 = vadd.f32 %v2717, %v2821
      %v2823 = vpop.f32.mrf.mxu0
      %v2824 = vpop.f32.mrf.mxu0
      %v2825 = vadd.f32 %v2720, %v2824
      %v2826 = vpop.f32.mrf.mxu0
      %2827 = vmatprep.mubr.bf16.mxu0 0
      %2828 = vmatmul.mubr.bf16.gmra.mxu0 %v1718
      %v2829 = vpop.f32.mrf.mxu0
      %v2830 = vadd.f32 %v2725, %v2829
      %v2831 = vpop.f32.mrf.mxu0
      %v2832 = vpop.f32.mrf.mxu0
      %v2833 = vadd.f32 %v2728, %v2832
      %v2834 = vpop.f32.mrf.mxu0
      %2835 = vdwg.mxu0
      %vm2836 = vcmp.lt.s32.totalorder %v607, 0
      %v2837 = vsub.s32 0, %v607
      %v2838 = vsel %vm2836, %v2837, %v607
      %v2839 = vmul.u32.u64.compose %v2838, 3817748708
      %v2840 = vextract.low.u32 %v2839
      %v2841 = vextract.high.u32 %v2839
      %v2842 = vshrl.u32 %v2841, 4
      %v2843 = vmul.u32 %v2842, 18
      %v2844 = vsub.s32 %v2838, %v2843
      %v2845 = vsub.s32 0, %v2844
      %v2846 = vsel %vm2836, %v2845, %v2844
      %vm2847 = vcmp.lt.s32.totalorder %v608, 0
      %v2848 = vsub.s32 0, %v608
      %v2849 = vsel %vm2847, %v2848, %v608
      %v2850 = vmul.u32.u64.compose %v2849, 3817748708
      %v2851 = vextract.low.u32 %v2850
      %v2852 = vextract.high.u32 %v2850
      %v2853 = vshrl.u32 %v2852, 4
      %v2854 = vmul.u32 %v2853, 18
      %v2855 = vsub.s32 %v2849, %v2854
      %v2856 = vsub.s32 0, %v2855
      %v2857 = vsel %vm2847, %v2856, %v2855
      %vm2858 = vcmp.lt.s32.totalorder %v609, 0
      %v2859 = vsub.s32 0, %v609
      %v2860 = vsel %vm2858, %v2859, %v609
      %v2861 = vmul.u32.u64.compose %v2860, 3817748708
      %v2862 = vextract.low.u32 %v2861
      %v2863 = vextract.high.u32 %v2861
      %v2864 = vshrl.u32 %v2863, 4
      %v2865 = vmul.u32 %v2864, 18
      %v2866 = vsub.s32 %v2860, %v2865
      %v2867 = vsub.s32 0, %v2866
      %v2868 = vsel %vm2858, %v2867, %v2866
      %vm2869 = vcmp.lt.s32.totalorder %v610, 0
      %v2870 = vsub.s32 0, %v610
      %v2871 = vsel %vm2869, %v2870, %v610
      %v2872 = vmul.u32.u64.compose %v2871, 3817748708
      %v2873 = vextract.low.u32 %v2872
      %v2874 = vextract.high.u32 %v2872
      %v2875 = vshrl.u32 %v2874, 4
      %v2876 = vmul.u32 %v2875, 18
      %v2877 = vsub.s32 %v2871, %v2876
      %v2878 = vsub.s32 0, %v2877
      %v2879 = vsel %vm2869, %v2878, %v2877
      %vm2880 = vcmp.lt.s32.totalorder %v611, 0
      %v2881 = vsub.s32 0, %v611
      %v2882 = vsel %vm2880, %v2881, %v611
      %v2883 = vmul.u32.u64.compose %v2882, 3817748708
      %v2884 = vextract.low.u32 %v2883
      %v2885 = vextract.high.u32 %v2883
      %v2886 = vshrl.u32 %v2885, 4
      %v2887 = vmul.u32 %v2886, 18
      %v2888 = vsub.s32 %v2882, %v2887
      %v2889 = vsub.s32 0, %v2888
      %v2890 = vsel %vm2880, %v2889, %v2888
      %vm2891 = vcmp.lt.s32.totalorder %v612, 0
      %v2892 = vsub.s32 0, %v612
      %v2893 = vsel %vm2891, %v2892, %v612
      %v2894 = vmul.u32.u64.compose %v2893, 3817748708
      %v2895 = vextract.low.u32 %v2894
      %v2896 = vextract.high.u32 %v2894
      %v2897 = vshrl.u32 %v2896, 4
      %v2898 = vmul.u32 %v2897, 18
      %v2899 = vsub.s32 %v2893, %v2898
      %v2900 = vsub.s32 0, %v2899
      %v2901 = vsel %vm2891, %v2900, %v2899
      %vm2902 = vcmp.lt.s32.totalorder %v613, 0
      %v2903 = vsub.s32 0, %v613
      %v2904 = vsel %vm2902, %v2903, %v613
      %v2905 = vmul.u32.u64.compose %v2904, 3817748708
      %v2906 = vextract.low.u32 %v2905
      %v2907 = vextract.high.u32 %v2905
      %v2908 = vshrl.u32 %v2907, 4
      %v2909 = vmul.u32 %v2908, 18
      %v2910 = vsub.s32 %v2904, %v2909
      %v2911 = vsub.s32 0, %v2910
      %v2912 = vsel %vm2902, %v2911, %v2910
      %vm2913 = vcmp.lt.s32.totalorder %v614, 0
      %v2914 = vsub.s32 0, %v614
      %v2915 = vsel %vm2913, %v2914, %v614
      %v2916 = vmul.u32.u64.compose %v2915, 3817748708
      %v2917 = vextract.low.u32 %v2916
      %v2918 = vextract.high.u32 %v2916
      %v2919 = vshrl.u32 %v2918, 4
      %v2920 = vmul.u32 %v2919, 18
      %v2921 = vsub.s32 %v2915, %v2920
      %v2922 = vsub.s32 0, %v2921
      %v2923 = vsel %vm2913, %v2922, %v2921
      %vm2924 = vcmp.lt.s32.totalorder %v615, 0
      %v2925 = vsub.s32 0, %v615
      %v2926 = vsel %vm2924, %v2925, %v615
      %v2927 = vmul.u32.u64.compose %v2926, 3817748708
      %v2928 = vextract.low.u32 %v2927
      %v2929 = vextract.high.u32 %v2927
      %v2930 = vshrl.u32 %v2929, 4
      %v2931 = vmul.u32 %v2930, 18
      %v2932 = vsub.s32 %v2926, %v2931
      %v2933 = vsub.s32 0, %v2932
      %v2934 = vsel %vm2924, %v2933, %v2932
      %vm2935 = vcmp.lt.s32.totalorder %v616, 0
      %v2936 = vsub.s32 0, %v616
      %v2937 = vsel %vm2935, %v2936, %v616
      %v2938 = vmul.u32.u64.compose %v2937, 3817748708
      %v2939 = vextract.low.u32 %v2938
      %v2940 = vextract.high.u32 %v2938
      %v2941 = vshrl.u32 %v2940, 4
      %v2942 = vmul.u32 %v2941, 18
      %v2943 = vsub.s32 %v2937, %v2942
      %v2944 = vsub.s32 0, %v2943
      %v2945 = vsel %vm2935, %v2944, %v2943
      %vm2946 = vcmp.lt.s32.totalorder %v617, 0
      %v2947 = vsub.s32 0, %v617
      %v2948 = vsel %vm2946, %v2947, %v617
      %v2949 = vmul.u32.u64.compose %v2948, 3817748708
      %v2950 = vextract.low.u32 %v2949
      %v2951 = vextract.high.u32 %v2949
      %v2952 = vshrl.u32 %v2951, 4
      %v2953 = vmul.u32 %v2952, 18
      %v2954 = vsub.s32 %v2948, %v2953
      %v2955 = vsub.s32 0, %v2954
      %v2956 = vsel %vm2946, %v2955, %v2954
      %vm2957 = vcmp.lt.s32.totalorder %v618, 0
      %v2958 = vsub.s32 0, %v618
      %v2959 = vsel %vm2957, %v2958, %v618
      %v2960 = vmul.u32.u64.compose %v2959, 3817748708
      %v2961 = vextract.low.u32 %v2960
      %v2962 = vextract.high.u32 %v2960
      %v2963 = vshrl.u32 %v2962, 4
      %v2964 = vmul.u32 %v2963, 18
      %v2965 = vsub.s32 %v2959, %v2964
      %v2966 = vsub.s32 0, %v2965
      %v2967 = vsel %vm2957, %v2966, %v2965
      %vm2968 = vcmp.lt.s32.totalorder %v619, 0
      %v2969 = vsub.s32 0, %v619
      %v2970 = vsel %vm2968, %v2969, %v619
      %v2971 = vmul.u32.u64.compose %v2970, 3817748708
      %v2972 = vextract.low.u32 %v2971
      %v2973 = vextract.high.u32 %v2971
      %v2974 = vshrl.u32 %v2973, 4
      %v2975 = vmul.u32 %v2974, 18
      %v2976 = vsub.s32 %v2970, %v2975
      %v2977 = vsub.s32 0, %v2976
      %v2978 = vsel %vm2968, %v2977, %v2976
      %vm2979 = vcmp.lt.s32.totalorder %v620, 0
      %v2980 = vsub.s32 0, %v620
      %v2981 = vsel %vm2979, %v2980, %v620
      %v2982 = vmul.u32.u64.compose %v2981, 3817748708
      %v2983 = vextract.low.u32 %v2982
      %v2984 = vextract.high.u32 %v2982
      %v2985 = vshrl.u32 %v2984, 4
      %v2986 = vmul.u32 %v2985, 18
      %v2987 = vsub.s32 %v2981, %v2986
      %v2988 = vsub.s32 0, %v2987
      %v2989 = vsel %vm2979, %v2988, %v2987
      %vm2990 = vcmp.lt.s32.totalorder %v621, 0
      %v2991 = vsub.s32 0, %v621
      %v2992 = vsel %vm2990, %v2991, %v621
      %v2993 = vmul.u32.u64.compose %v2992, 3817748708
      %v2994 = vextract.low.u32 %v2993
      %v2995 = vextract.high.u32 %v2993
      %v2996 = vshrl.u32 %v2995, 4
      %v2997 = vmul.u32 %v2996, 18
      %v2998 = vsub.s32 %v2992, %v2997
      %v2999 = vsub.s32 0, %v2998
      %v3000 = vsel %vm2990, %v2999, %v2998
      %vm3001 = vcmp.lt.s32.totalorder %v622, 0
      %v3002 = vsub.s32 0, %v622
      %v3003 = vsel %vm3001, %v3002, %v622
      %v3004 = vmul.u32.u64.compose %v3003, 3817748708
      %v3005 = vextract.low.u32 %v3004
      %v3006 = vextract.high.u32 %v3004
      %v3007 = vshrl.u32 %v3006, 4
      %v3008 = vmul.u32 %v3007, 18
      %v3009 = vsub.s32 %v3003, %v3008
      %v3010 = vsub.s32 0, %v3009
      %v3011 = vsel %vm3001, %v3010, %v3009
      %vm3012 = vcmp.lt.s32.totalorder %v623, 0
      %v3013 = vsub.s32 0, %v623
      %v3014 = vsel %vm3012, %v3013, %v623
      %v3015 = vmul.u32.u64.compose %v3014, 3817748708
      %v3016 = vextract.low.u32 %v3015
      %v3017 = vextract.high.u32 %v3015
      %v3018 = vshrl.u32 %v3017, 4
      %v3019 = vmul.u32 %v3018, 18
      %v3020 = vsub.s32 %v3014, %v3019
      %v3021 = vsub.s32 0, %v3020
      %v3022 = vsel %vm3012, %v3021, %v3020
      %vm3023 = vcmp.lt.s32.totalorder %v624, 0
      %v3024 = vsub.s32 0, %v624
      %v3025 = vsel %vm3023, %v3024, %v624
      %v3026 = vmul.u32.u64.compose %v3025, 3817748708
      %v3027 = vextract.low.u32 %v3026
      %v3028 = vextract.high.u32 %v3026
      %v3029 = vshrl.u32 %v3028, 4
      %v3030 = vmul.u32 %v3029, 18
      %v3031 = vsub.s32 %v3025, %v3030
      %v3032 = vsub.s32 0, %v3031
      %v3033 = vsel %vm3023, %v3032, %v3031
      %vm3034 = vcmp.ne.s32.totalorder %v2846, 0
      %vm3035 = vcmp.ne.s32.totalorder %v2857, 0
      %vm3036 = vcmp.ne.s32.totalorder %v2868, 0
      %vm3037 = vcmp.ne.s32.totalorder %v2879, 0
      %vm3038 = vcmp.ne.s32.totalorder %v2890, 0
      %vm3039 = vcmp.ne.s32.totalorder %v2901, 0
      %vm3040 = vcmp.ne.s32.totalorder %v2912, 0
      %vm3041 = vcmp.ne.s32.totalorder %v2923, 0
      %vm3042 = vcmp.ne.s32.totalorder %v2934, 0
      %vm3043 = vcmp.ne.s32.totalorder %v2945, 0
      %vm3044 = vcmp.ne.s32.totalorder %v2956, 0
      %vm3045 = vcmp.ne.s32.totalorder %v2967, 0
      %vm3046 = vcmp.ne.s32.totalorder %v2978, 0
      %vm3047 = vcmp.ne.s32.totalorder %v2989, 0
      %vm3048 = vcmp.ne.s32.totalorder %v3000, 0
      %vm3049 = vcmp.ne.s32.totalorder %v3011, 0
      %vm3050 = vcmp.ne.s32.totalorder %v3022, 0
      %vm3051 = vcmp.ne.s32.totalorder %v3033, 0
      %vm3052 = vcmp.lt.s32.totalorder %v2846, 0
      %vm3053 = vcmp.lt.s32.totalorder %v2857, 0
      %vm3054 = vcmp.lt.s32.totalorder %v2868, 0
      %vm3055 = vcmp.lt.s32.totalorder %v2879, 0
      %vm3056 = vcmp.lt.s32.totalorder %v2890, 0
      %vm3057 = vcmp.lt.s32.totalorder %v2901, 0
      %vm3058 = vcmp.lt.s32.totalorder %v2912, 0
      %vm3059 = vcmp.lt.s32.totalorder %v2923, 0
      %vm3060 = vcmp.lt.s32.totalorder %v2934, 0
      %vm3061 = vcmp.lt.s32.totalorder %v2945, 0
      %vm3062 = vcmp.lt.s32.totalorder %v2956, 0
      %vm3063 = vcmp.lt.s32.totalorder %v2967, 0
      %vm3064 = vcmp.lt.s32.totalorder %v2978, 0
      %vm3065 = vcmp.lt.s32.totalorder %v2989, 0
      %vm3066 = vcmp.lt.s32.totalorder %v3000, 0
      %vm3067 = vcmp.lt.s32.totalorder %v3011, 0
      %vm3068 = vcmp.lt.s32.totalorder %v3022, 0
      %vm3069 = vcmp.lt.s32.totalorder %v3033, 0
      %vm3070 = vmand %vm3052, %vm3034
      %vm3071 = vmand %vm3053, %vm3035
      %vm3072 = vmand %vm3054, %vm3036
      %vm3073 = vmand %vm3055, %vm3037
      %vm3074 = vmand %vm3056, %vm3038
      %vm3075 = vmand %vm3057, %vm3039
      %vm3076 = vmand %vm3058, %vm3040
      %vm3077 = vmand %vm3059, %vm3041
      %vm3078 = vmand %vm3060, %vm3042
      %vm3079 = vmand %vm3061, %vm3043
      %vm3080 = vmand %vm3062, %vm3044
      %vm3081 = vmand %vm3063, %vm3045
      %vm3082 = vmand %vm3064, %vm3046
      %vm3083 = vmand %vm3065, %vm3047
      %vm3084 = vmand %vm3066, %vm3048
      %vm3085 = vmand %vm3067, %vm3049
      %vm3086 = vmand %vm3068, %vm3050
      %vm3087 = vmand %vm3069, %vm3051
      %v3088 = vadd.s32 %v2846, 18
      %v3089 = vadd.s32 %v2857, 18
      %v3090 = vadd.s32 %v2868, 18
      %v3091 = vadd.s32 %v2879, 18
      %v3092 = vadd.s32 %v2890, 18
      %v3093 = vadd.s32 %v2901, 18
      %v3094 = vadd.s32 %v2912, 18
      %v3095 = vadd.s32 %v2923, 18
      %v3096 = vadd.s32 %v2934, 18
      %v3097 = vadd.s32 %v2945, 18
      %v3098 = vadd.s32 %v2956, 18
      %v3099 = vadd.s32 %v2967, 18
      %v3100 = vadd.s32 %v2978, 18
      %v3101 = vadd.s32 %v2989, 18
      %v3102 = vadd.s32 %v3000, 18
      %v3103 = vadd.s32 %v3011, 18
      %v3104 = vadd.s32 %v3022, 18
      %v3105 = vadd.s32 %v3033, 18
      %v3106 = vsel %vm3070, %v3088, %v2846
      %v3107 = vsel %vm3071, %v3089, %v2857
      %v3108 = vsel %vm3072, %v3090, %v2868
      %v3109 = vsel %vm3073, %v3091, %v2879
      %v3110 = vsel %vm3074, %v3092, %v2890
      %v3111 = vsel %vm3075, %v3093, %v2901
      %v3112 = vsel %vm3076, %v3094, %v2912
      %v3113 = vsel %vm3077, %v3095, %v2923
      %v3114 = vsel %vm3078, %v3096, %v2934
      %v3115 = vsel %vm3079, %v3097, %v2945
      %v3116 = vsel %vm3080, %v3098, %v2956
      %v3117 = vsel %vm3081, %v3099, %v2967
      %v3118 = vsel %vm3082, %v3100, %v2978
      %v3119 = vsel %vm3083, %v3101, %v2989
      %v3120 = vsel %vm3084, %v3102, %v3000
      %v3121 = vsel %vm3085, %v3103, %v3011
      %v3122 = vsel %vm3086, %v3104, %v3022
      %v3123 = vsel %vm3087, %v3105, %v3033
      %vm3124 = vcmp.ge.s32.totalorder %v3106, 1
      %vm3125 = vcmp.ge.s32.totalorder %v3107, 1
      %vm3126 = vcmp.ge.s32.totalorder %v3108, 1
      %vm3127 = vcmp.ge.s32.totalorder %v3109, 1
      %vm3128 = vcmp.ge.s32.totalorder %v3110, 1
      %vm3129 = vcmp.ge.s32.totalorder %v3111, 1
      %vm3130 = vcmp.ge.s32.totalorder %v3112, 1
      %vm3131 = vcmp.ge.s32.totalorder %v3113, 1
      %vm3132 = vcmp.ge.s32.totalorder %v3114, 1
      %vm3133 = vcmp.ge.s32.totalorder %v3115, 1
      %vm3134 = vcmp.ge.s32.totalorder %v3116, 1
      %vm3135 = vcmp.ge.s32.totalorder %v3117, 1
      %vm3136 = vcmp.ge.s32.totalorder %v3118, 1
      %vm3137 = vcmp.ge.s32.totalorder %v3119, 1
      %vm3138 = vcmp.ge.s32.totalorder %v3120, 1
      %vm3139 = vcmp.ge.s32.totalorder %v3121, 1
      %vm3140 = vcmp.ge.s32.totalorder %v3122, 1
      %vm3141 = vcmp.ge.s32.totalorder %v3123, 1
      %vm3142 = vcmp.le.s32.totalorder %v3106, 16
      %vm3143 = vcmp.le.s32.totalorder %v3107, 16
      %vm3144 = vcmp.le.s32.totalorder %v3108, 16
      %vm3145 = vcmp.le.s32.totalorder %v3109, 16
      %vm3146 = vcmp.le.s32.totalorder %v3110, 16
      %vm3147 = vcmp.le.s32.totalorder %v3111, 16
      %vm3148 = vcmp.le.s32.totalorder %v3112, 16
      %vm3149 = vcmp.le.s32.totalorder %v3113, 16
      %vm3150 = vcmp.le.s32.totalorder %v3114, 16
      %vm3151 = vcmp.le.s32.totalorder %v3115, 16
      %vm3152 = vcmp.le.s32.totalorder %v3116, 16
      %vm3153 = vcmp.le.s32.totalorder %v3117, 16
      %vm3154 = vcmp.le.s32.totalorder %v3118, 16
      %vm3155 = vcmp.le.s32.totalorder %v3119, 16
      %vm3156 = vcmp.le.s32.totalorder %v3120, 16
      %vm3157 = vcmp.le.s32.totalorder %v3121, 16
      %vm3158 = vcmp.le.s32.totalorder %v3122, 16
      %vm3159 = vcmp.le.s32.totalorder %v3123, 16
      %vm3160 = vmand %vm3124, %vm3142
      %vm3161 = vmand %vm3125, %vm3143
      %vm3162 = vmand %vm3126, %vm3144
      %vm3163 = vmand %vm3127, %vm3145
      %vm3164 = vmand %vm3128, %vm3146
      %vm3165 = vmand %vm3129, %vm3147
      %vm3166 = vmand %vm3130, %vm3148
      %vm3167 = vmand %vm3131, %vm3149
      %vm3168 = vmand %vm3132, %vm3150
      %vm3169 = vmand %vm3133, %vm3151
      %vm3170 = vmand %vm3134, %vm3152
      %vm3171 = vmand %vm3135, %vm3153
      %vm3172 = vmand %vm3136, %vm3154
      %vm3173 = vmand %vm3137, %vm3155
      %vm3174 = vmand %vm3138, %vm3156
      %vm3175 = vmand %vm3139, %vm3157
      %vm3176 = vmand %vm3140, %vm3158
      %vm3177 = vmand %vm3141, %vm3159
      %v3178 = vsel %vm3160, 1, 0
      %v3179 = vsel %vm3161, 1, 0
      %v3180 = vsel %vm3162, 1, 0
      %v3181 = vsel %vm3163, 1, 0
      %v3182 = vsel %vm3164, 1, 0
      %v3183 = vsel %vm3165, 1, 0
      %v3184 = vsel %vm3166, 1, 0
      %v3185 = vsel %vm3167, 1, 0
      %v3186 = vsel %vm3168, 1, 0
      %v3187 = vsel %vm3169, 1, 0
      %v3188 = vsel %vm3170, 1, 0
      %v3189 = vsel %vm3171, 1, 0
      %v3190 = vsel %vm3172, 1, 0
      %v3191 = vsel %vm3173, 1, 0
      %v3192 = vsel %vm3174, 1, 0
      %v3193 = vsel %vm3175, 1, 0
      %v3194 = vsel %vm3176, 1, 0
      %v3195 = vsel %vm3177, 1, 0
      %vm3196 = vcmp.eq.s32.totalorder %v3178, 1
      %vm3197 = vcmp.eq.s32.totalorder %v3179, 1
      %vm3198 = vcmp.eq.s32.totalorder %v3180, 1
      %vm3199 = vcmp.eq.s32.totalorder %v3181, 1
      %vm3200 = vcmp.eq.s32.totalorder %v3182, 1
      %vm3201 = vcmp.eq.s32.totalorder %v3183, 1
      %vm3202 = vcmp.eq.s32.totalorder %v3184, 1
      %vm3203 = vcmp.eq.s32.totalorder %v3185, 1
      %vm3204 = vcmp.eq.s32.totalorder %v3186, 1
      %vm3205 = vcmp.eq.s32.totalorder %v3187, 1
      %vm3206 = vcmp.eq.s32.totalorder %v3188, 1
      %vm3207 = vcmp.eq.s32.totalorder %v3189, 1
      %vm3208 = vcmp.eq.s32.totalorder %v3190, 1
      %vm3209 = vcmp.eq.s32.totalorder %v3191, 1
      %vm3210 = vcmp.eq.s32.totalorder %v3192, 1
      %vm3211 = vcmp.eq.s32.totalorder %v3193, 1
      %vm3212 = vcmp.eq.s32.totalorder %v3194, 1
      %vm3213 = vcmp.eq.s32.totalorder %v3195, 1
      %v3214 = vsel %vm3196, %v2766, 0.0
      %v3215 = vsel %vm3197, %v2769, 0.0
      %v3216 = vsel %vm3198, %v2774, 0.0
      %v3217 = vsel %vm3199, %v2777, 0.0
      %v3218 = vsel %vm3200, %v2782, 0.0
      %v3219 = vsel %vm3201, %v2785, 0.0
      %v3220 = vsel %vm3202, %v2790, 0.0
      %v3221 = vsel %vm3203, %v2793, 0.0
      %v3222 = vsel %vm3204, %v2798, 0.0
      %v3223 = vsel %vm3205, %v2801, 0.0
      %v3224 = vsel %vm3206, %v2806, 0.0
      %v3225 = vsel %vm3207, %v2809, 0.0
      %v3226 = vsel %vm3208, %v2814, 0.0
      %v3227 = vsel %vm3209, %v2817, 0.0
      %v3228 = vsel %vm3210, %v2822, 0.0
      %v3229 = vsel %vm3211, %v2825, 0.0
      %v3230 = vsel %vm3212, %v2830, 0.0
      %v3231 = vsel %vm3213, %v2833, 0.0
      %v3232 = vadd.f32 %v3214, %v3215
      %v3233 = vadd.f32 %v3232, %v3216
      %v3234 = vadd.f32 %v3233, %v3217
      %v3235 = vadd.f32 %v3234, %v3218
      %v3236 = vadd.f32 %v3235, %v3219
      %v3237 = vadd.f32 %v3236, %v3220
      %v3238 = vadd.f32 %v3237, %v3221
      %v3239 = vadd.f32 %v3238, %v3222
      %v3240 = vadd.f32 %v3239, %v3223
      %v3241 = vadd.f32 %v3240, %v3224
      %v3242 = vadd.f32 %v3241, %v3225
      %v3243 = vadd.f32 %v3242, %v3226
      %v3244 = vadd.f32 %v3243, %v3227
      %v3245 = vadd.f32 %v3244, %v3228
      %v3246 = vadd.f32 %v3245, %v3229
      %v3247 = vadd.f32 %v3246, %v3230
      %v3248 = vadd.f32 %v3247, %v3231
      %v3249 = vrot.slane %v3248, 4
      %v3250 = vadd.f32 %v3248, %v3249
      %v3251 = vrot.slane %v3250, 2
      %v3252 = vadd.f32 %v3250, %v3251
      %v3253 = vrot.slane %v3252, 1
      %v3254 = vadd.f32 %v3252, %v3253
      %v3255 = vmul.f32 %v3214, %v3214
      %v3256 = vmul.f32 %v3215, %v3215
      %v3257 = vmul.f32 %v3216, %v3216
      %v3258 = vmul.f32 %v3217, %v3217
      %v3259 = vmul.f32 %v3218, %v3218
      %v3260 = vmul.f32 %v3219, %v3219
      %v3261 = vmul.f32 %v3220, %v3220
      %v3262 = vmul.f32 %v3221, %v3221
      %v3263 = vmul.f32 %v3222, %v3222
      %v3264 = vmul.f32 %v3223, %v3223
      %v3265 = vmul.f32 %v3224, %v3224
      %v3266 = vmul.f32 %v3225, %v3225
      %v3267 = vmul.f32 %v3226, %v3226
      %v3268 = vmul.f32 %v3227, %v3227
      %v3269 = vmul.f32 %v3228, %v3228
      %v3270 = vmul.f32 %v3229, %v3229
      %v3271 = vmul.f32 %v3230, %v3230
      %v3272 = vmul.f32 %v3231, %v3231
      %v3273 = vadd.f32 %v3255, %v3256
      %v3274 = vadd.f32 %v3273, %v3257
      %v3275 = vadd.f32 %v3274, %v3258
      %v3276 = vadd.f32 %v3275, %v3259
      %v3277 = vadd.f32 %v3276, %v3260
      %v3278 = vadd.f32 %v3277, %v3261
      %v3279 = vadd.f32 %v3278, %v3262
      %v3280 = vadd.f32 %v3279, %v3263
      %v3281 = vadd.f32 %v3280, %v3264
      %v3282 = vadd.f32 %v3281, %v3265
      %v3283 = vadd.f32 %v3282, %v3266
      %v3284 = vadd.f32 %v3283, %v3267
      %v3285 = vadd.f32 %v3284, %v3268
      %v3286 = vadd.f32 %v3285, %v3269
      %v3287 = vadd.f32 %v3286, %v3270
      %v3288 = vadd.f32 %v3287, %v3271
      %v3289 = vadd.f32 %v3288, %v3272
      %v3290 = vrot.slane %v3289, 4
      %v3291 = vadd.f32 %v3289, %v3290
      %v3292 = vrot.slane %v3291, 2
      %v3293 = vadd.f32 %v3291, %v3292
      %v3294 = vrot.slane %v3293, 1
      %v3295 = vadd.f32 %v3293, %v3294
      %vm3296 = vcmask 1040384
      %v3297 = vsel %vm3296, %v3254, %v3295
      %vm3298 = vcmask 1041408
      %v3299 = vsel %vm3298, %v3297, 0.0
      %3300 = vst [vmem:[%s408] sm:$0xff] %v3299
      %v3301 = vpack.c.bf16 %v3215, %v3214
      %v3302 = vpack.c.bf16 %v3217, %v3216
      %v3303 = vpack.c.bf16 %v3219, %v3218
      %v3304 = vpack.c.bf16 %v3221, %v3220
      %v3305 = vpack.c.bf16 %v3223, %v3222
      %v3306 = vpack.c.bf16 %v3225, %v3224
      %v3307 = vpack.c.bf16 %v3227, %v3226
      %v3308 = vpack.c.bf16 %v3229, %v3228
      %v3309 = vpack.c.bf16 %v3231, %v3230
      %v3319 = vunpack.c.l.b16 %v3301
      %v3320 = vunpack.c.h.b16 %v3301
      %v3321 = vunpack.c.l.b16 %v3302
      %v3322 = vunpack.c.h.b16 %v3302
      %v3323 = vunpack.c.l.b16 %v3303
      %v3324 = vunpack.c.h.b16 %v3303
      %v3325 = vunpack.c.l.b16 %v3304
      %v3326 = vunpack.c.h.b16 %v3304
      %v3327 = vunpack.c.l.b16 %v3305
      %v3328 = vunpack.c.h.b16 %v3305
      %v3329 = vunpack.c.l.b16 %v3306
      %v3330 = vunpack.c.h.b16 %v3306
      %v3331 = vunpack.c.l.b16 %v3307
      %v3332 = vunpack.c.h.b16 %v3307
      %v3333 = vunpack.c.l.b16 %v3308
      %v3334 = vunpack.c.h.b16 %v3308
      %v3335 = vunpack.c.l.b16 %v3309
      %v3336 = vunpack.c.h.b16 %v3309
      %v3337 = vpack.c.b16 %v3319, %v3319
      %v3338 = vpack.c.b16 %v3320, %v3320
      %v3339 = vpack.c.b16 %v3321, %v3321
      %v3340 = vpack.c.b16 %v3322, %v3322
      %v3341 = vpack.c.b16 %v3323, %v3323
      %v3342 = vpack.c.b16 %v3324, %v3324
      %v3343 = vpack.c.b16 %v3325, %v3325
      %v3344 = vpack.c.b16 %v3326, %v3326
      %v3345 = vpack.c.b16 %v3327, %v3327
      %v3346 = vpack.c.b16 %v3328, %v3328
      %v3347 = vpack.c.b16 %v3329, %v3329
      %v3348 = vpack.c.b16 %v3330, %v3330
      %v3349 = vpack.c.b16 %v3331, %v3331
      %v3350 = vpack.c.b16 %v3332, %v3332
      %v3351 = vpack.c.b16 %v3333, %v3333
      %v3352 = vpack.c.b16 %v3334, %v3334
      %v3353 = vpack.c.b16 %v3335, %v3335
      %v3354 = vpack.c.b16 %v3336, %v3336
      %3373 = vst [vmem:[%s399] sm:$0xf] %v3337
      %3374 = vst [vmem:[%s399 + $0x4] sm:$0xf] %v3338
      %3375 = vst [vmem:[%s399 + $0x8] sm:$0xf] %v3339
      %3376 = vst [vmem:[%s399 + $0xc] sm:$0xf] %v3340
      %3377 = vst [vmem:[%s399 + $0x10] sm:$0xf] %v3341
      %3378 = vst [vmem:[%s399 + $0x14] sm:$0xf] %v3342
      %3379 = vst [vmem:[%s399 + $0x18] sm:$0xf] %v3343
      %3380 = vst [vmem:[%s399 + $0x1c] sm:$0xf] %v3344
      %3381 = vst [vmem:[%s399 + $0x20] sm:$0xf] %v3345
      %3382 = vst [vmem:[%s399 + $0x24] sm:$0xf] %v3346
      %3383 = vst [vmem:[%s399 + $0x28] sm:$0xf] %v3347
      %3384 = vst [vmem:[%s399 + $0x2c] sm:$0xf] %v3348
      %3385 = vst [vmem:[%s399 + $0x30] sm:$0xf] %v3349
      %3386 = vst [vmem:[%s399 + $0x34] sm:$0xf] %v3350
      %3387 = vst [vmem:[%s399 + $0x38] sm:$0xf] %v3351
      %3388 = vst [vmem:[%s399 + $0x3c] sm:$0xf] %v3352
      %3389 = vst [vmem:[%s399 + $0x40] sm:$0xf] %v3353
      %3390 = vst [vmem:[%s399 + $0x44] sm:$0xf] %v3354
      %s3391 = smul.u32 18, %s24
      %p3392 = scmp.lt.s32.totalorder %s23, 1
      %s3393 = scalar_select %p3392, %s23, 1
      %p3394 = scmp.lt.s32.totalorder %s3391, 35
      %s3395 = scalar_select %p3394, %s3391, 35
      %s3396 = smul.addr %s3393, 36
      %s3397 = sadd.s32 %s3395, %s3396
      %s3398 = smul.addr %s3397, 4
      %s3399 = scalar_lea.vmem %s6, %s3398
      %p3400 = scmp.lt.s32.totalorder %s23, 1
      %s3401 = scalar_select %p3400, %s23, 1
      %p3402 = scmp.lt.s32.totalorder %s24, 1
      %s3403 = scalar_select %p3402, %s24, 1
      %s3404 = smul.addr %s3401, 2
      %s3405 = sadd.s32 %s3403, %s3404
      %s3406 = smul.addr %s3405, 8
      %s3407 = scalar_lea.vmem %s7, %s3406
      // Predicated region
      $region45: #{double_conv_forward.4} parent=43 // pred_check
        %p3408 = pneg %p195
      $region46: #{double_conv_forward.4} parent=43 // pred_check_branch
        %3410 = sbr.rel (%p3408) target = $region48
      $region47: #{double_conv_forward.4} parent=43 // pred_region
        %s3411 = smul.u32 18, %s24
      $region48: #{double_conv_forward.4} parent=43 // pred_fallthru
        _
      // Predicated region
      $region49: #{double_conv_forward.4} parent=43 // pred_check
        %p3412 = pneg %p223
      $region50: #{double_conv_forward.4} parent=43 // pred_check_branch
        %3414 = sbr.rel (%p3412) target = $region52
      $region51: #{double_conv_forward.4} parent=43 // pred_region
        _
      $region52: #{double_conv_forward.4} parent=43 // pred_fallthru
        _
    $region44: #{double_conv_forward.4} parent=5 // pred_fallthru
      _
    %p3415 = scmp.le.s32.totalorder 2, %s14
    // Predicated region
    $region53: #{double_conv_forward.4} parent=5 // pred_check
      %p3416 = pneg %p3415
    $region54: #{double_conv_forward.4} parent=5 // pred_check_branch
      %3418 = sbr.rel (%p3416) target = $region56
    $region55: #{double_conv_forward.4} parent=5 // pred_region
      %s3419 = ssub.s32 %s14, 2
      // Predicated region
      $region57: #{double_conv_forward.4} parent=55 // pred_check
        %p3420 = pneg %p201
      $region58: #{double_conv_forward.4} parent=55 // pred_check_branch
        %3422 = sbr.rel (%p3420) target = $region60
      $region59: #{double_conv_forward.4} parent=55 // pred_region
        %s3423 = smul.u32 18, %s26
        %p3424 = scmp.lt.s32.totalorder %s25, 1
        %s3425 = scalar_select %p3424, %s25, 1
        %p3426 = scmp.lt.s32.totalorder %s3423, 35
        %s3427 = scalar_select %p3426, %s3423, 35
        %s3428 = smul.addr %s3425, 36
        %s3429 = sadd.s32 %s3427, %s3428
        %s3430 = smul.addr %s3429, 4
        %s3431 = scalar_lea.vmem %s6, %s3430
      $region60: #{double_conv_forward.4} parent=55 // pred_fallthru
        _
      // Predicated region
      $region61: #{double_conv_forward.4} parent=55 // pred_check
        %p3432 = pneg %p229
      $region62: #{double_conv_forward.4} parent=55 // pred_check_branch
        %3434 = sbr.rel (%p3432) target = $region64
      $region63: #{double_conv_forward.4} parent=55 // pred_region
        %p3435 = scmp.lt.s32.totalorder %s25, 1
        %s3436 = scalar_select %p3435, %s25, 1
        %p3437 = scmp.lt.s32.totalorder %s26, 1
        %s3438 = scalar_select %p3437, %s26, 1
        %s3439 = smul.addr %s3436, 2
        %s3440 = sadd.s32 %s3438, %s3439
        %s3441 = smul.addr %s3440, 8
        %s3442 = scalar_lea.vmem %s7, %s3441
      $region64: #{double_conv_forward.4} parent=55 // pred_fallthru
        _
    $region56: #{double_conv_forward.4} parent=5 // pred_fallthru
      _
  $region6: #{double_conv_forward.4} parent=0 // loop_footer
    %s18 = sadd.s32 1, %s14
  $region7: #{double_conv_forward.4} parent=0 // loop_footer_branch
    %13 = sbr.rel target = $region3
  $region8: #{double_conv_forward.4} parent=0 // loop_exit
    _

</llo_original>
